<compile_context>
chip_gen: v7x
topology: tpu7x:2x2x1
jax: 0.10.0
libtpu: 0.0.40
codegen_flags: <defaults>
</compile_context>

<pallas_src>
import functools
import math

import jax
import jax.numpy as jnp
from jax import lax
from jax.experimental import pallas as pl
from jax.experimental.pallas import tpu as pltpu


# ----------------------------------------------------------------------------
# Kernel 1: Conv1d(9->1,k50,s5,p1) + BN + ReLU + MaxPool1d(10,3), lane-tiled
# ----------------------------------------------------------------------------
def _conv1_pool1_kernel(y_ref, yh_ref, w_ref, b_ref, o_ref, *, tp):
    """One lane-tile of the fused first layer.

    y_ref  : (1, 135, tp)   bf16 phase-15 input, Y[c*15+p, m] = x_pad[c, 15m+p]
    yh_ref : (1, 135, 128)  bf16 halo (next 128 phase columns of the same array)
    w_ref  : (12, 135)      bf16 folded conv+BN weight
    b_ref  : (1, 1)         f32  folded bias
    o_ref  : (1, 1, tp)     f32  pooled output, global columns [j*tp, (j+1)*tp)
    """
    pm = jnp.dot(w_ref[...], y_ref[0], preferred_element_type=jnp.float32)
    ph = jnp.dot(w_ref[...], yh_ref[0], preferred_element_type=jnp.float32)
    p = jnp.concatenate([pm, ph], axis=1)                 # (12, tp + 128), f32

    wr = tp + 3
    bias = b_ref[...]
    rows = []
    for r in range(3):                                    # conv[3m+r] = sum_s p[4r+s, m+s]
        acc = p[4 * r:4 * r + 1, 0:wr]
        for s in range(1, 4):
            acc = acc + p[4 * r + s:4 * r + s + 1, s:s + wr]
        rows.append(jnp.maximum(acc + bias, 0.0))         # BN + ReLU, (1, wr)

    # MaxPool1d(10,3): taps t = 3u + r -> rows[r][i+u].  u<=2 covers every r,
    # u==3 only r==0, so reduce over r first, then 4 shifted maxes (not 10).
    colmax = jnp.maximum(jnp.maximum(rows[0], rows[1]), rows[2])
    out = jnp.maximum(jnp.maximum(colmax[:, 0:tp], colmax[:, 1:1 + tp]),
                      jnp.maximum(colmax[:, 2:2 + tp], rows[0][:, 3:3 + tp]))
    o_ref[0] = out


# ----------------------------------------------------------------------------
# Kernel 2: layers 2-4 fully fused (per batch element)
# ----------------------------------------------------------------------------
def _layers234_kernel(h_ref, w2_ref, b2_ref, w3_ref, b3_ref, g3_ref,
                      w4_ref, b4_ref, wl_ref, bl_ref, o_ref,
                      *, lp2, l3, lp3, l4):
    """Conv2+BN+ReLU+Pool(100,10) -> Conv3+BN+ReLU+Pool(10,3) -> Conv4
       -> Linear(13,1) -> Sigmoid.

    h_ref : (1, 95, v2) phase-50 layout of the layer-1 output:
            h[5d+t, v] = h1_pad[50v + 5d + t], so W2B @ h gives
            r2[d*8+co, v] = conv2[co, 10v+d]  (no strided access anywhere).
    """
    h = h_ref[0]                                          # (95, v2)

    # conv2 (1->8, k50, s5, p1) + BN + ReLU, stacked over the 10 pool phases d.
    r2 = jnp.dot(w2_ref[...], h, preferred_element_type=jnp.float32)
    r2 = jnp.maximum(r2 + b2_ref[...], 0.0)               # (80, v2)

    # MaxPool1d(100,10) = max over the 10 phases d, then over 10 shifts e.
    m2 = r2[0:8, :]
    for d in range(1, 10):
        m2 = jnp.maximum(m2, r2[8 * d:8 * (d + 1), :])    # (8, v2)
    h2 = m2[:, 0:lp2]
    for e in range(1, 10):
        h2 = jnp.maximum(h2, m2[:, e:e + lp2])            # (8, lp2)

    # conv3 (8->4, k50, s1) + BN + ReLU: VMEM window gather + one matmul.
    a3 = jnp.concatenate([h2[:, t:t + l3] for t in range(50)], axis=0)  # (400, l3)
    r3 = jnp.maximum(
        jnp.dot(w3_ref[...], a3, preferred_element_type=jnp.float32) + b3_ref[...],
        0.0)                                              # (4, l3)

    # MaxPool1d(10,3): stride-1 sliding max, then stride-3 pick via 0/1 matmul.
    ns = l3 - 9
    s3 = r3[:, 0:ns]
    for t in range(1, 10):
        s3 = jnp.maximum(s3, r3[:, t:t + ns])             # (4, ns)
    p3 = jnp.dot(s3, g3_ref[...], preferred_element_type=jnp.float32)   # (4, lp3)

    # conv4 (4->2, k10) -> Linear(13,1) -> Sigmoid.
    a4 = jnp.concatenate([p3[:, k:k + l4] for k in range(10)], axis=0)  # (40, l4)
    c4 = jnp.dot(w4_ref[...], a4, preferred_element_type=jnp.float32) + b4_ref[...]
    z = jnp.sum(c4 * wl_ref[...], axis=1, keepdims=True) + bl_ref[...]  # (2, 1)
    o_ref[0] = jax.nn.sigmoid(z)


# ----------------------------------------------------------------------------
# pallas_call helper for the fused tail: grid over batch, full block per array
# ----------------------------------------------------------------------------
def _idx_batched(ndim):
    zeros = (0,) * (ndim - 1)
    return lambda b: (b,) + zeros


def _idx_shared(ndim):
    zeros = (0,) * ndim
    return lambda b: zeros


def _per_batch_pallas(kernel, out_shape, inputs, batched):
    in_specs = []
    for a, is_b in zip(inputs, batched):
        if is_b:
            in_specs.append(pl.BlockSpec((1,) + a.shape[1:], _idx_batched(a.ndim)))
        else:
            in_specs.append(pl.BlockSpec(a.shape, _idx_shared(a.ndim)))
    n_batch = out_shape.shape[0]
    return pl.pallas_call(
        kernel,
        out_shape=out_shape,
        grid_spec=pltpu.PrefetchScalarGridSpec(
            num_scalar_prefetch=0,
            grid=(n_batch,),
            in_specs=in_specs,
            out_specs=pl.BlockSpec((1,) + out_shape.shape[1:],
                                   _idx_batched(len(out_shape.shape))),
        ),
        compiler_params=pltpu.CompilerParams(dimension_semantics=("parallel",)),
    )(*inputs)


# ----------------------------------------------------------------------------
# Constant folding of weights (eval-mode BN folded into the convs)
# ----------------------------------------------------------------------------
def _fold_conv1(p):
    """Phase-15 conv1 weight (BN folded), bf16 (12, 135); bias (1, 1) f32."""
    w = p["w1"][0] * p["s1"][0]                           # (9, 50)
    cin = w.shape[0]
    rows = []
    for r in range(3):
        for s in range(4):
            taps = []
            for q in range(15):
                t = 15 * s + q - 5 * r
                taps.append(w[:, t] if 0 <= t < 50
                            else jnp.zeros((cin,), jnp.float32))
            rows.append(jnp.stack(taps, axis=1).reshape(-1))       # (cin*15,)
    w1f = jnp.stack(rows, axis=0).astype(jnp.bfloat16)    # (12, 135)
    b1f = (p["b1"] * p["s1"] + p["t1"]).reshape(1, 1)
    return w1f, b1f


def _fold_tail(p, l3, lp3, l4):
    """Weights for the fused layers-2..4 kernel."""
    # layer 2, stacked over the 10 pool phases d: W2B[d*8+co, 5d+t] = s2*w2[co,t]
    w2f = p["w2"].reshape(8, 50) * p["s2"][:, None]
    b2f = p["b2"] * p["s2"] + p["t2"]
    n_ph = 5 * 9 + 50                                     # 95 phases
    w2b = jnp.zeros((80, n_ph), jnp.float32)
    for d in range(10):
        w2b = w2b.at[8 * d:8 * (d + 1), 5 * d:5 * d + 50].set(w2f)
    b2b = jnp.tile(b2f, 10).reshape(80, 1)
    # layer 3, window rows ordered (t, c): W3B[co, t*8+c] = s3*w3[co,c,t]
    w3f = p["w3"] * p["s3"][:, None, None]
    w3b = jnp.transpose(w3f, (0, 2, 1)).reshape(4, 400)
    b3b = (p["b3"] * p["s3"] + p["t3"]).reshape(4, 1)
    # MaxPool(10,3) stride-3 selection as a 0/1 matrix (used on the MXU)
    g3 = jnp.zeros((l3 - 9, lp3), jnp.float32)
    g3 = g3.at[3 * jnp.arange(lp3), jnp.arange(lp3)].set(1.0)
    # layer 4, window rows ordered (k, c): W4B[o, k*4+c] = w4[o,c,k]
    w4b = jnp.transpose(p["w4"], (0, 2, 1)).reshape(2, 40)
    b4b = p["b4"].reshape(2, 1)
    wl = p["wl"].reshape(1, l4)
    bl = p["bl"].reshape(1, 1)
    return [w2b, b2b, w3b, b3b, g3, w4b, b4b, wl, bl]


# ----------------------------------------------------------------------------
# Forward pass (matches the PyTorch Sequential, eval semantics)
# ----------------------------------------------------------------------------
def net_forward(x, p):
    n, cin, l_in = x.shape

    # ---- static geometry ----
    l_conv1 = (l_in + 2 - 50) // 5 + 1                    # 19786
    l_pool1 = (l_conv1 - 10) // 3 + 1                     # 6593
    l2 = (l_pool1 + 2 - 50) // 5 + 1                      # 1310
    v2 = (l2 - 1) // 10 + 1                               # 131
    lp2 = (l2 - 100) // 10 + 1                            # 122
    l3 = lp2 - 50 + 1                                     # 73
    lp3 = (l3 - 10) // 3 + 1                              # 22
    l4 = lp3 - 10 + 1                                     # 13
    assert l4 == 13, "input length incompatible with Linear(in_features=13)"

    TP = 13 * 128                                         # 1664-wide pool tiles
    num_t = pl.cdiv(l_pool1, TP)                          # 4
    bm = num_t * TP + 128                                 # phase cols + halo room

    # ---- layer 1: single bf16 phase-15 relayout pass + fused Pallas kernel ----
    xp = jnp.pad(x, ((0, 0), (0, 0), (1, 15 * bm - l_in - 1)))
    y15 = (xp.reshape(n, cin, bm, 15).transpose(0, 1, 3, 2)
             .reshape(n, cin * 15, bm).astype(jnp.bfloat16))
    w1f, b1f = _fold_conv1(p)

    pooled1 = pl.pallas_call(
        functools.partial(_conv1_pool1_kernel, tp=TP),
        out_shape=jax.ShapeDtypeStruct((n, 1, num_t * TP), jnp.float32),
        grid_spec=pltpu.PrefetchScalarGridSpec(
            num_scalar_prefetch=0,
            grid=(n, num_t),
            in_specs=[
                pl.BlockSpec((1, cin * 15, TP), lambda b, j: (b, 0, j)),
                pl.BlockSpec((1, cin * 15, 128),
                             lambda b, j: (b, 0, (j + 1) * (TP // 128))),
                pl.BlockSpec((12, cin * 15), lambda b, j: (0, 0)),
                pl.BlockSpec((1, 1), lambda b, j: (0, 0)),
            ],
            out_specs=pl.BlockSpec((1, 1, TP), lambda b, j: (b, 0, j)),
        ),
        compiler_params=pltpu.CompilerParams(
            dimension_semantics=("parallel", "parallel")),
    )(y15, y15, w1f, b1f)
    # Dropout(0.5): eval-mode identity

    # ---- tiny phase-50 relayout of the ~26 KB layer-1 output (one XLA pass);
    #      drops the padded garbage columns >= l_pool1 at the same time ----
    n_ph2 = 5 * 9 + 50                                    # 95
    h1 = pooled1[:, 0, :l_pool1]                          # (n, 6593)
    h1p = jnp.pad(h1, ((0, 0), (1, 50 * (v2 + 1) - l_pool1 - 1)))   # (n, 6600)
    blk = h1p.reshape(n, v2 + 1, 50)                      # blk[n,v,q] = h1_pad[50v+q]
    h50 = jnp.concatenate([blk[:, :v2, :], blk[:, 1:, :n_ph2 - 50]], axis=2)
    h50 = jnp.transpose(h50, (0, 2, 1))                   # (n, 95, v2)

    # ---- layers 2-4, one fused Pallas kernel per batch element ----
    consts = _fold_tail(p, l3, lp3, l4)
    out = _per_batch_pallas(
        functools.partial(_layers234_kernel, lp2=lp2, l3=l3, lp3=lp3, l4=l4),
        jax.ShapeDtypeStruct((n, 2, 1), jnp.float32),
        [h50] + consts, [True] + [False] * len(consts))
    return out


# ----------------------------------------------------------------------------
# Pure-XLA reference of the same module (runtime correctness check)
# ----------------------------------------------------------------------------
def net_reference(x, p):
    def conv(h, w, b, stride, pad):
        out = lax.conv_general_dilated(
            h, w, window_strides=(stride,), padding=[(pad, pad)],
            dimension_numbers=("NCH", "OIH", "NCH"),
            precision=lax.Precision.HIGHEST)
        return out + b.reshape(1, -1, 1)

    def bn(h, s, t):
        return h * s.reshape(1, -1, 1) + t.reshape(1, -1, 1)

    def pool(h, k, s):
        return lax.reduce_window(h, -jnp.inf, lax.max, (1, 1, k), (1, 1, s), "VALID")

    h = jax.nn.relu(bn(conv(x, p["w1"], p["b1"], 5, 1), p["s1"], p["t1"]))
    h = pool(h, 10, 3)
    h = jax.nn.relu(bn(conv(h, p["w2"], p["b2"], 5, 1), p["s2"], p["t2"]))
    h = pool(h, 100, 10)
    h = jax.nn.relu(bn(conv(h, p["w3"], p["b3"], 1, 0), p["s3"], p["t3"]))
    h = pool(h, 10, 3)
    h = conv(h, p["w4"], p["b4"], 1, 0)
    z = jnp.matmul(h, p["wl"].T, precision=lax.Precision.HIGHEST) + p["bl"]
    return jax.nn.sigmoid(z)


# ----------------------------------------------------------------------------
# Parameters (deterministic init; BN uses eval-mode running stats)
# ----------------------------------------------------------------------------
def _uniform(key, shape, bound):
    return jax.random.uniform(key, shape, jnp.float32, -bound, bound)


def _bn_affine(key, c, eps=1e-5):
    k1, k2 = jax.random.split(key)
    gamma = 1.0 + 0.1 * jax.random.normal(k1, (c,), jnp.float32)
    beta = 0.1 * jax.random.normal(k2, (c,), jnp.float32)
    running_mean = jnp.zeros((c,), jnp.float32)
    running_var = jnp.ones((c,), jnp.float32)
    scale = gamma / jnp.sqrt(running_var + eps)
    shift = beta - running_mean * scale
    return scale, shift


def init_params(key):
    ks = jax.random.split(key, 16)
    p = {}
    bd = 1.0 / math.sqrt(9 * 50)
    p["w1"], p["b1"] = _uniform(ks[0], (1, 9, 50), bd), _uniform(ks[1], (1,), bd)
    p["s1"], p["t1"] = _bn_affine(ks[2], 1)
    bd = 1.0 / math.sqrt(1 * 50)
    p["w2"], p["b2"] = _uniform(ks[3], (8, 1, 50), bd), _uniform(ks[4], (8,), bd)
    p["s2"], p["t2"] = _bn_affine(ks[5], 8)
    bd = 1.0 / math.sqrt(8 * 50)
    p["w3"], p["b3"] = _uniform(ks[6], (4, 8, 50), bd), _uniform(ks[7], (4,), bd)
    p["s3"], p["t3"] = _bn_affine(ks[8], 4)
    bd = 1.0 / math.sqrt(4 * 10)
    p["w4"], p["b4"] = _uniform(ks[9], (2, 4, 10), bd), _uniform(ks[10], (2,), bd)
    bd = 1.0 / math.sqrt(13)
    p["wl"], p["bl"] = _uniform(ks[11], (1, 13), bd), _uniform(ks[12], (1,), bd)
    return p


if __name__ == "__main__":
    key = jax.random.PRNGKey(0)
    pkey, xkey = jax.random.split(key)
    params = init_params(pkey)

    # Smallest input length for which the geometry reaches Linear(in_features=13):
    #   98973 -> 19786 -> 6593 -> 1310 -> 122 -> 73 -> 22 -> 13
    N, C_IN, L_IN = 2, 9, 98973
    x = jax.random.normal(xkey, (N, C_IN, L_IN), jnp.float32)

    fwd = jax.jit(lambda xin: net_forward(xin, params))
    y = jax.block_until_ready(fwd(x))

    assert y.shape == (N, 2, 1), y.shape
    assert y.dtype == jnp.float32

    # correctness check against a pure-XLA reference of the same module
    y_ref = jax.block_until_ready(jax.jit(lambda xin: net_reference(xin, params))(x))
    err = float(jnp.max(jnp.abs(y - y_ref)))
    assert err < 5e-3, f"mismatch vs reference: max abs err = {err}"
    assert bool(jnp.all((y >= 0.0) & (y <= 1.0)))
    print("KERNEL_OK")
</pallas_src>

<mosaic_0001>
module attributes {stable_mosaic.version = 11 : i64} {
  func.func @_conv1_pool1_kernel(%arg0: i32, %arg1: i32, %arg2: memref<1x135x1664xbf16, #tpu.memory_space<vmem>>, %arg3: memref<1x135x128xbf16, #tpu.memory_space<vmem>>, %arg4: memref<12x135xbf16, #tpu.memory_space<vmem>>, %arg5: memref<1x1xf32, #tpu.memory_space<vmem>>, %arg6: memref<1x1x1664xf32, #tpu.memory_space<vmem>>) attributes {dimension_semantics = [#tpu.dimension_semantics<parallel>, #tpu.dimension_semantics<parallel>], iteration_bounds = array<i64: 2, 4>, scalar_prefetch = 0 : i64, scratch_operands = 0 : i64, tpu.core_type = #tpu.core_type<tc>, window_params = [{transform_indices = @transform_0, window_bounds = array<i64: 1, 135, 1664>}, {transform_indices = @transform_1, window_bounds = array<i64: 1, 135, 128>}, {pipeline_mode = #tpu.pipeline_mode<synchronous>, transform_indices = @transform_2, window_bounds = array<i64: 12, 135>}, {pipeline_mode = #tpu.pipeline_mode<synchronous>, transform_indices = @transform_3, window_bounds = array<i64: 1, 1>}, {transform_indices = @transform_4, window_bounds = array<i64: 1, 1, 1664>}]} {
    %c0 = arith.constant 0 : index
    %c0_0 = arith.constant 0 : index
    %0 = vector.load %arg4[%c0, %c0_0] : memref<12x135xbf16, #tpu.memory_space<vmem>>, vector<12x135xbf16>
    %c0_1 = arith.constant 0 : index
    %c0_2 = arith.constant 0 : index
    %c0_3 = arith.constant 0 : index
    %1 = vector.load %arg2[%c0_1, %c0_2, %c0_3] : memref<1x135x1664xbf16, #tpu.memory_space<vmem>>, vector<1x135x1664xbf16>
    %2 = vector.shape_cast %1 : vector<1x135x1664xbf16> to vector<135x1664xbf16>
    %cst = arith.constant dense<0.000000e+00> : vector<12x1664xf32>
    %3 = tpu.matmul %0, %2, %cst {dimension_numbers = #tpu.dot_dimension_numbers<[1], [0], [0], [1], [0, 0, 1, 1], [], []>} : vector<12x135xbf16>, vector<135x1664xbf16>, vector<12x1664xf32> -> vector<12x1664xf32>
    %c0_4 = arith.constant 0 : index
    %c0_5 = arith.constant 0 : index
    %4 = vector.load %arg4[%c0_4, %c0_5] : memref<12x135xbf16, #tpu.memory_space<vmem>>, vector<12x135xbf16>
    %c0_6 = arith.constant 0 : index
    %c0_7 = arith.constant 0 : index
    %c0_8 = arith.constant 0 : index
    %5 = vector.load %arg3[%c0_6, %c0_7, %c0_8] : memref<1x135x128xbf16, #tpu.memory_space<vmem>>, vector<1x135x128xbf16>
    %6 = vector.shape_cast %5 : vector<1x135x128xbf16> to vector<135x128xbf16>
    %cst_9 = arith.constant dense<0.000000e+00> : vector<12x128xf32>
    %7 = tpu.matmul %4, %6, %cst_9 {dimension_numbers = #tpu.dot_dimension_numbers<[1], [0], [0], [1], [0, 0, 1, 1], [], []>} : vector<12x135xbf16>, vector<135x128xbf16>, vector<12x128xf32> -> vector<12x128xf32>
    %8 = tpu.concatenate %3, %7 in 1 : vector<12x1664xf32>, vector<12x128xf32> -> vector<12x1792xf32>
    %c0_10 = arith.constant 0 : index
    %c0_11 = arith.constant 0 : index
    %9 = vector.load %arg5[%c0_10, %c0_11] : memref<1x1xf32, #tpu.memory_space<vmem>>, vector<1x1xf32>
    %10 = vector.extract_strided_slice %8 {offsets = [0, 0], sizes = [1, 1667], strides = [1, 1]} : vector<12x1792xf32> to vector<1x1667xf32>
    %11 = vector.extract_strided_slice %8 {offsets = [1, 1], sizes = [1, 1667], strides = [1, 1]} : vector<12x1792xf32> to vector<1x1667xf32>
    %12 = arith.addf %10, %11 : vector<1x1667xf32>
    %13 = vector.extract_strided_slice %8 {offsets = [2, 2], sizes = [1, 1667], strides = [1, 1]} : vector<12x1792xf32> to vector<1x1667xf32>
    %14 = arith.addf %12, %13 : vector<1x1667xf32>
    %15 = vector.extract_strided_slice %8 {offsets = [3, 3], sizes = [1, 1667], strides = [1, 1]} : vector<12x1792xf32> to vector<1x1667xf32>
    %16 = arith.addf %14, %15 : vector<1x1667xf32>
    %17 = vector.broadcast %9 : vector<1x1xf32> to vector<1x1667xf32>
    %18 = arith.addf %16, %17 : vector<1x1667xf32>
    %cst_12 = arith.constant 0.000000e+00 : f32
    %19 = vector.broadcast %cst_12 : f32 to vector<1x1667xf32>
    %20 = arith.maximumf %18, %19 : vector<1x1667xf32>
    %21 = vector.extract_strided_slice %8 {offsets = [4, 0], sizes = [1, 1667], strides = [1, 1]} : vector<12x1792xf32> to vector<1x1667xf32>
    %22 = vector.extract_strided_slice %8 {offsets = [5, 1], sizes = [1, 1667], strides = [1, 1]} : vector<12x1792xf32> to vector<1x1667xf32>
    %23 = arith.addf %21, %22 : vector<1x1667xf32>
    %24 = vector.extract_strided_slice %8 {offsets = [6, 2], sizes = [1, 1667], strides = [1, 1]} : vector<12x1792xf32> to vector<1x1667xf32>
    %25 = arith.addf %23, %24 : vector<1x1667xf32>
    %26 = vector.extract_strided_slice %8 {offsets = [7, 3], sizes = [1, 1667], strides = [1, 1]} : vector<12x1792xf32> to vector<1x1667xf32>
    %27 = arith.addf %25, %26 : vector<1x1667xf32>
    %28 = vector.broadcast %9 : vector<1x1xf32> to vector<1x1667xf32>
    %29 = arith.addf %27, %28 : vector<1x1667xf32>
    %cst_13 = arith.constant 0.000000e+00 : f32
    %30 = vector.broadcast %cst_13 : f32 to vector<1x1667xf32>
    %31 = arith.maximumf %29, %30 : vector<1x1667xf32>
    %32 = vector.extract_strided_slice %8 {offsets = [8, 0], sizes = [1, 1667], strides = [1, 1]} : vector<12x1792xf32> to vector<1x1667xf32>
    %33 = vector.extract_strided_slice %8 {offsets = [9, 1], sizes = [1, 1667], strides = [1, 1]} : vector<12x1792xf32> to vector<1x1667xf32>
    %34 = arith.addf %32, %33 : vector<1x1667xf32>
    %35 = vector.extract_strided_slice %8 {offsets = [10, 2], sizes = [1, 1667], strides = [1, 1]} : vector<12x1792xf32> to vector<1x1667xf32>
    %36 = arith.addf %34, %35 : vector<1x1667xf32>
    %37 = vector.extract_strided_slice %8 {offsets = [11, 3], sizes = [1, 1667], strides = [1, 1]} : vector<12x1792xf32> to vector<1x1667xf32>
    %38 = arith.addf %36, %37 : vector<1x1667xf32>
    %39 = vector.broadcast %9 : vector<1x1xf32> to vector<1x1667xf32>
    %40 = arith.addf %38, %39 : vector<1x1667xf32>
    %cst_14 = arith.constant 0.000000e+00 : f32
    %41 = vector.broadcast %cst_14 : f32 to vector<1x1667xf32>
    %42 = arith.maximumf %40, %41 : vector<1x1667xf32>
    %43 = arith.maximumf %20, %31 : vector<1x1667xf32>
    %44 = arith.maximumf %43, %42 : vector<1x1667xf32>
    %45 = vector.extract_strided_slice %44 {offsets = [0, 0], sizes = [1, 1664], strides = [1, 1]} : vector<1x1667xf32> to vector<1x1664xf32>
    %46 = vector.extract_strided_slice %44 {offsets = [0, 1], sizes = [1, 1664], strides = [1, 1]} : vector<1x1667xf32> to vector<1x1664xf32>
    %47 = arith.maximumf %45, %46 : vector<1x1664xf32>
    %48 = vector.extract_strided_slice %44 {offsets = [0, 2], sizes = [1, 1664], strides = [1, 1]} : vector<1x1667xf32> to vector<1x1664xf32>
    %49 = vector.extract_strided_slice %20 {offsets = [0, 3], sizes = [1, 1664], strides = [1, 1]} : vector<1x1667xf32> to vector<1x1664xf32>
    %50 = arith.maximumf %48, %49 : vector<1x1664xf32>
    %51 = arith.maximumf %47, %50 : vector<1x1664xf32>
    %c0_15 = arith.constant 0 : index
    %c0_16 = arith.constant 0 : index
    %c0_17 = arith.constant 0 : index
    %52 = vector.load %arg6[%c0_15, %c0_16, %c0_17] : memref<1x1x1664xf32, #tpu.memory_space<vmem>>, vector<1x1x1664xf32>
    %53 = vector.shape_cast %52 : vector<1x1x1664xf32> to vector<1x1664xf32>
    %54 = vector.shape_cast %51 : vector<1x1664xf32> to vector<1x1x1664xf32>
    tpu.vector_store %arg6[%c0_15, %c0_16, %c0_17], %54 {strides = array<i32>} : memref<1x1x1664xf32, #tpu.memory_space<vmem>>, vector<1x1x1664xf32>,
    return
  }
  func.func @transform_0(%arg0: i32, %arg1: i32) -> (i32, i32, i32) {
    %c0_i32 = arith.constant 0 : i32
    %c0_i32_0 = arith.constant 0 : i32
    return %arg0, %c0_i32, %arg1 : i32, i32, i32
  }
  func.func @transform_1(%arg0: i32, %arg1: i32) -> (i32, i32, i32) {
    %c1_i32 = arith.constant 1 : i32
    %0 = arith.addi %arg1, %c1_i32 : i32
    %c13_i32 = arith.constant 13 : i32
    %1 = arith.muli %0, %c13_i32 : i32
    %c0_i32 = arith.constant 0 : i32
    %c0_i32_0 = arith.constant 0 : i32
    return %arg0, %c0_i32, %1 : i32, i32, i32
  }
  func.func @transform_2(%arg0: i32, %arg1: i32) -> (i32, i32) {
    %c0_i32 = arith.constant 0 : i32
    %c0_i32_0 = arith.constant 0 : i32
    %c0_i32_1 = arith.constant 0 : i32
    return %c0_i32, %c0_i32_0 : i32, i32
  }
  func.func @transform_3(%arg0: i32, %arg1: i32) -> (i32, i32) {
    %c0_i32 = arith.constant 0 : i32
    %c0_i32_0 = arith.constant 0 : i32
    %c0_i32_1 = arith.constant 0 : i32
    return %c0_i32, %c0_i32_0 : i32, i32
  }
  func.func @transform_4(%arg0: i32, %arg1: i32) -> (i32, i32, i32) {
    %c0_i32 = arith.constant 0 : i32
    %c0_i32_0 = arith.constant 0 : i32
    return %arg0, %c0_i32, %arg1 : i32, i32, i32
  }
}

module attributes {stable_mosaic.version = 11 : i64} {
  func.func @_layers234_kernel(%arg0: i32, %arg1: memref<1x95x131xf32, #tpu.memory_space<vmem>>, %arg2: memref<80x95xf32, #tpu.memory_space<vmem>>, %arg3: memref<80x1xf32, #tpu.memory_space<vmem>>, %arg4: memref<4x400xf32, #tpu.memory_space<vmem>>, %arg5: memref<4x1xf32, #tpu.memory_space<vmem>>, %arg6: memref<64x22xf32, #tpu.memory_space<vmem>>, %arg7: memref<2x40xf32, #tpu.memory_space<vmem>>, %arg8: memref<2x1xf32, #tpu.memory_space<vmem>>, %arg9: memref<1x13xf32, #tpu.memory_space<vmem>>, %arg10: memref<1x1xf32, #tpu.memory_space<vmem>>, %arg11: memref<1x2x1xf32, #tpu.memory_space<vmem>>) attributes {dimension_semantics = [#tpu.dimension_semantics<parallel>], iteration_bounds = array<i64: 2>, scalar_prefetch = 0 : i64, scratch_operands = 0 : i64, tpu.core_type = #tpu.core_type<tc>, window_params = [{transform_indices = @transform_0, window_bounds = array<i64: 1, 95, 131>}, {pipeline_mode = #tpu.pipeline_mode<synchronous>, transform_indices = @transform_1, window_bounds = array<i64: 80, 95>}, {pipeline_mode = #tpu.pipeline_mode<synchronous>, transform_indices = @transform_2, window_bounds = array<i64: 80, 1>}, {pipeline_mode = #tpu.pipeline_mode<synchronous>, transform_indices = @transform_3, window_bounds = array<i64: 4, 400>}, {pipeline_mode = #tpu.pipeline_mode<synchronous>, transform_indices = @transform_4, window_bounds = array<i64: 4, 1>}, {pipeline_mode = #tpu.pipeline_mode<synchronous>, transform_indices = @transform_5, window_bounds = array<i64: 64, 22>}, {pipeline_mode = #tpu.pipeline_mode<synchronous>, transform_indices = @transform_6, window_bounds = array<i64: 2, 40>}, {pipeline_mode = #tpu.pipeline_mode<synchronous>, transform_indices = @transform_7, window_bounds = array<i64: 2, 1>}, {pipeline_mode = #tpu.pipeline_mode<synchronous>, transform_indices = @transform_8, window_bounds = array<i64: 1, 13>}, {pipeline_mode = #tpu.pipeline_mode<synchronous>, transform_indices = @transform_9, window_bounds = array<i64: 1, 1>}, {transform_indices = @transform_10, window_bounds = array<i64: 1, 2, 1>}]} {
    %c0 = arith.constant 0 : index
    %c0_0 = arith.constant 0 : index
    %c0_1 = arith.constant 0 : index
    %0 = vector.load %arg1[%c0, %c0_0, %c0_1] : memref<1x95x131xf32, #tpu.memory_space<vmem>>, vector<1x95x131xf32>
    %1 = vector.shape_cast %0 : vector<1x95x131xf32> to vector<95x131xf32>
    %c0_2 = arith.constant 0 : index
    %c0_3 = arith.constant 0 : index
    %2 = vector.load %arg2[%c0_2, %c0_3] : memref<80x95xf32, #tpu.memory_space<vmem>>, vector<80x95xf32>
    %cst = arith.constant dense<0.000000e+00> : vector<80x131xf32>
    %3 = tpu.matmul %2, %1, %cst {dimension_numbers = #tpu.dot_dimension_numbers<[1], [0], [0], [1], [0, 0, 1, 1], [], []>} : vector<80x95xf32>, vector<95x131xf32>, vector<80x131xf32> -> vector<80x131xf32>
    %c0_4 = arith.constant 0 : index
    %c0_5 = arith.constant 0 : index
    %4 = vector.load %arg3[%c0_4, %c0_5] : memref<80x1xf32, #tpu.memory_space<vmem>>, vector<80x1xf32>
    %5 = vector.broadcast %4 : vector<80x1xf32> to vector<80x131xf32>
    %6 = arith.addf %3, %5 : vector<80x131xf32>
    %cst_6 = arith.constant 0.000000e+00 : f32
    %7 = vector.broadcast %cst_6 : f32 to vector<80x131xf32>
    %8 = arith.maximumf %6, %7 : vector<80x131xf32>
    %9 = vector.extract_strided_slice %8 {offsets = [0, 0], sizes = [8, 131], strides = [1, 1]} : vector<80x131xf32> to vector<8x131xf32>
    %10 = vector.extract_strided_slice %8 {offsets = [8, 0], sizes = [8, 131], strides = [1, 1]} : vector<80x131xf32> to vector<8x131xf32>
    %11 = arith.maximumf %9, %10 : vector<8x131xf32>
    %12 = vector.extract_strided_slice %8 {offsets = [16, 0], sizes = [8, 131], strides = [1, 1]} : vector<80x131xf32> to vector<8x131xf32>
    %13 = arith.maximumf %11, %12 : vector<8x131xf32>
    %14 = vector.extract_strided_slice %8 {offsets = [24, 0], sizes = [8, 131], strides = [1, 1]} : vector<80x131xf32> to vector<8x131xf32>
    %15 = arith.maximumf %13, %14 : vector<8x131xf32>
    %16 = vector.extract_strided_slice %8 {offsets = [32, 0], sizes = [8, 131], strides = [1, 1]} : vector<80x131xf32> to vector<8x131xf32>
    %17 = arith.maximumf %15, %16 : vector<8x131xf32>
    %18 = vector.extract_strided_slice %8 {offsets = [40, 0], sizes = [8, 131], strides = [1, 1]} : vector<80x131xf32> to vector<8x131xf32>
    %19 = arith.maximumf %17, %18 : vector<8x131xf32>
    %20 = vector.extract_strided_slice %8 {offsets = [48, 0], sizes = [8, 131], strides = [1, 1]} : vector<80x131xf32> to vector<8x131xf32>
    %21 = arith.maximumf %19, %20 : vector<8x131xf32>
    %22 = vector.extract_strided_slice %8 {offsets = [56, 0], sizes = [8, 131], strides = [1, 1]} : vector<80x131xf32> to vector<8x131xf32>
    %23 = arith.maximumf %21, %22 : vector<8x131xf32>
    %24 = vector.extract_strided_slice %8 {offsets = [64, 0], sizes = [8, 131], strides = [1, 1]} : vector<80x131xf32> to vector<8x131xf32>
    %25 = arith.maximumf %23, %24 : vector<8x131xf32>
    %26 = vector.extract_strided_slice %8 {offsets = [72, 0], sizes = [8, 131], strides = [1, 1]} : vector<80x131xf32> to vector<8x131xf32>
    %27 = arith.maximumf %25, %26 : vector<8x131xf32>
    %28 = vector.extract_strided_slice %27 {offsets = [0, 0], sizes = [8, 122], strides = [1, 1]} : vector<8x131xf32> to vector<8x122xf32>
    %29 = vector.extract_strided_slice %27 {offsets = [0, 1], sizes = [8, 122], strides = [1, 1]} : vector<8x131xf32> to vector<8x122xf32>
    %30 = arith.maximumf %28, %29 : vector<8x122xf32>
    %31 = vector.extract_strided_slice %27 {offsets = [0, 2], sizes = [8, 122], strides = [1, 1]} : vector<8x131xf32> to vector<8x122xf32>
    %32 = arith.maximumf %30, %31 : vector<8x122xf32>
    %33 = vector.extract_strided_slice %27 {offsets = [0, 3], sizes = [8, 122], strides = [1, 1]} : vector<8x131xf32> to vector<8x122xf32>
    %34 = arith.maximumf %32, %33 : vector<8x122xf32>
    %35 = vector.extract_strided_slice %27 {offsets = [0, 4], sizes = [8, 122], strides = [1, 1]} : vector<8x131xf32> to vector<8x122xf32>
    %36 = arith.maximumf %34, %35 : vector<8x122xf32>
    %37 = vector.extract_strided_slice %27 {offsets = [0, 5], sizes = [8, 122], strides = [1, 1]} : vector<8x131xf32> to vector<8x122xf32>
    %38 = arith.maximumf %36, %37 : vector<8x122xf32>
    %39 = vector.extract_strided_slice %27 {offsets = [0, 6], sizes = [8, 122], strides = [1, 1]} : vector<8x131xf32> to vector<8x122xf32>
    %40 = arith.maximumf %38, %39 : vector<8x122xf32>
    %41 = vector.extract_strided_slice %27 {offsets = [0, 7], sizes = [8, 122], strides = [1, 1]} : vector<8x131xf32> to vector<8x122xf32>
    %42 = arith.maximumf %40, %41 : vector<8x122xf32>
    %43 = vector.extract_strided_slice %27 {offsets = [0, 8], sizes = [8, 122], strides = [1, 1]} : vector<8x131xf32> to vector<8x122xf32>
    %44 = arith.maximumf %42, %43 : vector<8x122xf32>
    %45 = vector.extract_strided_slice %27 {offsets = [0, 9], sizes = [8, 122], strides = [1, 1]} : vector<8x131xf32> to vector<8x122xf32>
    %46 = arith.maximumf %44, %45 : vector<8x122xf32>
    %47 = vector.extract_strided_slice %46 {offsets = [0, 0], sizes = [8, 73], strides = [1, 1]} : vector<8x122xf32> to vector<8x73xf32>
    %48 = vector.extract_strided_slice %46 {offsets = [0, 1], sizes = [8, 73], strides = [1, 1]} : vector<8x122xf32> to vector<8x73xf32>
    %49 = vector.extract_strided_slice %46 {offsets = [0, 2], sizes = [8, 73], strides = [1, 1]} : vector<8x122xf32> to vector<8x73xf32>
    %50 = vector.extract_strided_slice %46 {offsets = [0, 3], sizes = [8, 73], strides = [1, 1]} : vector<8x122xf32> to vector<8x73xf32>
    %51 = vector.extract_strided_slice %46 {offsets = [0, 4], sizes = [8, 73], strides = [1, 1]} : vector<8x122xf32> to vector<8x73xf32>
    %52 = vector.extract_strided_slice %46 {offsets = [0, 5], sizes = [8, 73], strides = [1, 1]} : vector<8x122xf32> to vector<8x73xf32>
    %53 = vector.extract_strided_slice %46 {offsets = [0, 6], sizes = [8, 73], strides = [1, 1]} : vector<8x122xf32> to vector<8x73xf32>
    %54 = vector.extract_strided_slice %46 {offsets = [0, 7], sizes = [8, 73], strides = [1, 1]} : vector<8x122xf32> to vector<8x73xf32>
    %55 = vector.extract_strided_slice %46 {offsets = [0, 8], sizes = [8, 73], strides = [1, 1]} : vector<8x122xf32> to vector<8x73xf32>
    %56 = vector.extract_strided_slice %46 {offsets = [0, 9], sizes = [8, 73], strides = [1, 1]} : vector<8x122xf32> to vector<8x73xf32>
    %57 = vector.extract_strided_slice %46 {offsets = [0, 10], sizes = [8, 73], strides = [1, 1]} : vector<8x122xf32> to vector<8x73xf32>
    %58 = vector.extract_strided_slice %46 {offsets = [0, 11], sizes = [8, 73], strides = [1, 1]} : vector<8x122xf32> to vector<8x73xf32>
    %59 = vector.extract_strided_slice %46 {offsets = [0, 12], sizes = [8, 73], strides = [1, 1]} : vector<8x122xf32> to vector<8x73xf32>
    %60 = vector.extract_strided_slice %46 {offsets = [0, 13], sizes = [8, 73], strides = [1, 1]} : vector<8x122xf32> to vector<8x73xf32>
    %61 = vector.extract_strided_slice %46 {offsets = [0, 14], sizes = [8, 73], strides = [1, 1]} : vector<8x122xf32> to vector<8x73xf32>
    %62 = vector.extract_strided_slice %46 {offsets = [0, 15], sizes = [8, 73], strides = [1, 1]} : vector<8x122xf32> to vector<8x73xf32>
    %63 = vector.extract_strided_slice %46 {offsets = [0, 16], sizes = [8, 73], strides = [1, 1]} : vector<8x122xf32> to vector<8x73xf32>
    %64 = vector.extract_strided_slice %46 {offsets = [0, 17], sizes = [8, 73], strides = [1, 1]} : vector<8x122xf32> to vector<8x73xf32>
    %65 = vector.extract_strided_slice %46 {offsets = [0, 18], sizes = [8, 73], strides = [1, 1]} : vector<8x122xf32> to vector<8x73xf32>
    %66 = vector.extract_strided_slice %46 {offsets = [0, 19], sizes = [8, 73], strides = [1, 1]} : vector<8x122xf32> to vector<8x73xf32>
    %67 = vector.extract_strided_slice %46 {offsets = [0, 20], sizes = [8, 73], strides = [1, 1]} : vector<8x122xf32> to vector<8x73xf32>
    %68 = vector.extract_strided_slice %46 {offsets = [0, 21], sizes = [8, 73], strides = [1, 1]} : vector<8x122xf32> to vector<8x73xf32>
    %69 = vector.extract_strided_slice %46 {offsets = [0, 22], sizes = [8, 73], strides = [1, 1]} : vector<8x122xf32> to vector<8x73xf32>
    %70 = vector.extract_strided_slice %46 {offsets = [0, 23], sizes = [8, 73], strides = [1, 1]} : vector<8x122xf32> to vector<8x73xf32>
    %71 = vector.extract_strided_slice %46 {offsets = [0, 24], sizes = [8, 73], strides = [1, 1]} : vector<8x122xf32> to vector<8x73xf32>
    %72 = vector.extract_strided_slice %46 {offsets = [0, 25], sizes = [8, 73], strides = [1, 1]} : vector<8x122xf32> to vector<8x73xf32>
    %73 = vector.extract_strided_slice %46 {offsets = [0, 26], sizes = [8, 73], strides = [1, 1]} : vector<8x122xf32> to vector<8x73xf32>
    %74 = vector.extract_strided_slice %46 {offsets = [0, 27], sizes = [8, 73], strides = [1, 1]} : vector<8x122xf32> to vector<8x73xf32>
    %75 = vector.extract_strided_slice %46 {offsets = [0, 28], sizes = [8, 73], strides = [1, 1]} : vector<8x122xf32> to vector<8x73xf32>
    %76 = vector.extract_strided_slice %46 {offsets = [0, 29], sizes = [8, 73], strides = [1, 1]} : vector<8x122xf32> to vector<8x73xf32>
    %77 = vector.extract_strided_slice %46 {offsets = [0, 30], sizes = [8, 73], strides = [1, 1]} : vector<8x122xf32> to vector<8x73xf32>
    %78 = vector.extract_strided_slice %46 {offsets = [0, 31], sizes = [8, 73], strides = [1, 1]} : vector<8x122xf32> to vector<8x73xf32>
    %79 = vector.extract_strided_slice %46 {offsets = [0, 32], sizes = [8, 73], strides = [1, 1]} : vector<8x122xf32> to vector<8x73xf32>
    %80 = vector.extract_strided_slice %46 {offsets = [0, 33], sizes = [8, 73], strides = [1, 1]} : vector<8x122xf32> to vector<8x73xf32>
    %81 = vector.extract_strided_slice %46 {offsets = [0, 34], sizes = [8, 73], strides = [1, 1]} : vector<8x122xf32> to vector<8x73xf32>
    %82 = vector.extract_strided_slice %46 {offsets = [0, 35], sizes = [8, 73], strides = [1, 1]} : vector<8x122xf32> to vector<8x73xf32>
    %83 = vector.extract_strided_slice %46 {offsets = [0, 36], sizes = [8, 73], strides = [1, 1]} : vector<8x122xf32> to vector<8x73xf32>
    %84 = vector.extract_strided_slice %46 {offsets = [0, 37], sizes = [8, 73], strides = [1, 1]} : vector<8x122xf32> to vector<8x73xf32>
    %85 = vector.extract_strided_slice %46 {offsets = [0, 38], sizes = [8, 73], strides = [1, 1]} : vector<8x122xf32> to vector<8x73xf32>
    %86 = vector.extract_strided_slice %46 {offsets = [0, 39], sizes = [8, 73], strides = [1, 1]} : vector<8x122xf32> to vector<8x73xf32>
    %87 = vector.extract_strided_slice %46 {offsets = [0, 40], sizes = [8, 73], strides = [1, 1]} : vector<8x122xf32> to vector<8x73xf32>
    %88 = vector.extract_strided_slice %46 {offsets = [0, 41], sizes = [8, 73], strides = [1, 1]} : vector<8x122xf32> to vector<8x73xf32>
    %89 = vector.extract_strided_slice %46 {offsets = [0, 42], sizes = [8, 73], strides = [1, 1]} : vector<8x122xf32> to vector<8x73xf32>
    %90 = vector.extract_strided_slice %46 {offsets = [0, 43], sizes = [8, 73], strides = [1, 1]} : vector<8x122xf32> to vector<8x73xf32>
    %91 = vector.extract_strided_slice %46 {offsets = [0, 44], sizes = [8, 73], strides = [1, 1]} : vector<8x122xf32> to vector<8x73xf32>
    %92 = vector.extract_strided_slice %46 {offsets = [0, 45], sizes = [8, 73], strides = [1, 1]} : vector<8x122xf32> to vector<8x73xf32>
    %93 = vector.extract_strided_slice %46 {offsets = [0, 46], sizes = [8, 73], strides = [1, 1]} : vector<8x122xf32> to vector<8x73xf32>
    %94 = vector.extract_strided_slice %46 {offsets = [0, 47], sizes = [8, 73], strides = [1, 1]} : vector<8x122xf32> to vector<8x73xf32>
    %95 = vector.extract_strided_slice %46 {offsets = [0, 48], sizes = [8, 73], strides = [1, 1]} : vector<8x122xf32> to vector<8x73xf32>
    %96 = vector.extract_strided_slice %46 {offsets = [0, 49], sizes = [8, 73], strides = [1, 1]} : vector<8x122xf32> to vector<8x73xf32>
    %97 = tpu.concatenate %47, %48, %49, %50, %51, %52, %53, %54, %55, %56, %57, %58, %59, %60, %61, %62 in 0 : vector<8x73xf32>, vector<8x73xf32>, vector<8x73xf32>, vector<8x73xf32>, vector<8x73xf32>, vector<8x73xf32>, vector<8x73xf32>, vector<8x73xf32>, vector<8x73xf32>, vector<8x73xf32>, vector<8x73xf32>, vector<8x73xf32>, vector<8x73xf32>, vector<8x73xf32>, vector<8x73xf32>, vector<8x73xf32> -> vector<128x73xf32>
    %98 = tpu.concatenate %63, %64, %65, %66, %67, %68, %69, %70, %71, %72, %73, %74, %75, %76, %77, %78 in 0 : vector<8x73xf32>, vector<8x73xf32>, vector<8x73xf32>, vector<8x73xf32>, vector<8x73xf32>, vector<8x73xf32>, vector<8x73xf32>, vector<8x73xf32>, vector<8x73xf32>, vector<8x73xf32>, vector<8x73xf32>, vector<8x73xf32>, vector<8x73xf32>, vector<8x73xf32>, vector<8x73xf32>, vector<8x73xf32> -> vector<128x73xf32>
    %99 = tpu.concatenate %79, %80, %81, %82, %83, %84, %85, %86, %87, %88, %89, %90, %91, %92, %93, %94 in 0 : vector<8x73xf32>, vector<8x73xf32>, vector<8x73xf32>, vector<8x73xf32>, vector<8x73xf32>, vector<8x73xf32>, vector<8x73xf32>, vector<8x73xf32>, vector<8x73xf32>, vector<8x73xf32>, vector<8x73xf32>, vector<8x73xf32>, vector<8x73xf32>, vector<8x73xf32>, vector<8x73xf32>, vector<8x73xf32> -> vector<128x73xf32>
    %100 = tpu.concatenate %95, %96 in 0 : vector<8x73xf32>, vector<8x73xf32> -> vector<16x73xf32>
    %101 = tpu.concatenate %97, %98, %99, %100 in 0 : vector<128x73xf32>, vector<128x73xf32>, vector<128x73xf32>, vector<16x73xf32> -> vector<400x73xf32>
    %c0_7 = arith.constant 0 : index
    %c0_8 = arith.constant 0 : index
    %102 = vector.load %arg4[%c0_7, %c0_8] : memref<4x400xf32, #tpu.memory_space<vmem>>, vector<4x400xf32>
    %cst_9 = arith.constant dense<0.000000e+00> : vector<4x73xf32>
    %103 = tpu.matmul %102, %101, %cst_9 {dimension_numbers = #tpu.dot_dimension_numbers<[1], [0], [0], [1], [0, 0, 1, 1], [], []>} : vector<4x400xf32>, vector<400x73xf32>, vector<4x73xf32> -> vector<4x73xf32>
    %c0_10 = arith.constant 0 : index
    %c0_11 = arith.constant 0 : index
    %104 = vector.load %arg5[%c0_10, %c0_11] : memref<4x1xf32, #tpu.memory_space<vmem>>, vector<4x1xf32>
    %105 = vector.broadcast %104 : vector<4x1xf32> to vector<4x73xf32>
    %106 = arith.addf %103, %105 : vector<4x73xf32>
    %cst_12 = arith.constant 0.000000e+00 : f32
    %107 = vector.broadcast %cst_12 : f32 to vector<4x73xf32>
    %108 = arith.maximumf %106, %107 : vector<4x73xf32>
    %109 = vector.extract_strided_slice %108 {offsets = [0, 0], sizes = [4, 64], strides = [1, 1]} : vector<4x73xf32> to vector<4x64xf32>
    %110 = vector.extract_strided_slice %108 {offsets = [0, 1], sizes = [4, 64], strides = [1, 1]} : vector<4x73xf32> to vector<4x64xf32>
    %111 = arith.maximumf %109, %110 : vector<4x64xf32>
    %112 = vector.extract_strided_slice %108 {offsets = [0, 2], sizes = [4, 64], strides = [1, 1]} : vector<4x73xf32> to vector<4x64xf32>
    %113 = arith.maximumf %111, %112 : vector<4x64xf32>
    %114 = vector.extract_strided_slice %108 {offsets = [0, 3], sizes = [4, 64], strides = [1, 1]} : vector<4x73xf32> to vector<4x64xf32>
    %115 = arith.maximumf %113, %114 : vector<4x64xf32>
    %116 = vector.extract_strided_slice %108 {offsets = [0, 4], sizes = [4, 64], strides = [1, 1]} : vector<4x73xf32> to vector<4x64xf32>
    %117 = arith.maximumf %115, %116 : vector<4x64xf32>
    %118 = vector.extract_strided_slice %108 {offsets = [0, 5], sizes = [4, 64], strides = [1, 1]} : vector<4x73xf32> to vector<4x64xf32>
    %119 = arith.maximumf %117, %118 : vector<4x64xf32>
    %120 = vector.extract_strided_slice %108 {offsets = [0, 6], sizes = [4, 64], strides = [1, 1]} : vector<4x73xf32> to vector<4x64xf32>
    %121 = arith.maximumf %119, %120 : vector<4x64xf32>
    %122 = vector.extract_strided_slice %108 {offsets = [0, 7], sizes = [4, 64], strides = [1, 1]} : vector<4x73xf32> to vector<4x64xf32>
    %123 = arith.maximumf %121, %122 : vector<4x64xf32>
    %124 = vector.extract_strided_slice %108 {offsets = [0, 8], sizes = [4, 64], strides = [1, 1]} : vector<4x73xf32> to vector<4x64xf32>
    %125 = arith.maximumf %123, %124 : vector<4x64xf32>
    %126 = vector.extract_strided_slice %108 {offsets = [0, 9], sizes = [4, 64], strides = [1, 1]} : vector<4x73xf32> to vector<4x64xf32>
    %127 = arith.maximumf %125, %126 : vector<4x64xf32>
    %c0_13 = arith.constant 0 : index
    %c0_14 = arith.constant 0 : index
    %128 = vector.load %arg6[%c0_13, %c0_14] : memref<64x22xf32, #tpu.memory_space<vmem>>, vector<64x22xf32>
    %cst_15 = arith.constant dense<0.000000e+00> : vector<4x22xf32>
    %129 = tpu.matmul %127, %128, %cst_15 {dimension_numbers = #tpu.dot_dimension_numbers<[1], [0], [0], [1], [0, 0, 1, 1], [], []>} : vector<4x64xf32>, vector<64x22xf32>, vector<4x22xf32> -> vector<4x22xf32>
    %130 = vector.extract_strided_slice %129 {offsets = [0, 0], sizes = [4, 13], strides = [1, 1]} : vector<4x22xf32> to vector<4x13xf32>
    %131 = vector.extract_strided_slice %129 {offsets = [0, 1], sizes = [4, 13], strides = [1, 1]} : vector<4x22xf32> to vector<4x13xf32>
    %132 = vector.extract_strided_slice %129 {offsets = [0, 2], sizes = [4, 13], strides = [1, 1]} : vector<4x22xf32> to vector<4x13xf32>
    %133 = vector.extract_strided_slice %129 {offsets = [0, 3], sizes = [4, 13], strides = [1, 1]} : vector<4x22xf32> to vector<4x13xf32>
    %134 = vector.extract_strided_slice %129 {offsets = [0, 4], sizes = [4, 13], strides = [1, 1]} : vector<4x22xf32> to vector<4x13xf32>
    %135 = vector.extract_strided_slice %129 {offsets = [0, 5], sizes = [4, 13], strides = [1, 1]} : vector<4x22xf32> to vector<4x13xf32>
    %136 = vector.extract_strided_slice %129 {offsets = [0, 6], sizes = [4, 13], strides = [1, 1]} : vector<4x22xf32> to vector<4x13xf32>
    %137 = vector.extract_strided_slice %129 {offsets = [0, 7], sizes = [4, 13], strides = [1, 1]} : vector<4x22xf32> to vector<4x13xf32>
    %138 = vector.extract_strided_slice %129 {offsets = [0, 8], sizes = [4, 13], strides = [1, 1]} : vector<4x22xf32> to vector<4x13xf32>
    %139 = vector.extract_strided_slice %129 {offsets = [0, 9], sizes = [4, 13], strides = [1, 1]} : vector<4x22xf32> to vector<4x13xf32>
    %140 = tpu.concatenate %130, %131, %132, %133, %134, %135, %136, %137, %138, %139 in 0 : vector<4x13xf32>, vector<4x13xf32>, vector<4x13xf32>, vector<4x13xf32>, vector<4x13xf32>, vector<4x13xf32>, vector<4x13xf32>, vector<4x13xf32>, vector<4x13xf32>, vector<4x13xf32> -> vector<40x13xf32>
    %c0_16 = arith.constant 0 : index
    %c0_17 = arith.constant 0 : index
    %141 = vector.load %arg7[%c0_16, %c0_17] : memref<2x40xf32, #tpu.memory_space<vmem>>, vector<2x40xf32>
    %cst_18 = arith.constant dense<0.000000e+00> : vector<2x13xf32>
    %142 = tpu.matmul %141, %140, %cst_18 {dimension_numbers = #tpu.dot_dimension_numbers<[1], [0], [0], [1], [0, 0, 1, 1], [], []>} : vector<2x40xf32>, vector<40x13xf32>, vector<2x13xf32> -> vector<2x13xf32>
    %c0_19 = arith.constant 0 : index
    %c0_20 = arith.constant 0 : index
    %143 = vector.load %arg8[%c0_19, %c0_20] : memref<2x1xf32, #tpu.memory_space<vmem>>, vector<2x1xf32>
    %144 = vector.broadcast %143 : vector<2x1xf32> to vector<2x13xf32>
    %145 = arith.addf %142, %144 : vector<2x13xf32>
    %c0_21 = arith.constant 0 : index
    %c0_22 = arith.constant 0 : index
    %146 = vector.load %arg9[%c0_21, %c0_22] : memref<1x13xf32, #tpu.memory_space<vmem>>, vector<1x13xf32>
    %147 = vector.broadcast %146 : vector<1x13xf32> to vector<2x13xf32>
    %148 = arith.mulf %145, %147 : vector<2x13xf32>
    %cst_23 = arith.constant dense<0.000000e+00> : vector<2xf32>
    %149 = vector.multi_reduction <add>, %148, %cst_23 [1] : vector<2x13xf32> to vector<2xf32>
    %150 = vector.shape_cast %149 : vector<2xf32> to vector<2x1xf32>
    %c0_24 = arith.constant 0 : index
    %c0_25 = arith.constant 0 : index
    %151 = vector.load %arg10[%c0_24, %c0_25] : memref<1x1xf32, #tpu.memory_space<vmem>>, vector<1x1xf32>
    %152 = vector.broadcast %151 : vector<1x1xf32> to vector<2x1xf32>
    %153 = arith.addf %150, %152 : vector<2x1xf32>
    %154 = arith.negf %153 : vector<2x1xf32>
    %155 = math.exp %154 : vector<2x1xf32>
    %cst_26 = arith.constant 1.000000e+00 : f32
    %156 = vector.broadcast %cst_26 : f32 to vector<2x1xf32>
    %157 = arith.addf %156, %155 : vector<2x1xf32>
    %158 = arith.divf %156, %157 : vector<2x1xf32>
    %c0_27 = arith.constant 0 : index
    %c0_28 = arith.constant 0 : index
    %c0_29 = arith.constant 0 : index
    %159 = vector.load %arg11[%c0_27, %c0_28, %c0_29] : memref<1x2x1xf32, #tpu.memory_space<vmem>>, vector<1x2x1xf32>
    %160 = vector.shape_cast %159 : vector<1x2x1xf32> to vector<2x1xf32>
    %161 = vector.shape_cast %158 : vector<2x1xf32> to vector<1x2x1xf32>
    tpu.vector_store %arg11[%c0_27, %c0_28, %c0_29], %161 {strides = array<i32>} : memref<1x2x1xf32, #tpu.memory_space<vmem>>, vector<1x2x1xf32>,
    return
  }
  func.func @transform_0(%arg0: i32) -> (i32, i32, i32) {
    %c0_i32 = arith.constant 0 : i32
    %c0_i32_0 = arith.constant 0 : i32
    %c0_i32_1 = arith.constant 0 : i32
    return %arg0, %c0_i32, %c0_i32_0 : i32, i32, i32
  }
  func.func @transform_1(%arg0: i32) -> (i32, i32) {
    %c0_i32 = arith.constant 0 : i32
    %c0_i32_0 = arith.constant 0 : i32
    %c0_i32_1 = arith.constant 0 : i32
    return %c0_i32, %c0_i32_0 : i32, i32
  }
  func.func @transform_2(%arg0: i32) -> (i32, i32) {
    %c0_i32 = arith.constant 0 : i32
    %c0_i32_0 = arith.constant 0 : i32
    %c0_i32_1 = arith.constant 0 : i32
    return %c0_i32, %c0_i32_0 : i32, i32
  }
  func.func @transform_3(%arg0: i32) -> (i32, i32) {
    %c0_i32 = arith.constant 0 : i32
    %c0_i32_0 = arith.constant 0 : i32
    %c0_i32_1 = arith.constant 0 : i32
    return %c0_i32, %c0_i32_0 : i32, i32
  }
  func.func @transform_4(%arg0: i32) -> (i32, i32) {
    %c0_i32 = arith.constant 0 : i32
    %c0_i32_0 = arith.constant 0 : i32
    %c0_i32_1 = arith.constant 0 : i32
    return %c0_i32, %c0_i32_0 : i32, i32
  }
  func.func @transform_5(%arg0: i32) -> (i32, i32) {
    %c0_i32 = arith.constant 0 : i32
    %c0_i32_0 = arith.constant 0 : i32
    %c0_i32_1 = arith.constant 0 : i32
    return %c0_i32, %c0_i32_0 : i32, i32
  }
  func.func @transform_6(%arg0: i32) -> (i32, i32) {
    %c0_i32 = arith.constant 0 : i32
    %c0_i32_0 = arith.constant 0 : i32
    %c0_i32_1 = arith.constant 0 : i32
    return %c0_i32, %c0_i32_0 : i32, i32
  }
  func.func @transform_7(%arg0: i32) -> (i32, i32) {
    %c0_i32 = arith.constant 0 : i32
    %c0_i32_0 = arith.constant 0 : i32
    %c0_i32_1 = arith.constant 0 : i32
    return %c0_i32, %c0_i32_0 : i32, i32
  }
  func.func @transform_8(%arg0: i32) -> (i32, i32) {
    %c0_i32 = arith.constant 0 : i32
    %c0_i32_0 = arith.constant 0 : i32
    %c0_i32_1 = arith.constant 0 : i32
    return %c0_i32, %c0_i32_0 : i32, i32
  }
  func.func @transform_9(%arg0: i32) -> (i32, i32) {
    %c0_i32 = arith.constant 0 : i32
    %c0_i32_0 = arith.constant 0 : i32
    %c0_i32_1 = arith.constant 0 : i32
    return %c0_i32, %c0_i32_0 : i32, i32
  }
  func.func @transform_10(%arg0: i32) -> (i32, i32, i32) {
    %c0_i32 = arith.constant 0 : i32
    %c0_i32_0 = arith.constant 0 : i32
    %c0_i32_1 = arith.constant 0 : i32
    return %arg0, %c0_i32, %c0_i32_0 : i32, i32, i32
  }
}

</mosaic_0001>

<llo_original>
// kernel: _lambda_.2
$region0: #{_lambda_.2}
  #allocation0 [shape = 'u32[]', space=smem, size = 0x4, offset = 0x4, fixed_abs, tag = 'smem constant byte address 0x4 - core index']
  #allocation1 [shape = 'u32[144,128]{1,0:T(1,128)}', space=vmem, size = 0x12000, scoped, tag = 'internal scratch']
  #allocation2 [shape = 'f32[1,1]{1,0:T(1,128)S(1)}', space=vmem, size = 0x200, scoped, tag = 'scoped memory for _lambda_.2']
  %s0 = inlined_call_operand.vmem [shape: bf16[2,135,6784], index: 0, kind: input, shape index: {}, may-alias: {0,1}]
  %s1 = inlined_call_operand.vmem [shape: bf16[2,135,6784], index: 1, kind: input, shape index: {}, may-alias: {0,1}]
  %s2 = inlined_call_operand.vmem [shape: bf16[12,135], index: 2, kind: input, shape index: {}]
  %s3 = inlined_call_operand.<no memory space> [shape: f32[1,1], index: 3, kind: input, shape index: {}]
  %s4 = inlined_call_operand.vmem [shape: f32[2,1,6656], index: 4, kind: output, shape index: {}]
  %s5 = sld [smem:[#allocation0]]
  $region156: #{_lambda_.2} parent=0
    _
  %s7 = ssub.s32 1, %s5
  %s8 = scalar_select 0, %s7, %s5
  %v9 = vstv %s3
  %10 = vst [vmem:[#allocation2] sm:$0x1] %v9
  $region1: #{_lambda_.2} parent=0
    #allocation3 [shape = 'u8[905216]{0}', space=vmem, size = 0xdd000, scoped, tag = 'input window, operand 0']
    #allocation4 [shape = 'u8[69632]{0}', space=vmem, size = 0x11000, scoped, tag = 'input window, operand 1']
    loop: start=0, step=1, limit=10
    $region2: #{_lambda_.2} parent=1 // loop_pre_header
      _
    $region3: #{_lambda_.2} parent=1 // loop_header
      %s12 = sphi 0, %s16
      %p13 = scmp.ge.s32.totalorder %s12, 10
      %s19 = sphi 0, %s31
      %s20 = sphi 0, %s27
      %s21 = sphi 0, %s19
      %s22 = sphi 0, %s20
      %s23 = sphi 0, %s21
      %s24 = sphi 0, %s22
      %s36 = sphi 0, %s38
      %s39 = sphi 0, %s36
      %s40 = sphi 0, %s39
      %s56 = sphi 0, %s40
      %s68 = sphi 0, %s70
      %s71 = sphi 0, %s68
      %s72 = sphi 0, %s71
      %s88 = sphi 0, %s72
      %s92 = sphi 0, %s92
      %s94 = sphi 0, %s92
      %s95 = sphi 0, %s94
      %s109 = sphi 0, %s95
      %s113 = sphi 0, %s113
      %s115 = sphi 0, %s113
      %s116 = sphi 0, %s115
      %s130 = sphi 0, %s116
      %s138 = sphi 0, %s140
      %s141 = sphi 0, %s138
      %s142 = sphi 0, %s141
      %s158 = sphi 0, %s142
    $region4: #{_lambda_.2} parent=1 // loop_header_branch
      %15 = sbr.rel (%p13) target = $region8
    $region5: #{_lambda_.2} parent=1 // loop_body
      %s17 = ssub.s32 %s12, 1
      %s18 = ssub.s32 %s12, 2
      %s25 = sadd.s32 1, %s20
      %p26 = scmp.ge.s32.totalorder %s25, 4
      %s27 = scalar_select %p26, 0, %s25
      %s28 = sadd.s32 1, %s19
      %s29 = scalar_select %p26, %s28, %s19
      %p30 = scmp.ge.s32.totalorder %s29, 2
      %s31 = scalar_select %p30, 0, %s29
      %s32 = ssub.s32 %s19, %s31
      %s33 = ssub.s32 %s20, %s27
      %s34 = sor.u32 %s32, %s33
      %p35 = scmp.eq.s32.totalorder %s34, 0
      %s37 = sadd.s32 %s36, 1
      %s38 = scalar_select %p35, %s36, %s37
      %p41 = pneg %p35
      %p42 = scmp.eq.s32.totalorder %s12, 7
      %p43 = por %p41, %p42
      %p44 = scmp.ne.s32.totalorder %s36, %s39
      %p45 = scmp.eq.s32.totalorder %s12, 0
      %p46 = por %p44, %p45
      %p47 = scmp.ne.s32.totalorder %s36, %s39
      %p48 = scmp.eq.s32.totalorder %s17, 7
      %p49 = por %p47, %p48
      %p50 = scmp.ne.s32.totalorder %s39, %s40
      %p51 = scmp.eq.s32.totalorder %s17, 0
      %p52 = por %p50, %p51
      %p53 = scmp.ne.s32.totalorder %s39, %s40
      %p54 = scmp.eq.s32.totalorder %s18, 7
      %p55 = por %p53, %p54
      %p57 = scmp.ne.s32.totalorder %s40, %s56
      %p58 = scmp.eq.s32.totalorder %s18, 0
      %p59 = por %p57, %p58
      %s60 = sadd.s32 %s20, 1
      %s61 = smul.u32 %s60, 13
      %s62 = sadd.s32 %s27, 1
      %s63 = smul.u32 %s62, 13
      %s64 = ssub.s32 %s19, %s31
      %s65 = ssub.s32 %s61, %s63
      %s66 = sor.u32 %s64, %s65
      %p67 = scmp.eq.s32.totalorder %s66, 0
      %s69 = sadd.s32 %s68, 1
      %s70 = scalar_select %p67, %s68, %s69
      %p73 = pneg %p67
      %p74 = scmp.eq.s32.totalorder %s12, 7
      %p75 = por %p73, %p74
      %p76 = scmp.ne.s32.totalorder %s68, %s71
      %p77 = scmp.eq.s32.totalorder %s12, 0
      %p78 = por %p76, %p77
      %p79 = scmp.ne.s32.totalorder %s68, %s71
      %p80 = scmp.eq.s32.totalorder %s17, 7
      %p81 = por %p79, %p80
      %p82 = scmp.ne.s32.totalorder %s71, %s72
      %p83 = scmp.eq.s32.totalorder %s17, 0
      %p84 = por %p82, %p83
      %p85 = scmp.ne.s32.totalorder %s71, %s72
      %p86 = scmp.eq.s32.totalorder %s18, 7
      %p87 = por %p85, %p86
      %p89 = scmp.ne.s32.totalorder %s72, %s88
      %p90 = scmp.eq.s32.totalorder %s18, 0
      %p91 = por %p89, %p90
      %s93 = sadd.s32 %s92, 1
      %p96 = scmp.eq.s32.totalorder %s12, 7
      %p97 = scmp.ne.s32.totalorder %s92, %s94
      %p98 = scmp.eq.s32.totalorder %s12, 0
      %p99 = por %p97, %p98
      %p100 = scmp.ne.s32.totalorder %s92, %s94
      %p101 = scmp.eq.s32.totalorder %s17, 7
      %p102 = por %p100, %p101
      %p103 = scmp.ne.s32.totalorder %s94, %s95
      %p104 = scmp.eq.s32.totalorder %s17, 0
      %p105 = por %p103, %p104
      %p106 = scmp.ne.s32.totalorder %s94, %s95
      %p107 = scmp.eq.s32.totalorder %s18, 7
      %p108 = por %p106, %p107
      %p110 = scmp.ne.s32.totalorder %s95, %s109
      %p111 = scmp.eq.s32.totalorder %s18, 0
      %p112 = por %p110, %p111
      %s114 = sadd.s32 %s113, 1
      %p117 = scmp.eq.s32.totalorder %s12, 7
      %p118 = scmp.ne.s32.totalorder %s113, %s115
      %p119 = scmp.eq.s32.totalorder %s12, 0
      %p120 = por %p118, %p119
      %p121 = scmp.ne.s32.totalorder %s113, %s115
      %p122 = scmp.eq.s32.totalorder %s17, 7
      %p123 = por %p121, %p122
      %p124 = scmp.ne.s32.totalorder %s115, %s116
      %p125 = scmp.eq.s32.totalorder %s17, 0
      %p126 = por %p124, %p125
      %p127 = scmp.ne.s32.totalorder %s115, %s116
      %p128 = scmp.eq.s32.totalorder %s18, 7
      %p129 = por %p127, %p128
      %p131 = scmp.ne.s32.totalorder %s116, %s130
      %p132 = scmp.eq.s32.totalorder %s18, 0
      %p133 = por %p131, %p132
      %s134 = ssub.s32 %s19, %s31
      %s135 = ssub.s32 %s20, %s27
      %s136 = sor.u32 %s134, %s135
      %p137 = scmp.eq.s32.totalorder %s136, 0
      %s139 = sadd.s32 %s138, 1
      %s140 = scalar_select %p137, %s138, %s139
      %p143 = pneg %p137
      %p144 = scmp.eq.s32.totalorder %s12, 7
      %p145 = por %p143, %p144
      %p146 = scmp.ne.s32.totalorder %s138, %s141
      %p147 = scmp.eq.s32.totalorder %s12, 0
      %p148 = por %p146, %p147
      %p149 = scmp.ne.s32.totalorder %s138, %s141
      %p150 = scmp.eq.s32.totalorder %s17, 7
      %p151 = por %p149, %p150
      %p152 = scmp.ne.s32.totalorder %s141, %s142
      %p153 = scmp.eq.s32.totalorder %s17, 0
      %p154 = por %p152, %p153
      %p155 = scmp.ne.s32.totalorder %s141, %s142
      %p156 = scmp.eq.s32.totalorder %s18, 7
      %p157 = por %p155, %p156
      %p159 = scmp.ne.s32.totalorder %s142, %s158
      %p160 = scmp.eq.s32.totalorder %s18, 0
      %p161 = por %p159, %p160
      %p162 = scmp.le.s32.totalorder 1, %s12
      %p163 = scmp.lt.s32.totalorder %s12, 9
      %p164 = pnand %p162, %p163
      %p165 = pneg %p164
      // Predicated region
      $region9: #{_lambda_.2} parent=5 // pred_check
        _
      $region10: #{_lambda_.2} parent=5 // pred_check_branch
        %167 = sbr.rel (%p164) target = $region12
      $region11: #{_lambda_.2} parent=5 // pred_region
        %s168 = ssub.s32 %s12, 1
        // Predicated region
        $region13: #{_lambda_.2} parent=11 // pred_check
          %p169 = pneg %p105
        $region14: #{_lambda_.2} parent=11 // pred_check_branch
          %171 = sbr.rel (%p169) target = $region16
        $region15: #{_lambda_.2} parent=11 // pred_region
          _
        $region16: #{_lambda_.2} parent=11 // pred_fallthru
          _
        // Predicated region
        $region17: #{_lambda_.2} parent=11 // pred_check
          %p172 = pneg %p126
        $region18: #{_lambda_.2} parent=11 // pred_check_branch
          %174 = sbr.rel (%p172) target = $region20
        $region19: #{_lambda_.2} parent=11 // pred_region
          _
        $region20: #{_lambda_.2} parent=11 // pred_fallthru
          _
      $region12: #{_lambda_.2} parent=5 // pred_fallthru
        _
      %p175 = scmp.lt.s32.totalorder %s12, 8
      // Predicated region
      $region21: #{_lambda_.2} parent=5 // pred_check
        %p176 = pneg %p175
      $region22: #{_lambda_.2} parent=5 // pred_check_branch
        %178 = sbr.rel (%p176) target = $region24
      $region23: #{_lambda_.2} parent=5 // pred_region
        // Predicated region
        $region25: #{_lambda_.2} parent=23 // pred_check
          %p179 = pneg %p46
        $region26: #{_lambda_.2} parent=23 // pred_check_branch
          %181 = sbr.rel (%p179) target = $region28
        $region27: #{_lambda_.2} parent=23 // pred_region
          %s182 = sand.u32 %s36, 1
          %s183 = sand.u32 %s36, 1
          %s184 = smul.addr %s183, 884
          %s185 = scalar_lea.vmem [#allocation3], %s184
          %s186 = smul.u32 13, %s20
          %s187 = ssub.s32 53, %s186
          %p188 = scmp.lt.s32.totalorder %s187, 13
          %s189 = scalar_select %p188, %s187, 13
          %s190 = smul.u32 1088, %s189
          %p191 = scmp.ne.s32.totalorder 0, %s190
          %s192 = smul.addr %s19, 901
          %s193 = sadd.s32 %s186, %s192
          %s194 = smul.addr %s193, 4
          %s195 = scalar_lea.vmem %s0, %s194
          %s196 = smul.u32 %s189, 4
          // Predicated region
          $region29: #{_lambda_.2} parent=27 // pred_check
            %p197 = pneg %p191
          $region30: #{_lambda_.2} parent=27 // pred_check_branch
            %199 = sbr.rel (%p197) target = $region32
          $region31: #{_lambda_.2} parent=27 // pred_region
            %p200 = scmp.lt.u32.totalorder %s196, 8
            %p201 = pneg %p200
            // Predicated region
            $region33: #{_lambda_.2} parent=31 // pred_check
              _
            $region34: #{_lambda_.2} parent=31 // pred_check_branch
              %203 = sbr.rel (%p200) target = $region36
            $region35: #{_lambda_.2} parent=31 // pred_region
              %s250 = sand.u32 %s196, 7
              %p251 = scmp.eq.s32.totalorder %s250, 0
              // Predicated region
              $region48: #{_lambda_.2} parent=35 // pred_check
                %p252 = pneg %p251
              $region49: #{_lambda_.2} parent=35 // pred_check_branch
                %254 = sbr.rel (%p252) target = $region51
              $region50: #{_lambda_.2} parent=35 // pred_region
                %s255 = sshrl.u32 %s196, 3
                %s256 = sshrl.u32 %s255, 2
                // While loop
                $region52: #{_lambda_.2} parent=50 // loop_pre_header
                  _
                $region53: #{_lambda_.2} parent=50 // loop_header
                  %s260 = sphi 0, %s262
                  %p261 = scmp.ge.s32.totalorder %s260, %s256
                  %s265 = sphi 0, %s406
                  %s266 = sphi %s195, %s409
                  %s267 = sphi %s185, %s410
                $region54: #{_lambda_.2} parent=50 // loop_header_branch
                  %264 = sbr.rel (%p261) target = $region58
                $region55: #{_lambda_.2} parent=50 // loop_body
                  %v268 = vld [vmem:[%s266] sm:$0xff]
                  %269 = vst [vmem:[%s267] sm:$0xff] %v268
                  %v270 = vld [vmem:[%s266 + $0x8] sm:$0xff]
                  %271 = vst [vmem:[%s267 + $0x8] sm:$0xff] %v270
                  %v272 = vld [vmem:[%s266 + $0x10] sm:$0xff]
                  %273 = vst [vmem:[%s267 + $0x10] sm:$0xff] %v272
                  %v274 = vld [vmem:[%s266 + $0x18] sm:$0xff]
                  %275 = vst [vmem:[%s267 + $0x18] sm:$0xff] %v274
                  %v276 = vld [vmem:[%s266 + $0xd4] sm:$0xff]
                  %277 = vst [vmem:[%s267 + $0x34] sm:$0xff] %v276
                  %v278 = vld [vmem:[%s266 + $0xdc] sm:$0xff]
                  %279 = vst [vmem:[%s267 + $0x3c] sm:$0xff] %v278
                  %v280 = vld [vmem:[%s266 + $0xe4] sm:$0xff]
                  %281 = vst [vmem:[%s267 + $0x44] sm:$0xff] %v280
                  %v282 = vld [vmem:[%s266 + $0xec] sm:$0xff]
                  %283 = vst [vmem:[%s267 + $0x4c] sm:$0xff] %v282
                  %v284 = vld [vmem:[%s266 + $0x1a8] sm:$0xff]
                  %285 = vst [vmem:[%s267 + $0x68] sm:$0xff] %v284
                  %v286 = vld [vmem:[%s266 + $0x1b0] sm:$0xff]
                  %287 = vst [vmem:[%s267 + $0x70] sm:$0xff] %v286
                  %v288 = vld [vmem:[%s266 + $0x1b8] sm:$0xff]
                  %289 = vst [vmem:[%s267 + $0x78] sm:$0xff] %v288
                  %v290 = vld [vmem:[%s266 + $0x1c0] sm:$0xff]
                  %291 = vst [vmem:[%s267 + $0x80] sm:$0xff] %v290
                  %v292 = vld [vmem:[%s266 + $0x27c] sm:$0xff]
                  %293 = vst [vmem:[%s267 + $0x9c] sm:$0xff] %v292
                  %v294 = vld [vmem:[%s266 + $0x284] sm:$0xff]
                  %295 = vst [vmem:[%s267 + $0xa4] sm:$0xff] %v294
                  %v296 = vld [vmem:[%s266 + $0x28c] sm:$0xff]
                  %297 = vst [vmem:[%s267 + $0xac] sm:$0xff] %v296
                  %v298 = vld [vmem:[%s266 + $0x294] sm:$0xff]
                  %299 = vst [vmem:[%s267 + $0xb4] sm:$0xff] %v298
                  %v300 = vld [vmem:[%s266 + $0x350] sm:$0xff]
                  %301 = vst [vmem:[%s267 + $0xd0] sm:$0xff] %v300
                  %v302 = vld [vmem:[%s266 + $0x358] sm:$0xff]
                  %303 = vst [vmem:[%s267 + $0xd8] sm:$0xff] %v302
                  %v304 = vld [vmem:[%s266 + $0x360] sm:$0xff]
                  %305 = vst [vmem:[%s267 + $0xe0] sm:$0xff] %v304
                  %v306 = vld [vmem:[%s266 + $0x368] sm:$0xff]
                  %307 = vst [vmem:[%s267 + $0xe8] sm:$0xff] %v306
                  %v308 = vld [vmem:[%s266 + $0x424] sm:$0xff]
                  %309 = vst [vmem:[%s267 + $0x104] sm:$0xff] %v308
                  %v310 = vld [vmem:[%s266 + $0x42c] sm:$0xff]
                  %311 = vst [vmem:[%s267 + $0x10c] sm:$0xff] %v310
                  %v312 = vld [vmem:[%s266 + $0x434] sm:$0xff]
                  %313 = vst [vmem:[%s267 + $0x114] sm:$0xff] %v312
                  %v314 = vld [vmem:[%s266 + $0x43c] sm:$0xff]
                  %315 = vst [vmem:[%s267 + $0x11c] sm:$0xff] %v314
                  %v316 = vld [vmem:[%s266 + $0x4f8] sm:$0xff]
                  %317 = vst [vmem:[%s267 + $0x138] sm:$0xff] %v316
                  %v318 = vld [vmem:[%s266 + $0x500] sm:$0xff]
                  %319 = vst [vmem:[%s267 + $0x140] sm:$0xff] %v318
                  %v320 = vld [vmem:[%s266 + $0x508] sm:$0xff]
                  %321 = vst [vmem:[%s267 + $0x148] sm:$0xff] %v320
                  %v322 = vld [vmem:[%s266 + $0x510] sm:$0xff]
                  %323 = vst [vmem:[%s267 + $0x150] sm:$0xff] %v322
                  %v324 = vld [vmem:[%s266 + $0x5cc] sm:$0xff]
                  %325 = vst [vmem:[%s267 + $0x16c] sm:$0xff] %v324
                  %v326 = vld [vmem:[%s266 + $0x5d4] sm:$0xff]
                  %327 = vst [vmem:[%s267 + $0x174] sm:$0xff] %v326
                  %v328 = vld [vmem:[%s266 + $0x5dc] sm:$0xff]
                  %329 = vst [vmem:[%s267 + $0x17c] sm:$0xff] %v328
                  %v330 = vld [vmem:[%s266 + $0x5e4] sm:$0xff]
                  %331 = vst [vmem:[%s267 + $0x184] sm:$0xff] %v330
                  %v332 = vld [vmem:[%s266 + $0x6a0] sm:$0xff]
                  %333 = vst [vmem:[%s267 + $0x1a0] sm:$0xff] %v332
                  %v334 = vld [vmem:[%s266 + $0x6a8] sm:$0xff]
                  %335 = vst [vmem:[%s267 + $0x1a8] sm:$0xff] %v334
                  %v336 = vld [vmem:[%s266 + $0x6b0] sm:$0xff]
                  %337 = vst [vmem:[%s267 + $0x1b0] sm:$0xff] %v336
                  %v338 = vld [vmem:[%s266 + $0x6b8] sm:$0xff]
                  %339 = vst [vmem:[%s267 + $0x1b8] sm:$0xff] %v338
                  %v340 = vld [vmem:[%s266 + $0x774] sm:$0xff]
                  %341 = vst [vmem:[%s267 + $0x1d4] sm:$0xff] %v340
                  %v342 = vld [vmem:[%s266 + $0x77c] sm:$0xff]
                  %343 = vst [vmem:[%s267 + $0x1dc] sm:$0xff] %v342
                  %v344 = vld [vmem:[%s266 + $0x784] sm:$0xff]
                  %345 = vst [vmem:[%s267 + $0x1e4] sm:$0xff] %v344
                  %v346 = vld [vmem:[%s266 + $0x78c] sm:$0xff]
                  %347 = vst [vmem:[%s267 + $0x1ec] sm:$0xff] %v346
                  %v348 = vld [vmem:[%s266 + $0x848] sm:$0xff]
                  %349 = vst [vmem:[%s267 + $0x208] sm:$0xff] %v348
                  %v350 = vld [vmem:[%s266 + $0x850] sm:$0xff]
                  %351 = vst [vmem:[%s267 + $0x210] sm:$0xff] %v350
                  %v352 = vld [vmem:[%s266 + $0x858] sm:$0xff]
                  %353 = vst [vmem:[%s267 + $0x218] sm:$0xff] %v352
                  %v354 = vld [vmem:[%s266 + $0x860] sm:$0xff]
                  %355 = vst [vmem:[%s267 + $0x220] sm:$0xff] %v354
                  %v356 = vld [vmem:[%s266 + $0x91c] sm:$0xff]
                  %357 = vst [vmem:[%s267 + $0x23c] sm:$0xff] %v356
                  %v358 = vld [vmem:[%s266 + $0x924] sm:$0xff]
                  %359 = vst [vmem:[%s267 + $0x244] sm:$0xff] %v358
                  %v360 = vld [vmem:[%s266 + $0x92c] sm:$0xff]
                  %361 = vst [vmem:[%s267 + $0x24c] sm:$0xff] %v360
                  %v362 = vld [vmem:[%s266 + $0x934] sm:$0xff]
                  %363 = vst [vmem:[%s267 + $0x254] sm:$0xff] %v362
                  %v364 = vld [vmem:[%s266 + $0x9f0] sm:$0xff]
                  %365 = vst [vmem:[%s267 + $0x270] sm:$0xff] %v364
                  %v366 = vld [vmem:[%s266 + $0x9f8] sm:$0xff]
                  %367 = vst [vmem:[%s267 + $0x278] sm:$0xff] %v366
                  %v368 = vld [vmem:[%s266 + $0xa00] sm:$0xff]
                  %369 = vst [vmem:[%s267 + $0x280] sm:$0xff] %v368
                  %v370 = vld [vmem:[%s266 + $0xa08] sm:$0xff]
                  %371 = vst [vmem:[%s267 + $0x288] sm:$0xff] %v370
                  %v372 = vld [vmem:[%s266 + $0xac4] sm:$0xff]
                  %373 = vst [vmem:[%s267 + $0x2a4] sm:$0xff] %v372
                  %v374 = vld [vmem:[%s266 + $0xacc] sm:$0xff]
                  %375 = vst [vmem:[%s267 + $0x2ac] sm:$0xff] %v374
                  %v376 = vld [vmem:[%s266 + $0xad4] sm:$0xff]
                  %377 = vst [vmem:[%s267 + $0x2b4] sm:$0xff] %v376
                  %v378 = vld [vmem:[%s266 + $0xadc] sm:$0xff]
                  %379 = vst [vmem:[%s267 + $0x2bc] sm:$0xff] %v378
                  %v380 = vld [vmem:[%s266 + $0xb98] sm:$0xff]
                  %381 = vst [vmem:[%s267 + $0x2d8] sm:$0xff] %v380
                  %v382 = vld [vmem:[%s266 + $0xba0] sm:$0xff]
                  %383 = vst [vmem:[%s267 + $0x2e0] sm:$0xff] %v382
                  %v384 = vld [vmem:[%s266 + $0xba8] sm:$0xff]
                  %385 = vst [vmem:[%s267 + $0x2e8] sm:$0xff] %v384
                  %v386 = vld [vmem:[%s266 + $0xbb0] sm:$0xff]
                  %387 = vst [vmem:[%s267 + $0x2f0] sm:$0xff] %v386
                  %v388 = vld [vmem:[%s266 + $0xc6c] sm:$0xff]
                  %389 = vst [vmem:[%s267 + $0x30c] sm:$0xff] %v388
                  %v390 = vld [vmem:[%s266 + $0xc74] sm:$0xff]
                  %391 = vst [vmem:[%s267 + $0x314] sm:$0xff] %v390
                  %v392 = vld [vmem:[%s266 + $0xc7c] sm:$0xff]
                  %393 = vst [vmem:[%s267 + $0x31c] sm:$0xff] %v392
                  %v394 = vld [vmem:[%s266 + $0xc84] sm:$0xff]
                  %395 = vst [vmem:[%s267 + $0x324] sm:$0xff] %v394
                  %v396 = vld [vmem:[%s266 + $0xd40] sm:$0xff]
                  %397 = vst [vmem:[%s267 + $0x340] sm:$0xff] %v396
                  %v398 = vld [vmem:[%s266 + $0xd48] sm:$0xff]
                  %399 = vst [vmem:[%s267 + $0x348] sm:$0xff] %v398
                  %v400 = vld [vmem:[%s266 + $0xd50] sm:$0xff]
                  %401 = vst [vmem:[%s267 + $0x350] sm:$0xff] %v400
                  %v402 = vld [vmem:[%s266 + $0xd58] sm:$0xff]
                  %403 = vst [vmem:[%s267 + $0x358] sm:$0xff] %v402
                  %s404 = sadd.s32 1, %s265
                  %p405 = scmp.ge.s32.totalorder %s404, %s256
                  %s406 = scalar_select %p405, 0, %s404
                  %s407 = smul.u32 %s406, 32
                  %s408 = smul.u32 %s406, 32
                  %s409 = scalar_lea.vmem %s195, %s407
                  %s410 = scalar_lea.vmem %s185, %s408 [#allocation3]
                $region56: #{_lambda_.2} parent=50 // loop_footer
                  %s262 = sadd.s32 %s260, 1
                $region57: #{_lambda_.2} parent=50 // loop_footer_branch
                  %259 = sbr.rel target = $region53
                $region58: #{_lambda_.2} parent=50 // loop_exit
                  _
                %s411 = sshrl.u32 %s255, 2
                %s412 = sand.u32 %s255, 3
                %s413 = smul.u32 %s411, 4
                %s414 = smul.u32 128, %s413
                %s415 = sshra.s32 %s414, 4
                %s416 = scalar_lea.vmem %s195, %s415
                %s417 = smul.u32 128, %s413
                %s418 = sshra.s32 %s417, 4
                %s419 = scalar_lea.vmem %s185, %s418 [#allocation3]
                // While loop
                $region59: #{_lambda_.2} parent=50 // loop_pre_header
                  _
                $region60: #{_lambda_.2} parent=50 // loop_header
                  %s423 = sphi 0, %s425
                  %p424 = scmp.ge.s32.totalorder %s423, %s412
                  %s428 = sphi 0, %s467
                  %s429 = sphi %s416, %s470
                  %s430 = sphi %s419, %s471
                $region61: #{_lambda_.2} parent=50 // loop_header_branch
                  %427 = sbr.rel (%p424) target = $region65
                $region62: #{_lambda_.2} parent=50 // loop_body
                  %v431 = vld [vmem:[%s429] sm:$0xff]
                  %432 = vst [vmem:[%s430] sm:$0xff] %v431
                  %v433 = vld [vmem:[%s429 + $0xd4] sm:$0xff]
                  %434 = vst [vmem:[%s430 + $0x34] sm:$0xff] %v433
                  %v435 = vld [vmem:[%s429 + $0x1a8] sm:$0xff]
                  %436 = vst [vmem:[%s430 + $0x68] sm:$0xff] %v435
                  %v437 = vld [vmem:[%s429 + $0x27c] sm:$0xff]
                  %438 = vst [vmem:[%s430 + $0x9c] sm:$0xff] %v437
                  %v439 = vld [vmem:[%s429 + $0x350] sm:$0xff]
                  %440 = vst [vmem:[%s430 + $0xd0] sm:$0xff] %v439
                  %v441 = vld [vmem:[%s429 + $0x424] sm:$0xff]
                  %442 = vst [vmem:[%s430 + $0x104] sm:$0xff] %v441
                  %v443 = vld [vmem:[%s429 + $0x4f8] sm:$0xff]
                  %444 = vst [vmem:[%s430 + $0x138] sm:$0xff] %v443
                  %v445 = vld [vmem:[%s429 + $0x5cc] sm:$0xff]
                  %446 = vst [vmem:[%s430 + $0x16c] sm:$0xff] %v445
                  %v447 = vld [vmem:[%s429 + $0x6a0] sm:$0xff]
                  %448 = vst [vmem:[%s430 + $0x1a0] sm:$0xff] %v447
                  %v449 = vld [vmem:[%s429 + $0x774] sm:$0xff]
                  %450 = vst [vmem:[%s430 + $0x1d4] sm:$0xff] %v449
                  %v451 = vld [vmem:[%s429 + $0x848] sm:$0xff]
                  %452 = vst [vmem:[%s430 + $0x208] sm:$0xff] %v451
                  %v453 = vld [vmem:[%s429 + $0x91c] sm:$0xff]
                  %454 = vst [vmem:[%s430 + $0x23c] sm:$0xff] %v453
                  %v455 = vld [vmem:[%s429 + $0x9f0] sm:$0xff]
                  %456 = vst [vmem:[%s430 + $0x270] sm:$0xff] %v455
                  %v457 = vld [vmem:[%s429 + $0xac4] sm:$0xff]
                  %458 = vst [vmem:[%s430 + $0x2a4] sm:$0xff] %v457
                  %v459 = vld [vmem:[%s429 + $0xb98] sm:$0xff]
                  %460 = vst [vmem:[%s430 + $0x2d8] sm:$0xff] %v459
                  %v461 = vld [vmem:[%s429 + $0xc6c] sm:$0xff]
                  %462 = vst [vmem:[%s430 + $0x30c] sm:$0xff] %v461
                  %v463 = vld [vmem:[%s429 + $0xd40] sm:$0xff]
                  %464 = vst [vmem:[%s430 + $0x340] sm:$0xff] %v463
                  %s465 = sadd.s32 1, %s428
                  %p466 = scmp.ge.s32.totalorder %s465, %s412
                  %s467 = scalar_select %p466, 0, %s465
                  %s468 = smul.u32 %s467, 8
                  %s469 = smul.u32 %s467, 8
                  %s470 = scalar_lea.vmem %s416, %s468
                  %s471 = scalar_lea.vmem %s419, %s469 [#allocation3]
                $region63: #{_lambda_.2} parent=50 // loop_footer
                  %s425 = sadd.s32 %s423, 1
                $region64: #{_lambda_.2} parent=50 // loop_footer_branch
                  %422 = sbr.rel target = $region60
                $region65: #{_lambda_.2} parent=50 // loop_exit
                  _
              $region51: #{_lambda_.2} parent=35 // pred_fallthru
                _
              %p472 = pneg %p251
              // Predicated region
              $region66: #{_lambda_.2} parent=35 // pred_check
                _
              $region67: #{_lambda_.2} parent=35 // pred_check_branch
                %474 = sbr.rel (%p251) target = $region69
              $region68: #{_lambda_.2} parent=35 // pred_region
                %s475 = sand.u32 %s196, 7
                %s476 = ssub.s32 %s196, %s475
                %s477 = scalar_lea.vmem %s195, %s476
                %s478 = ssub.s32 %s196, %s475
                %s479 = scalar_lea.vmem %s185, %s478 [#allocation3]
                %s480 = sshrl.u32 %s196, 3
                %s481 = sshrl.u32 %s480, 2
                // While loop
                $region70: #{_lambda_.2} parent=68 // loop_pre_header
                  _
                $region71: #{_lambda_.2} parent=68 // loop_header
                  %s485 = sphi 0, %s487
                  %p486 = scmp.ge.s32.totalorder %s485, %s481
                  %s490 = sphi 0, %s631
                  %s491 = sphi %s195, %s634
                  %s492 = sphi %s185, %s635
                $region72: #{_lambda_.2} parent=68 // loop_header_branch
                  %489 = sbr.rel (%p486) target = $region76
                $region73: #{_lambda_.2} parent=68 // loop_body
                  %v493 = vld [vmem:[%s491] sm:$0xff]
                  %494 = vst [vmem:[%s492] sm:$0xff] %v493
                  %v495 = vld [vmem:[%s491 + $0x8] sm:$0xff]
                  %496 = vst [vmem:[%s492 + $0x8] sm:$0xff] %v495
                  %v497 = vld [vmem:[%s491 + $0x10] sm:$0xff]
                  %498 = vst [vmem:[%s492 + $0x10] sm:$0xff] %v497
                  %v499 = vld [vmem:[%s491 + $0x18] sm:$0xff]
                  %500 = vst [vmem:[%s492 + $0x18] sm:$0xff] %v499
                  %v501 = vld [vmem:[%s491 + $0xd4] sm:$0xff]
                  %502 = vst [vmem:[%s492 + $0x34] sm:$0xff] %v501
                  %v503 = vld [vmem:[%s491 + $0xdc] sm:$0xff]
                  %504 = vst [vmem:[%s492 + $0x3c] sm:$0xff] %v503
                  %v505 = vld [vmem:[%s491 + $0xe4] sm:$0xff]
                  %506 = vst [vmem:[%s492 + $0x44] sm:$0xff] %v505
                  %v507 = vld [vmem:[%s491 + $0xec] sm:$0xff]
                  %508 = vst [vmem:[%s492 + $0x4c] sm:$0xff] %v507
                  %v509 = vld [vmem:[%s491 + $0x1a8] sm:$0xff]
                  %510 = vst [vmem:[%s492 + $0x68] sm:$0xff] %v509
                  %v511 = vld [vmem:[%s491 + $0x1b0] sm:$0xff]
                  %512 = vst [vmem:[%s492 + $0x70] sm:$0xff] %v511
                  %v513 = vld [vmem:[%s491 + $0x1b8] sm:$0xff]
                  %514 = vst [vmem:[%s492 + $0x78] sm:$0xff] %v513
                  %v515 = vld [vmem:[%s491 + $0x1c0] sm:$0xff]
                  %516 = vst [vmem:[%s492 + $0x80] sm:$0xff] %v515
                  %v517 = vld [vmem:[%s491 + $0x27c] sm:$0xff]
                  %518 = vst [vmem:[%s492 + $0x9c] sm:$0xff] %v517
                  %v519 = vld [vmem:[%s491 + $0x284] sm:$0xff]
                  %520 = vst [vmem:[%s492 + $0xa4] sm:$0xff] %v519
                  %v521 = vld [vmem:[%s491 + $0x28c] sm:$0xff]
                  %522 = vst [vmem:[%s492 + $0xac] sm:$0xff] %v521
                  %v523 = vld [vmem:[%s491 + $0x294] sm:$0xff]
                  %524 = vst [vmem:[%s492 + $0xb4] sm:$0xff] %v523
                  %v525 = vld [vmem:[%s491 + $0x350] sm:$0xff]
                  %526 = vst [vmem:[%s492 + $0xd0] sm:$0xff] %v525
                  %v527 = vld [vmem:[%s491 + $0x358] sm:$0xff]
                  %528 = vst [vmem:[%s492 + $0xd8] sm:$0xff] %v527
                  %v529 = vld [vmem:[%s491 + $0x360] sm:$0xff]
                  %530 = vst [vmem:[%s492 + $0xe0] sm:$0xff] %v529
                  %v531 = vld [vmem:[%s491 + $0x368] sm:$0xff]
                  %532 = vst [vmem:[%s492 + $0xe8] sm:$0xff] %v531
                  %v533 = vld [vmem:[%s491 + $0x424] sm:$0xff]
                  %534 = vst [vmem:[%s492 + $0x104] sm:$0xff] %v533
                  %v535 = vld [vmem:[%s491 + $0x42c] sm:$0xff]
                  %536 = vst [vmem:[%s492 + $0x10c] sm:$0xff] %v535
                  %v537 = vld [vmem:[%s491 + $0x434] sm:$0xff]
                  %538 = vst [vmem:[%s492 + $0x114] sm:$0xff] %v537
                  %v539 = vld [vmem:[%s491 + $0x43c] sm:$0xff]
                  %540 = vst [vmem:[%s492 + $0x11c] sm:$0xff] %v539
                  %v541 = vld [vmem:[%s491 + $0x4f8] sm:$0xff]
                  %542 = vst [vmem:[%s492 + $0x138] sm:$0xff] %v541
                  %v543 = vld [vmem:[%s491 + $0x500] sm:$0xff]
                  %544 = vst [vmem:[%s492 + $0x140] sm:$0xff] %v543
                  %v545 = vld [vmem:[%s491 + $0x508] sm:$0xff]
                  %546 = vst [vmem:[%s492 + $0x148] sm:$0xff] %v545
                  %v547 = vld [vmem:[%s491 + $0x510] sm:$0xff]
                  %548 = vst [vmem:[%s492 + $0x150] sm:$0xff] %v547
                  %v549 = vld [vmem:[%s491 + $0x5cc] sm:$0xff]
                  %550 = vst [vmem:[%s492 + $0x16c] sm:$0xff] %v549
                  %v551 = vld [vmem:[%s491 + $0x5d4] sm:$0xff]
                  %552 = vst [vmem:[%s492 + $0x174] sm:$0xff] %v551
                  %v553 = vld [vmem:[%s491 + $0x5dc] sm:$0xff]
                  %554 = vst [vmem:[%s492 + $0x17c] sm:$0xff] %v553
                  %v555 = vld [vmem:[%s491 + $0x5e4] sm:$0xff]
                  %556 = vst [vmem:[%s492 + $0x184] sm:$0xff] %v555
                  %v557 = vld [vmem:[%s491 + $0x6a0] sm:$0xff]
                  %558 = vst [vmem:[%s492 + $0x1a0] sm:$0xff] %v557
                  %v559 = vld [vmem:[%s491 + $0x6a8] sm:$0xff]
                  %560 = vst [vmem:[%s492 + $0x1a8] sm:$0xff] %v559
                  %v561 = vld [vmem:[%s491 + $0x6b0] sm:$0xff]
                  %562 = vst [vmem:[%s492 + $0x1b0] sm:$0xff] %v561
                  %v563 = vld [vmem:[%s491 + $0x6b8] sm:$0xff]
                  %564 = vst [vmem:[%s492 + $0x1b8] sm:$0xff] %v563
                  %v565 = vld [vmem:[%s491 + $0x774] sm:$0xff]
                  %566 = vst [vmem:[%s492 + $0x1d4] sm:$0xff] %v565
                  %v567 = vld [vmem:[%s491 + $0x77c] sm:$0xff]
                  %568 = vst [vmem:[%s492 + $0x1dc] sm:$0xff] %v567
                  %v569 = vld [vmem:[%s491 + $0x784] sm:$0xff]
                  %570 = vst [vmem:[%s492 + $0x1e4] sm:$0xff] %v569
                  %v571 = vld [vmem:[%s491 + $0x78c] sm:$0xff]
                  %572 = vst [vmem:[%s492 + $0x1ec] sm:$0xff] %v571
                  %v573 = vld [vmem:[%s491 + $0x848] sm:$0xff]
                  %574 = vst [vmem:[%s492 + $0x208] sm:$0xff] %v573
                  %v575 = vld [vmem:[%s491 + $0x850] sm:$0xff]
                  %576 = vst [vmem:[%s492 + $0x210] sm:$0xff] %v575
                  %v577 = vld [vmem:[%s491 + $0x858] sm:$0xff]
                  %578 = vst [vmem:[%s492 + $0x218] sm:$0xff] %v577
                  %v579 = vld [vmem:[%s491 + $0x860] sm:$0xff]
                  %580 = vst [vmem:[%s492 + $0x220] sm:$0xff] %v579
                  %v581 = vld [vmem:[%s491 + $0x91c] sm:$0xff]
                  %582 = vst [vmem:[%s492 + $0x23c] sm:$0xff] %v581
                  %v583 = vld [vmem:[%s491 + $0x924] sm:$0xff]
                  %584 = vst [vmem:[%s492 + $0x244] sm:$0xff] %v583
                  %v585 = vld [vmem:[%s491 + $0x92c] sm:$0xff]
                  %586 = vst [vmem:[%s492 + $0x24c] sm:$0xff] %v585
                  %v587 = vld [vmem:[%s491 + $0x934] sm:$0xff]
                  %588 = vst [vmem:[%s492 + $0x254] sm:$0xff] %v587
                  %v589 = vld [vmem:[%s491 + $0x9f0] sm:$0xff]
                  %590 = vst [vmem:[%s492 + $0x270] sm:$0xff] %v589
                  %v591 = vld [vmem:[%s491 + $0x9f8] sm:$0xff]
                  %592 = vst [vmem:[%s492 + $0x278] sm:$0xff] %v591
                  %v593 = vld [vmem:[%s491 + $0xa00] sm:$0xff]
                  %594 = vst [vmem:[%s492 + $0x280] sm:$0xff] %v593
                  %v595 = vld [vmem:[%s491 + $0xa08] sm:$0xff]
                  %596 = vst [vmem:[%s492 + $0x288] sm:$0xff] %v595
                  %v597 = vld [vmem:[%s491 + $0xac4] sm:$0xff]
                  %598 = vst [vmem:[%s492 + $0x2a4] sm:$0xff] %v597
                  %v599 = vld [vmem:[%s491 + $0xacc] sm:$0xff]
                  %600 = vst [vmem:[%s492 + $0x2ac] sm:$0xff] %v599
                  %v601 = vld [vmem:[%s491 + $0xad4] sm:$0xff]
                  %602 = vst [vmem:[%s492 + $0x2b4] sm:$0xff] %v601
                  %v603 = vld [vmem:[%s491 + $0xadc] sm:$0xff]
                  %604 = vst [vmem:[%s492 + $0x2bc] sm:$0xff] %v603
                  %v605 = vld [vmem:[%s491 + $0xb98] sm:$0xff]
                  %606 = vst [vmem:[%s492 + $0x2d8] sm:$0xff] %v605
                  %v607 = vld [vmem:[%s491 + $0xba0] sm:$0xff]
                  %608 = vst [vmem:[%s492 + $0x2e0] sm:$0xff] %v607
                  %v609 = vld [vmem:[%s491 + $0xba8] sm:$0xff]
                  %610 = vst [vmem:[%s492 + $0x2e8] sm:$0xff] %v609
                  %v611 = vld [vmem:[%s491 + $0xbb0] sm:$0xff]
                  %612 = vst [vmem:[%s492 + $0x2f0] sm:$0xff] %v611
                  %v613 = vld [vmem:[%s491 + $0xc6c] sm:$0xff]
                  %614 = vst [vmem:[%s492 + $0x30c] sm:$0xff] %v613
                  %v615 = vld [vmem:[%s491 + $0xc74] sm:$0xff]
                  %616 = vst [vmem:[%s492 + $0x314] sm:$0xff] %v615
                  %v617 = vld [vmem:[%s491 + $0xc7c] sm:$0xff]
                  %618 = vst [vmem:[%s492 + $0x31c] sm:$0xff] %v617
                  %v619 = vld [vmem:[%s491 + $0xc84] sm:$0xff]
                  %620 = vst [vmem:[%s492 + $0x324] sm:$0xff] %v619
                  %v621 = vld [vmem:[%s491 + $0xd40] sm:$0xff]
                  %622 = vst [vmem:[%s492 + $0x340] sm:$0xff] %v621
                  %v623 = vld [vmem:[%s491 + $0xd48] sm:$0xff]
                  %624 = vst [vmem:[%s492 + $0x348] sm:$0xff] %v623
                  %v625 = vld [vmem:[%s491 + $0xd50] sm:$0xff]
                  %626 = vst [vmem:[%s492 + $0x350] sm:$0xff] %v625
                  %v627 = vld [vmem:[%s491 + $0xd58] sm:$0xff]
                  %628 = vst [vmem:[%s492 + $0x358] sm:$0xff] %v627
                  %s629 = sadd.s32 1, %s490
                  %p630 = scmp.ge.s32.totalorder %s629, %s481
                  %s631 = scalar_select %p630, 0, %s629
                  %s632 = smul.u32 %s631, 32
                  %s633 = smul.u32 %s631, 32
                  %s634 = scalar_lea.vmem %s195, %s632
                  %s635 = scalar_lea.vmem %s185, %s633 [#allocation3]
                $region74: #{_lambda_.2} parent=68 // loop_footer
                  %s487 = sadd.s32 %s485, 1
                $region75: #{_lambda_.2} parent=68 // loop_footer_branch
                  %484 = sbr.rel target = $region71
                $region76: #{_lambda_.2} parent=68 // loop_exit
                  _
                %s636 = sshrl.u32 %s480, 2
                %s637 = sand.u32 %s480, 3
                %s638 = smul.u32 %s636, 4
                %s639 = smul.u32 128, %s638
                %s640 = sshra.s32 %s639, 4
                %s641 = scalar_lea.vmem %s195, %s640
                %s642 = smul.u32 128, %s638
                %s643 = sshra.s32 %s642, 4
                %s644 = scalar_lea.vmem %s185, %s643 [#allocation3]
                // While loop
                $region77: #{_lambda_.2} parent=68 // loop_pre_header
                  _
                $region78: #{_lambda_.2} parent=68 // loop_header
                  %s648 = sphi 0, %s650
                  %p649 = scmp.ge.s32.totalorder %s648, %s637
                  %s653 = sphi 0, %s692
                  %s654 = sphi %s641, %s695
                  %s655 = sphi %s644, %s696
                $region79: #{_lambda_.2} parent=68 // loop_header_branch
                  %652 = sbr.rel (%p649) target = $region83
                $region80: #{_lambda_.2} parent=68 // loop_body
                  %v656 = vld [vmem:[%s654] sm:$0xff]
                  %657 = vst [vmem:[%s655] sm:$0xff] %v656
                  %v658 = vld [vmem:[%s654 + $0xd4] sm:$0xff]
                  %659 = vst [vmem:[%s655 + $0x34] sm:$0xff] %v658
                  %v660 = vld [vmem:[%s654 + $0x1a8] sm:$0xff]
                  %661 = vst [vmem:[%s655 + $0x68] sm:$0xff] %v660
                  %v662 = vld [vmem:[%s654 + $0x27c] sm:$0xff]
                  %663 = vst [vmem:[%s655 + $0x9c] sm:$0xff] %v662
                  %v664 = vld [vmem:[%s654 + $0x350] sm:$0xff]
                  %665 = vst [vmem:[%s655 + $0xd0] sm:$0xff] %v664
                  %v666 = vld [vmem:[%s654 + $0x424] sm:$0xff]
                  %667 = vst [vmem:[%s655 + $0x104] sm:$0xff] %v666
                  %v668 = vld [vmem:[%s654 + $0x4f8] sm:$0xff]
                  %669 = vst [vmem:[%s655 + $0x138] sm:$0xff] %v668
                  %v670 = vld [vmem:[%s654 + $0x5cc] sm:$0xff]
                  %671 = vst [vmem:[%s655 + $0x16c] sm:$0xff] %v670
                  %v672 = vld [vmem:[%s654 + $0x6a0] sm:$0xff]
                  %673 = vst [vmem:[%s655 + $0x1a0] sm:$0xff] %v672
                  %v674 = vld [vmem:[%s654 + $0x774] sm:$0xff]
                  %675 = vst [vmem:[%s655 + $0x1d4] sm:$0xff] %v674
                  %v676 = vld [vmem:[%s654 + $0x848] sm:$0xff]
                  %677 = vst [vmem:[%s655 + $0x208] sm:$0xff] %v676
                  %v678 = vld [vmem:[%s654 + $0x91c] sm:$0xff]
                  %679 = vst [vmem:[%s655 + $0x23c] sm:$0xff] %v678
                  %v680 = vld [vmem:[%s654 + $0x9f0] sm:$0xff]
                  %681 = vst [vmem:[%s655 + $0x270] sm:$0xff] %v680
                  %v682 = vld [vmem:[%s654 + $0xac4] sm:$0xff]
                  %683 = vst [vmem:[%s655 + $0x2a4] sm:$0xff] %v682
                  %v684 = vld [vmem:[%s654 + $0xb98] sm:$0xff]
                  %685 = vst [vmem:[%s655 + $0x2d8] sm:$0xff] %v684
                  %v686 = vld [vmem:[%s654 + $0xc6c] sm:$0xff]
                  %687 = vst [vmem:[%s655 + $0x30c] sm:$0xff] %v686
                  %v688 = vld [vmem:[%s654 + $0xd40] sm:$0xff]
                  %689 = vst [vmem:[%s655 + $0x340] sm:$0xff] %v688
                  %s690 = sadd.s32 1, %s653
                  %p691 = scmp.ge.s32.totalorder %s690, %s637
                  %s692 = scalar_select %p691, 0, %s690
                  %s693 = smul.u32 %s692, 8
                  %s694 = smul.u32 %s692, 8
                  %s695 = scalar_lea.vmem %s641, %s693
                  %s696 = scalar_lea.vmem %s644, %s694 [#allocation3]
                $region81: #{_lambda_.2} parent=68 // loop_footer
                  %s650 = sadd.s32 %s648, 1
                $region82: #{_lambda_.2} parent=68 // loop_footer_branch
                  %647 = sbr.rel target = $region78
                $region83: #{_lambda_.2} parent=68 // loop_exit
                  _
                %s697 = sshllo.u32 0, %s475
                loop: start=0, step=1, limit=1
                $region84: #{_lambda_.2} parent=68 // loop_pre_header
                  _
                $region85: #{_lambda_.2} parent=68 // loop_header
                  %s699 = sphi 0, %s703
                  %p700 = scmp.ge.s32.totalorder %s699, 1
                  %s704 = sphi %s477, %s477
                  %s705 = sphi %s479, %s479
                $region86: #{_lambda_.2} parent=68 // loop_header_branch
                  %702 = sbr.rel (%p700) target = $region90
                $region87: #{_lambda_.2} parent=68 // loop_body
                  %v706 = vld [vmem:[%s704] sm:%s697]
                  %707 = vst [vmem:[%s705] sm:%s697] %v706
                  %v708 = vld [vmem:[%s704 + $0xd4] sm:%s697]
                  %709 = vst [vmem:[%s705 + $0x34] sm:%s697] %v708
                  %v710 = vld [vmem:[%s704 + $0x1a8] sm:%s697]
                  %711 = vst [vmem:[%s705 + $0x68] sm:%s697] %v710
                  %v712 = vld [vmem:[%s704 + $0x27c] sm:%s697]
                  %713 = vst [vmem:[%s705 + $0x9c] sm:%s697] %v712
                  %v714 = vld [vmem:[%s704 + $0x350] sm:%s697]
                  %715 = vst [vmem:[%s705 + $0xd0] sm:%s697] %v714
                  %v716 = vld [vmem:[%s704 + $0x424] sm:%s697]
                  %717 = vst [vmem:[%s705 + $0x104] sm:%s697] %v716
                  %v718 = vld [vmem:[%s704 + $0x4f8] sm:%s697]
                  %719 = vst [vmem:[%s705 + $0x138] sm:%s697] %v718
                  %v720 = vld [vmem:[%s704 + $0x5cc] sm:%s697]
                  %721 = vst [vmem:[%s705 + $0x16c] sm:%s697] %v720
                  %v722 = vld [vmem:[%s704 + $0x6a0] sm:%s697]
                  %723 = vst [vmem:[%s705 + $0x1a0] sm:%s697] %v722
                  %v724 = vld [vmem:[%s704 + $0x774] sm:%s697]
                  %725 = vst [vmem:[%s705 + $0x1d4] sm:%s697] %v724
                  %v726 = vld [vmem:[%s704 + $0x848] sm:%s697]
                  %727 = vst [vmem:[%s705 + $0x208] sm:%s697] %v726
                  %v728 = vld [vmem:[%s704 + $0x91c] sm:%s697]
                  %729 = vst [vmem:[%s705 + $0x23c] sm:%s697] %v728
                  %v730 = vld [vmem:[%s704 + $0x9f0] sm:%s697]
                  %731 = vst [vmem:[%s705 + $0x270] sm:%s697] %v730
                  %v732 = vld [vmem:[%s704 + $0xac4] sm:%s697]
                  %733 = vst [vmem:[%s705 + $0x2a4] sm:%s697] %v732
                  %v734 = vld [vmem:[%s704 + $0xb98] sm:%s697]
                  %735 = vst [vmem:[%s705 + $0x2d8] sm:%s697] %v734
                  %v736 = vld [vmem:[%s704 + $0xc6c] sm:%s697]
                  %737 = vst [vmem:[%s705 + $0x30c] sm:%s697] %v736
                  %v738 = vld [vmem:[%s704 + $0xd40] sm:%s697]
                  %739 = vst [vmem:[%s705 + $0x340] sm:%s697] %v738
                $region88: #{_lambda_.2} parent=68 // loop_footer
                  %s703 = sadd.s32 1, %s699
                $region89: #{_lambda_.2} parent=68 // loop_footer_branch
                  %698 = sbr.rel target = $region85
                $region90: #{_lambda_.2} parent=68 // loop_exit
                  _
              $region69: #{_lambda_.2} parent=35 // pred_fallthru
                _
            $region36: #{_lambda_.2} parent=31 // pred_fallthru
              _
            // Predicated region
            $region37: #{_lambda_.2} parent=31 // pred_check
              %p204 = pneg %p200
            $region38: #{_lambda_.2} parent=31 // pred_check_branch
              %206 = sbr.rel (%p204) target = $region40
            $region39: #{_lambda_.2} parent=31 // pred_region
              %s207 = sshllo.u32 0, %s196
              loop: start=0, step=1, limit=1
              $region41: #{_lambda_.2} parent=39 // loop_pre_header
                _
              $region42: #{_lambda_.2} parent=39 // loop_header
                %s209 = sphi 0, %s213
                %p210 = scmp.ge.s32.totalorder %s209, 1
                %s214 = sphi %s195, %s195
                %s215 = sphi %s185, %s185
              $region43: #{_lambda_.2} parent=39 // loop_header_branch
                %212 = sbr.rel (%p210) target = $region47
              $region44: #{_lambda_.2} parent=39 // loop_body
                %v216 = vld [vmem:[%s214] sm:%s207]
                %217 = vst [vmem:[%s215] sm:%s207] %v216
                %v218 = vld [vmem:[%s214 + $0xd4] sm:%s207]
                %219 = vst [vmem:[%s215 + $0x34] sm:%s207] %v218
                %v220 = vld [vmem:[%s214 + $0x1a8] sm:%s207]
                %221 = vst [vmem:[%s215 + $0x68] sm:%s207] %v220
                %v222 = vld [vmem:[%s214 + $0x27c] sm:%s207]
                %223 = vst [vmem:[%s215 + $0x9c] sm:%s207] %v222
                %v224 = vld [vmem:[%s214 + $0x350] sm:%s207]
                %225 = vst [vmem:[%s215 + $0xd0] sm:%s207] %v224
                %v226 = vld [vmem:[%s214 + $0x424] sm:%s207]
                %227 = vst [vmem:[%s215 + $0x104] sm:%s207] %v226
                %v228 = vld [vmem:[%s214 + $0x4f8] sm:%s207]
                %229 = vst [vmem:[%s215 + $0x138] sm:%s207] %v228
                %v230 = vld [vmem:[%s214 + $0x5cc] sm:%s207]
                %231 = vst [vmem:[%s215 + $0x16c] sm:%s207] %v230
                %v232 = vld [vmem:[%s214 + $0x6a0] sm:%s207]
                %233 = vst [vmem:[%s215 + $0x1a0] sm:%s207] %v232
                %v234 = vld [vmem:[%s214 + $0x774] sm:%s207]
                %235 = vst [vmem:[%s215 + $0x1d4] sm:%s207] %v234
                %v236 = vld [vmem:[%s214 + $0x848] sm:%s207]
                %237 = vst [vmem:[%s215 + $0x208] sm:%s207] %v236
                %v238 = vld [vmem:[%s214 + $0x91c] sm:%s207]
                %239 = vst [vmem:[%s215 + $0x23c] sm:%s207] %v238
                %v240 = vld [vmem:[%s214 + $0x9f0] sm:%s207]
                %241 = vst [vmem:[%s215 + $0x270] sm:%s207] %v240
                %v242 = vld [vmem:[%s214 + $0xac4] sm:%s207]
                %243 = vst [vmem:[%s215 + $0x2a4] sm:%s207] %v242
                %v244 = vld [vmem:[%s214 + $0xb98] sm:%s207]
                %245 = vst [vmem:[%s215 + $0x2d8] sm:%s207] %v244
                %v246 = vld [vmem:[%s214 + $0xc6c] sm:%s207]
                %247 = vst [vmem:[%s215 + $0x30c] sm:%s207] %v246
                %v248 = vld [vmem:[%s214 + $0xd40] sm:%s207]
                %249 = vst [vmem:[%s215 + $0x340] sm:%s207] %v248
              $region45: #{_lambda_.2} parent=39 // loop_footer
                %s213 = sadd.s32 1, %s209
              $region46: #{_lambda_.2} parent=39 // loop_footer_branch
                %208 = sbr.rel target = $region42
              $region47: #{_lambda_.2} parent=39 // loop_exit
                _
            $region40: #{_lambda_.2} parent=31 // pred_fallthru
              _
          $region32: #{_lambda_.2} parent=27 // pred_fallthru
            _
          %740 = vnop
        $region28: #{_lambda_.2} parent=23 // pred_fallthru
          _
        // Predicated region
        $region91: #{_lambda_.2} parent=23 // pred_check
          %p741 = pneg %p78
        $region92: #{_lambda_.2} parent=23 // pred_check_branch
          %743 = sbr.rel (%p741) target = $region94
        $region93: #{_lambda_.2} parent=23 // pred_region
          %s744 = sand.u32 %s68, 1
          %s745 = sand.u32 %s68, 1
          %s746 = smul.addr %s745, 68
          %s747 = scalar_lea.vmem [#allocation4], %s746
          %s748 = sadd.s32 %s20, 1
          %s749 = smul.u32 %s748, 13
          %s750 = smul.addr %s19, 901
          %s751 = sadd.s32 %s749, %s750
          %s752 = smul.addr %s751, 4
          %s753 = scalar_lea.vmem %s1, %s752
          // Predicated region
          $region95: #{_lambda_.2} parent=93 // pred_check
            _
          $region96: #{_lambda_.2} parent=93 // pred_check_branch
            %755 = sbr.rel (0) target = $region98
          $region97: #{_lambda_.2} parent=93 // pred_region
            // Predicated region
            $region99: #{_lambda_.2} parent=97 // pred_check
              _
            $region100: #{_lambda_.2} parent=97 // pred_check_branch
              %757 = sbr.rel target = $region102
            $region101: #{_lambda_.2} parent=97 // pred_region
              // Predicated region
              $region114: #{_lambda_.2} parent=101 // pred_check
                _
              $region115: #{_lambda_.2} parent=101 // pred_check_branch
                %804 = sbr.rel (0) target = $region117
              $region116: #{_lambda_.2} parent=101 // pred_region
                loop: start=0, step=1, limit=1
                $region118: #{_lambda_.2} parent=116 // loop_pre_header
                  _
                $region119: #{_lambda_.2} parent=116 // loop_header
                  %s806 = sphi 0, %s810
                  %p807 = scmp.ge.s32.totalorder %s806, 1
                  %s811 = sphi %s753, %s753
                  %s812 = sphi %s747, %s747
                $region120: #{_lambda_.2} parent=116 // loop_header_branch
                  %809 = sbr.rel (%p807) target = $region124
                $region121: #{_lambda_.2} parent=116 // loop_body
                  _
                $region122: #{_lambda_.2} parent=116 // loop_footer
                  %s810 = sadd.s32 1, %s806
                $region123: #{_lambda_.2} parent=116 // loop_footer_branch
                  %805 = sbr.rel target = $region119
                $region124: #{_lambda_.2} parent=116 // loop_exit
                  _
                loop: start=0, step=1, limit=1
                $region125: #{_lambda_.2} parent=116 // loop_pre_header
                  _
                $region126: #{_lambda_.2} parent=116 // loop_header
                  %s815 = sphi 0, %s819
                  %p816 = scmp.ge.s32.totalorder %s815, 1
                  %s820 = sphi %s753, %s753
                  %s821 = sphi %s747, %s747
                $region127: #{_lambda_.2} parent=116 // loop_header_branch
                  %818 = sbr.rel (%p816) target = $region131
                $region128: #{_lambda_.2} parent=116 // loop_body
                  %v822 = vld [vmem:[%s820] sm:$0xf]
                  %823 = vst [vmem:[%s821] sm:$0xf] %v822
                  %v824 = vld [vmem:[%s820 + $0xd4] sm:$0xf]
                  %825 = vst [vmem:[%s821 + $0x4] sm:$0xf] %v824
                  %v826 = vld [vmem:[%s820 + $0x1a8] sm:$0xf]
                  %827 = vst [vmem:[%s821 + $0x8] sm:$0xf] %v826
                  %v828 = vld [vmem:[%s820 + $0x27c] sm:$0xf]
                  %829 = vst [vmem:[%s821 + $0xc] sm:$0xf] %v828
                  %v830 = vld [vmem:[%s820 + $0x350] sm:$0xf]
                  %831 = vst [vmem:[%s821 + $0x10] sm:$0xf] %v830
                  %v832 = vld [vmem:[%s820 + $0x424] sm:$0xf]
                  %833 = vst [vmem:[%s821 + $0x14] sm:$0xf] %v832
                  %v834 = vld [vmem:[%s820 + $0x4f8] sm:$0xf]
                  %835 = vst [vmem:[%s821 + $0x18] sm:$0xf] %v834
                  %v836 = vld [vmem:[%s820 + $0x5cc] sm:$0xf]
                  %837 = vst [vmem:[%s821 + $0x1c] sm:$0xf] %v836
                  %v838 = vld [vmem:[%s820 + $0x6a0] sm:$0xf]
                  %839 = vst [vmem:[%s821 + $0x20] sm:$0xf] %v838
                  %v840 = vld [vmem:[%s820 + $0x774] sm:$0xf]
                  %841 = vst [vmem:[%s821 + $0x24] sm:$0xf] %v840
                  %v842 = vld [vmem:[%s820 + $0x848] sm:$0xf]
                  %843 = vst [vmem:[%s821 + $0x28] sm:$0xf] %v842
                  %v844 = vld [vmem:[%s820 + $0x91c] sm:$0xf]
                  %845 = vst [vmem:[%s821 + $0x2c] sm:$0xf] %v844
                  %v846 = vld [vmem:[%s820 + $0x9f0] sm:$0xf]
                  %847 = vst [vmem:[%s821 + $0x30] sm:$0xf] %v846
                  %v848 = vld [vmem:[%s820 + $0xac4] sm:$0xf]
                  %849 = vst [vmem:[%s821 + $0x34] sm:$0xf] %v848
                  %v850 = vld [vmem:[%s820 + $0xb98] sm:$0xf]
                  %851 = vst [vmem:[%s821 + $0x38] sm:$0xf] %v850
                  %v852 = vld [vmem:[%s820 + $0xc6c] sm:$0xf]
                  %853 = vst [vmem:[%s821 + $0x3c] sm:$0xf] %v852
                  %v854 = vld [vmem:[%s820 + $0xd40] sm:$0xf]
                  %855 = vst [vmem:[%s821 + $0x40] sm:$0xf] %v854
                $region129: #{_lambda_.2} parent=116 // loop_footer
                  %s819 = sadd.s32 1, %s815
                $region130: #{_lambda_.2} parent=116 // loop_footer_branch
                  %814 = sbr.rel target = $region126
                $region131: #{_lambda_.2} parent=116 // loop_exit
                  _
              $region117: #{_lambda_.2} parent=101 // pred_fallthru
                _
            $region102: #{_lambda_.2} parent=97 // pred_fallthru
              _
            // Predicated region
            $region103: #{_lambda_.2} parent=97 // pred_check
              _
            $region104: #{_lambda_.2} parent=97 // pred_check_branch
              %759 = sbr.rel (0) target = $region106
            $region105: #{_lambda_.2} parent=97 // pred_region
              loop: start=0, step=1, limit=1
              $region107: #{_lambda_.2} parent=105 // loop_pre_header
                _
              $region108: #{_lambda_.2} parent=105 // loop_header
                %s762 = sphi 0, %s766
                %p763 = scmp.ge.s32.totalorder %s762, 1
                %s767 = sphi %s753, %s753
                %s768 = sphi %s747, %s747
              $region109: #{_lambda_.2} parent=105 // loop_header_branch
                %765 = sbr.rel (%p763) target = $region113
              $region110: #{_lambda_.2} parent=105 // loop_body
                %v769 = vld [vmem:[%s767] sm:$0xf]
                %770 = vst [vmem:[%s768] sm:$0xf] %v769
                %v771 = vld [vmem:[%s767 + $0xd4] sm:$0xf]
                %772 = vst [vmem:[%s768 + $0x4] sm:$0xf] %v771
                %v773 = vld [vmem:[%s767 + $0x1a8] sm:$0xf]
                %774 = vst [vmem:[%s768 + $0x8] sm:$0xf] %v773
                %v775 = vld [vmem:[%s767 + $0x27c] sm:$0xf]
                %776 = vst [vmem:[%s768 + $0xc] sm:$0xf] %v775
                %v777 = vld [vmem:[%s767 + $0x350] sm:$0xf]
                %778 = vst [vmem:[%s768 + $0x10] sm:$0xf] %v777
                %v779 = vld [vmem:[%s767 + $0x424] sm:$0xf]
                %780 = vst [vmem:[%s768 + $0x14] sm:$0xf] %v779
                %v781 = vld [vmem:[%s767 + $0x4f8] sm:$0xf]
                %782 = vst [vmem:[%s768 + $0x18] sm:$0xf] %v781
                %v783 = vld [vmem:[%s767 + $0x5cc] sm:$0xf]
                %784 = vst [vmem:[%s768 + $0x1c] sm:$0xf] %v783
                %v785 = vld [vmem:[%s767 + $0x6a0] sm:$0xf]
                %786 = vst [vmem:[%s768 + $0x20] sm:$0xf] %v785
                %v787 = vld [vmem:[%s767 + $0x774] sm:$0xf]
                %788 = vst [vmem:[%s768 + $0x24] sm:$0xf] %v787
                %v789 = vld [vmem:[%s767 + $0x848] sm:$0xf]
                %790 = vst [vmem:[%s768 + $0x28] sm:$0xf] %v789
                %v791 = vld [vmem:[%s767 + $0x91c] sm:$0xf]
                %792 = vst [vmem:[%s768 + $0x2c] sm:$0xf] %v791
                %v793 = vld [vmem:[%s767 + $0x9f0] sm:$0xf]
                %794 = vst [vmem:[%s768 + $0x30] sm:$0xf] %v793
                %v795 = vld [vmem:[%s767 + $0xac4] sm:$0xf]
                %796 = vst [vmem:[%s768 + $0x34] sm:$0xf] %v795
                %v797 = vld [vmem:[%s767 + $0xb98] sm:$0xf]
                %798 = vst [vmem:[%s768 + $0x38] sm:$0xf] %v797
                %v799 = vld [vmem:[%s767 + $0xc6c] sm:$0xf]
                %800 = vst [vmem:[%s768 + $0x3c] sm:$0xf] %v799
                %v801 = vld [vmem:[%s767 + $0xd40] sm:$0xf]
                %802 = vst [vmem:[%s768 + $0x40] sm:$0xf] %v801
              $region111: #{_lambda_.2} parent=105 // loop_footer
                %s766 = sadd.s32 1, %s762
              $region112: #{_lambda_.2} parent=105 // loop_footer_branch
                %761 = sbr.rel target = $region108
              $region113: #{_lambda_.2} parent=105 // loop_exit
                _
            $region106: #{_lambda_.2} parent=97 // pred_fallthru
              _
          $region98: #{_lambda_.2} parent=93 // pred_fallthru
            _
          %856 = vnop
        $region94: #{_lambda_.2} parent=23 // pred_fallthru
          _
      $region24: #{_lambda_.2} parent=5 // pred_fallthru
        _
      %p857 = scmp.le.s32.totalorder 1, %s12
      %p858 = scmp.lt.s32.totalorder %s12, 9
      %p859 = pnand %p857, %p858
      %p860 = pneg %p859
      // Predicated region
      $region132: #{_lambda_.2} parent=5 // pred_check
        _
      $region133: #{_lambda_.2} parent=5 // pred_check_branch
        %862 = sbr.rel (%p859) target = $region135
      $region134: #{_lambda_.2} parent=5 // pred_region
        %s863 = ssub.s32 %s12, 1
        %s864 = sand.u32 %s39, 1
        %s865 = sand.u32 %s39, 1
        %s866 = smul.addr %s865, 884
        %s867 = scalar_lea.vmem [#allocation3], %s866
        // Predicated region
        $region136: #{_lambda_.2} parent=134 // pred_check
          %p868 = pneg %p52
        $region137: #{_lambda_.2} parent=134 // pred_check_branch
          %870 = sbr.rel (%p868) target = $region139
        $region138: #{_lambda_.2} parent=134 // pred_region
          _
        $region139: #{_lambda_.2} parent=134 // pred_fallthru
          _
        %s871 = sand.u32 %s71, 1
        %s872 = sand.u32 %s71, 1
        %s873 = smul.addr %s872, 68
        %s874 = scalar_lea.vmem [#allocation4], %s873
        // Predicated region
        $region140: #{_lambda_.2} parent=134 // pred_check
          %p875 = pneg %p84
        $region141: #{_lambda_.2} parent=134 // pred_check_branch
          %877 = sbr.rel (%p875) target = $region143
        $region142: #{_lambda_.2} parent=134 // pred_region
          _
        $region143: #{_lambda_.2} parent=134 // pred_fallthru
          _
        %s878 = sand.u32 %s39, 1
        %s879 = sand.u32 %s39, 1
        %s880 = smul.addr %s879, 884
        %s881 = scalar_lea.vmem [#allocation3], %s880
        %p882 = pneg %p52
        %p883 = pneg %p49
        %s884 = sand.u32 %s71, 1
        %s885 = sand.u32 %s71, 1
        %s886 = smul.addr %s885, 68
        %s887 = scalar_lea.vmem [#allocation4], %s886
        %p888 = pneg %p84
        %p889 = pneg %p81
        %p890 = pneg %p105
        %p891 = pneg %p102
        %p892 = pneg %p126
        %p893 = pneg %p123
        %p894 = pneg %p154
        %p895 = pneg %p151
        %s896 = smul.u32 13, %s22
        %p897 = scmp.lt.s32.totalorder %s21, 1
        %s898 = scalar_select %p897, %s21, 1
        %p899 = scmp.lt.s32.totalorder %s896, 51
        %s900 = scalar_select %p899, %s896, 51
        %s901 = smul.addr %s898, 52
        %s902 = sadd.s32 %s900, %s901
        %s903 = scalar_lea.vmem %s4, %s902
        %s904 = smul.u32 13, %s22
        %s905 = ssub.s32 53, %s904
        %p906 = scmp.lt.s32.totalorder %s905, 13
        %s907 = scalar_select %p906, %s905, 13
        %s908 = smul.u32 1088, %s907
        %s909 = sadd.s32 %s22, 1
        %s910 = smul.u32 %s909, 13
        %s911 = smul.u32 13, %s22
        %p912 = scmp.lt.s32.totalorder %s21, 1
        %s913 = scalar_select %p912, %s21, 1
        %p914 = scmp.lt.s32.totalorder %s911, 51
        %s915 = scalar_select %p914, %s911, 51
        %s916 = smul.addr %s913, 52
        %s917 = sadd.s32 %s915, %s916
        %s918 = scalar_lea.vmem %s4, %s917
        %s919 = smul.u32 13, %s22
        %v921 = vld [vmem:[%s2] sm:$0xff]
        %v922 = vld [vmem:[%s2 + $0x8] sm:$0x33]
        %v923 = vld [vmem:[%s867] sm:$0xff]
        %v924 = vld [vmem:[%s867 + $0x8] sm:$0xff]
        %v925 = vld [vmem:[%s867 + $0x10] sm:$0xff]
        %v926 = vld [vmem:[%s867 + $0x18] sm:$0xff]
        %v927 = vld [vmem:[%s867 + $0x20] sm:$0xff]
        %v928 = vld [vmem:[%s867 + $0x28] sm:$0xff]
        %v929 = vld [vmem:[%s867 + $0x30] sm:$0xf]
        %v930 = vld [vmem:[%s867 + $0x34] sm:$0xff]
        %v931 = vld [vmem:[%s867 + $0x3c] sm:$0xff]
        %v932 = vld [vmem:[%s867 + $0x44] sm:$0xff]
        %v933 = vld [vmem:[%s867 + $0x4c] sm:$0xff]
        %v934 = vld [vmem:[%s867 + $0x54] sm:$0xff]
        %v935 = vld [vmem:[%s867 + $0x5c] sm:$0xff]
        %v936 = vld [vmem:[%s867 + $0x64] sm:$0xf]
        %v937 = vld [vmem:[%s867 + $0x68] sm:$0xff]
        %v938 = vld [vmem:[%s867 + $0x70] sm:$0xff]
        %v939 = vld [vmem:[%s867 + $0x78] sm:$0xff]
        %v940 = vld [vmem:[%s867 + $0x80] sm:$0xff]
        %v941 = vld [vmem:[%s867 + $0x88] sm:$0xff]
        %v942 = vld [vmem:[%s867 + $0x90] sm:$0xff]
        %v943 = vld [vmem:[%s867 + $0x98] sm:$0xf]
        %v944 = vld [vmem:[%s867 + $0x9c] sm:$0xff]
        %v945 = vld [vmem:[%s867 + $0xa4] sm:$0xff]
        %v946 = vld [vmem:[%s867 + $0xac] sm:$0xff]
        %v947 = vld [vmem:[%s867 + $0xb4] sm:$0xff]
        %v948 = vld [vmem:[%s867 + $0xbc] sm:$0xff]
        %v949 = vld [vmem:[%s867 + $0xc4] sm:$0xff]
        %v950 = vld [vmem:[%s867 + $0xcc] sm:$0xf]
        %v951 = vld [vmem:[%s867 + $0xd0] sm:$0xff]
        %v952 = vld [vmem:[%s867 + $0xd8] sm:$0xff]
        %v953 = vld [vmem:[%s867 + $0xe0] sm:$0xff]
        %v954 = vld [vmem:[%s867 + $0xe8] sm:$0xff]
        %v955 = vld [vmem:[%s867 + $0xf0] sm:$0xff]
        %v956 = vld [vmem:[%s867 + $0xf8] sm:$0xff]
        %v957 = vld [vmem:[%s867 + $0x100] sm:$0xf]
        %v958 = vld [vmem:[%s867 + $0x104] sm:$0xff]
        %v959 = vld [vmem:[%s867 + $0x10c] sm:$0xff]
        %v960 = vld [vmem:[%s867 + $0x114] sm:$0xff]
        %v961 = vld [vmem:[%s867 + $0x11c] sm:$0xff]
        %v962 = vld [vmem:[%s867 + $0x124] sm:$0xff]
        %v963 = vld [vmem:[%s867 + $0x12c] sm:$0xff]
        %v964 = vld [vmem:[%s867 + $0x134] sm:$0xf]
        %v965 = vld [vmem:[%s867 + $0x138] sm:$0xff]
        %v966 = vld [vmem:[%s867 + $0x140] sm:$0xff]
        %v967 = vld [vmem:[%s867 + $0x148] sm:$0xff]
        %v968 = vld [vmem:[%s867 + $0x150] sm:$0xff]
        %v969 = vld [vmem:[%s867 + $0x158] sm:$0xff]
        %v970 = vld [vmem:[%s867 + $0x160] sm:$0xff]
        %v971 = vld [vmem:[%s867 + $0x168] sm:$0xf]
        %v972 = vld [vmem:[%s867 + $0x16c] sm:$0xff]
        %v973 = vld [vmem:[%s867 + $0x174] sm:$0xff]
        %v974 = vld [vmem:[%s867 + $0x17c] sm:$0xff]
        %v975 = vld [vmem:[%s867 + $0x184] sm:$0xff]
        %v976 = vld [vmem:[%s867 + $0x18c] sm:$0xff]
        %v977 = vld [vmem:[%s867 + $0x194] sm:$0xff]
        %v978 = vld [vmem:[%s867 + $0x19c] sm:$0xf]
        %v979 = vld [vmem:[%s867 + $0x1a0] sm:$0xff]
        %v980 = vld [vmem:[%s867 + $0x1a8] sm:$0xff]
        %v981 = vld [vmem:[%s867 + $0x1b0] sm:$0xff]
        %v982 = vld [vmem:[%s867 + $0x1b8] sm:$0xff]
        %v983 = vld [vmem:[%s867 + $0x1c0] sm:$0xff]
        %v984 = vld [vmem:[%s867 + $0x1c8] sm:$0xff]
        %v985 = vld [vmem:[%s867 + $0x1d0] sm:$0xf]
        %v986 = vld [vmem:[%s867 + $0x1d4] sm:$0xff]
        %v987 = vld [vmem:[%s867 + $0x1dc] sm:$0xff]
        %v988 = vld [vmem:[%s867 + $0x1e4] sm:$0xff]
        %v989 = vld [vmem:[%s867 + $0x1ec] sm:$0xff]
        %v990 = vld [vmem:[%s867 + $0x1f4] sm:$0xff]
        %v991 = vld [vmem:[%s867 + $0x1fc] sm:$0xff]
        %v992 = vld [vmem:[%s867 + $0x204] sm:$0xf]
        %v993 = vld [vmem:[%s867 + $0x208] sm:$0xff]
        %v994 = vld [vmem:[%s867 + $0x210] sm:$0xff]
        %v995 = vld [vmem:[%s867 + $0x218] sm:$0xff]
        %v996 = vld [vmem:[%s867 + $0x220] sm:$0xff]
        %v997 = vld [vmem:[%s867 + $0x228] sm:$0xff]
        %v998 = vld [vmem:[%s867 + $0x230] sm:$0xff]
        %v999 = vld [vmem:[%s867 + $0x238] sm:$0xf]
        %v1000 = vld [vmem:[%s867 + $0x23c] sm:$0xff]
        %v1001 = vld [vmem:[%s867 + $0x244] sm:$0xff]
        %v1002 = vld [vmem:[%s867 + $0x24c] sm:$0xff]
        %v1003 = vld [vmem:[%s867 + $0x254] sm:$0xff]
        %v1004 = vld [vmem:[%s867 + $0x25c] sm:$0xff]
        %v1005 = vld [vmem:[%s867 + $0x264] sm:$0xff]
        %v1006 = vld [vmem:[%s867 + $0x26c] sm:$0xf]
        %v1007 = vld [vmem:[%s867 + $0x270] sm:$0xff]
        %v1008 = vld [vmem:[%s867 + $0x278] sm:$0xff]
        %v1009 = vld [vmem:[%s867 + $0x280] sm:$0xff]
        %v1010 = vld [vmem:[%s867 + $0x288] sm:$0xff]
        %v1011 = vld [vmem:[%s867 + $0x290] sm:$0xff]
        %v1012 = vld [vmem:[%s867 + $0x298] sm:$0xff]
        %v1013 = vld [vmem:[%s867 + $0x2a0] sm:$0xf]
        %v1014 = vld [vmem:[%s867 + $0x2a4] sm:$0xff]
        %v1015 = vld [vmem:[%s867 + $0x2ac] sm:$0xff]
        %v1016 = vld [vmem:[%s867 + $0x2b4] sm:$0xff]
        %v1017 = vld [vmem:[%s867 + $0x2bc] sm:$0xff]
        %v1018 = vld [vmem:[%s867 + $0x2c4] sm:$0xff]
        %v1019 = vld [vmem:[%s867 + $0x2cc] sm:$0xff]
        %v1020 = vld [vmem:[%s867 + $0x2d4] sm:$0xf]
        %v1021 = vld [vmem:[%s867 + $0x2d8] sm:$0xff]
        %v1022 = vld [vmem:[%s867 + $0x2e0] sm:$0xff]
        %v1023 = vld [vmem:[%s867 + $0x2e8] sm:$0xff]
        %v1024 = vld [vmem:[%s867 + $0x2f0] sm:$0xff]
        %v1025 = vld [vmem:[%s867 + $0x2f8] sm:$0xff]
        %v1026 = vld [vmem:[%s867 + $0x300] sm:$0xff]
        %v1027 = vld [vmem:[%s867 + $0x308] sm:$0xf]
        %v1028 = vld [vmem:[%s867 + $0x30c] sm:$0xff]
        %v1029 = vld [vmem:[%s867 + $0x314] sm:$0xff]
        %v1030 = vld [vmem:[%s867 + $0x31c] sm:$0xff]
        %v1031 = vld [vmem:[%s867 + $0x324] sm:$0xff]
        %v1032 = vld [vmem:[%s867 + $0x32c] sm:$0xff]
        %v1033 = vld [vmem:[%s867 + $0x334] sm:$0xff]
        %v1034 = vld [vmem:[%s867 + $0x33c] sm:$0xf]
        %v1035 = vld [vmem:[%s867 + $0x340] sm:$0xff]
        %v1036 = vld [vmem:[%s867 + $0x348] sm:$0xff]
        %v1037 = vld [vmem:[%s867 + $0x350] sm:$0xff]
        %v1038 = vld [vmem:[%s867 + $0x358] sm:$0xff]
        %v1039 = vld [vmem:[%s867 + $0x360] sm:$0xff]
        %v1040 = vld [vmem:[%s867 + $0x368] sm:$0xff]
        %v1041 = vld [vmem:[%s867 + $0x370] sm:$0xf]
        %v1044 = vunpack.c.l.b16 %v921
        %v1045 = vunpack.c.h.b16 %v921
        %v1046 = vunpack.c.l.b16 %v922
        %v1047 = vunpack.c.h.b16 %v922
        %v1048 = vpack.c.b16 %v1046, %v1044
        %v1049 = vpack.c.b16 %v1047, %v1045
        %v1170 = vunpack.c.l.b16 %v923
        %v1171 = vunpack.c.h.b16 %v923
        %v1172 = vunpack.c.l.b16 %v924
        %v1173 = vunpack.c.h.b16 %v924
        %v1174 = vunpack.c.l.b16 %v925
        %v1175 = vunpack.c.h.b16 %v925
        %v1176 = vunpack.c.l.b16 %v926
        %v1177 = vunpack.c.h.b16 %v926
        %v1178 = vunpack.c.l.b16 %v927
        %v1179 = vunpack.c.h.b16 %v927
        %v1180 = vunpack.c.l.b16 %v928
        %v1181 = vunpack.c.h.b16 %v928
        %v1182 = vunpack.c.l.b16 %v929
        %v1183 = vunpack.c.l.b16 %v930
        %v1184 = vunpack.c.h.b16 %v930
        %v1185 = vunpack.c.l.b16 %v931
        %v1186 = vunpack.c.h.b16 %v931
        %v1187 = vunpack.c.l.b16 %v932
        %v1188 = vunpack.c.h.b16 %v932
        %v1189 = vunpack.c.l.b16 %v933
        %v1190 = vunpack.c.h.b16 %v933
        %v1191 = vunpack.c.l.b16 %v934
        %v1192 = vunpack.c.h.b16 %v934
        %v1193 = vunpack.c.l.b16 %v935
        %v1194 = vunpack.c.h.b16 %v935
        %v1195 = vunpack.c.l.b16 %v936
        %v1196 = vunpack.c.l.b16 %v937
        %v1197 = vunpack.c.h.b16 %v937
        %v1198 = vunpack.c.l.b16 %v938
        %v1199 = vunpack.c.h.b16 %v938
        %v1200 = vunpack.c.l.b16 %v939
        %v1201 = vunpack.c.h.b16 %v939
        %v1202 = vunpack.c.l.b16 %v940
        %v1203 = vunpack.c.h.b16 %v940
        %v1204 = vunpack.c.l.b16 %v941
        %v1205 = vunpack.c.h.b16 %v941
        %v1206 = vunpack.c.l.b16 %v942
        %v1207 = vunpack.c.h.b16 %v942
        %v1208 = vunpack.c.l.b16 %v943
        %v1209 = vunpack.c.l.b16 %v944
        %v1210 = vunpack.c.h.b16 %v944
        %v1211 = vunpack.c.l.b16 %v945
        %v1212 = vunpack.c.h.b16 %v945
        %v1213 = vunpack.c.l.b16 %v946
        %v1214 = vunpack.c.h.b16 %v946
        %v1215 = vunpack.c.l.b16 %v947
        %v1216 = vunpack.c.h.b16 %v947
        %v1217 = vunpack.c.l.b16 %v948
        %v1218 = vunpack.c.h.b16 %v948
        %v1219 = vunpack.c.l.b16 %v949
        %v1220 = vunpack.c.h.b16 %v949
        %v1221 = vunpack.c.l.b16 %v950
        %v1222 = vunpack.c.l.b16 %v951
        %v1223 = vunpack.c.h.b16 %v951
        %v1224 = vunpack.c.l.b16 %v952
        %v1225 = vunpack.c.h.b16 %v952
        %v1226 = vunpack.c.l.b16 %v953
        %v1227 = vunpack.c.h.b16 %v953
        %v1228 = vunpack.c.l.b16 %v954
        %v1229 = vunpack.c.h.b16 %v954
        %v1230 = vunpack.c.l.b16 %v955
        %v1231 = vunpack.c.h.b16 %v955
        %v1232 = vunpack.c.l.b16 %v956
        %v1233 = vunpack.c.h.b16 %v956
        %v1234 = vunpack.c.l.b16 %v957
        %v1235 = vunpack.c.l.b16 %v958
        %v1236 = vunpack.c.h.b16 %v958
        %v1237 = vunpack.c.l.b16 %v959
        %v1238 = vunpack.c.h.b16 %v959
        %v1239 = vunpack.c.l.b16 %v960
        %v1240 = vunpack.c.h.b16 %v960
        %v1241 = vunpack.c.l.b16 %v961
        %v1242 = vunpack.c.h.b16 %v961
        %v1243 = vunpack.c.l.b16 %v962
        %v1244 = vunpack.c.h.b16 %v962
        %v1245 = vunpack.c.l.b16 %v963
        %v1246 = vunpack.c.h.b16 %v963
        %v1247 = vunpack.c.l.b16 %v964
        %v1248 = vunpack.c.l.b16 %v965
        %v1249 = vunpack.c.h.b16 %v965
        %v1250 = vunpack.c.l.b16 %v966
        %v1251 = vunpack.c.h.b16 %v966
        %v1252 = vunpack.c.l.b16 %v967
        %v1253 = vunpack.c.h.b16 %v967
        %v1254 = vunpack.c.l.b16 %v968
        %v1255 = vunpack.c.h.b16 %v968
        %v1256 = vunpack.c.l.b16 %v969
        %v1257 = vunpack.c.h.b16 %v969
        %v1258 = vunpack.c.l.b16 %v970
        %v1259 = vunpack.c.h.b16 %v970
        %v1260 = vunpack.c.l.b16 %v971
        %v1261 = vunpack.c.l.b16 %v972
        %v1262 = vunpack.c.h.b16 %v972
        %v1263 = vunpack.c.l.b16 %v973
        %v1264 = vunpack.c.h.b16 %v973
        %v1265 = vunpack.c.l.b16 %v974
        %v1266 = vunpack.c.h.b16 %v974
        %v1267 = vunpack.c.l.b16 %v975
        %v1268 = vunpack.c.h.b16 %v975
        %v1269 = vunpack.c.l.b16 %v976
        %v1270 = vunpack.c.h.b16 %v976
        %v1271 = vunpack.c.l.b16 %v977
        %v1272 = vunpack.c.h.b16 %v977
        %v1273 = vunpack.c.l.b16 %v978
        %v1274 = vunpack.c.l.b16 %v979
        %v1275 = vunpack.c.h.b16 %v979
        %v1276 = vunpack.c.l.b16 %v980
        %v1277 = vunpack.c.h.b16 %v980
        %v1278 = vunpack.c.l.b16 %v981
        %v1279 = vunpack.c.h.b16 %v981
        %v1280 = vunpack.c.l.b16 %v982
        %v1281 = vunpack.c.h.b16 %v982
        %v1282 = vunpack.c.l.b16 %v983
        %v1283 = vunpack.c.h.b16 %v983
        %v1284 = vunpack.c.l.b16 %v984
        %v1285 = vunpack.c.h.b16 %v984
        %v1286 = vunpack.c.l.b16 %v985
        %v1287 = vunpack.c.l.b16 %v986
        %v1288 = vunpack.c.h.b16 %v986
        %v1289 = vunpack.c.l.b16 %v987
        %v1290 = vunpack.c.h.b16 %v987
        %v1291 = vunpack.c.l.b16 %v988
        %v1292 = vunpack.c.h.b16 %v988
        %v1293 = vunpack.c.l.b16 %v989
        %v1294 = vunpack.c.h.b16 %v989
        %v1295 = vunpack.c.l.b16 %v990
        %v1296 = vunpack.c.h.b16 %v990
        %v1297 = vunpack.c.l.b16 %v991
        %v1298 = vunpack.c.h.b16 %v991
        %v1299 = vunpack.c.l.b16 %v992
        %v1300 = vunpack.c.l.b16 %v993
        %v1301 = vunpack.c.h.b16 %v993
        %v1302 = vunpack.c.l.b16 %v994
        %v1303 = vunpack.c.h.b16 %v994
        %v1304 = vunpack.c.l.b16 %v995
        %v1305 = vunpack.c.h.b16 %v995
        %v1306 = vunpack.c.l.b16 %v996
        %v1307 = vunpack.c.h.b16 %v996
        %v1308 = vunpack.c.l.b16 %v997
        %v1309 = vunpack.c.h.b16 %v997
        %v1310 = vunpack.c.l.b16 %v998
        %v1311 = vunpack.c.h.b16 %v998
        %v1312 = vunpack.c.l.b16 %v999
        %v1313 = vunpack.c.l.b16 %v1000
        %v1314 = vunpack.c.h.b16 %v1000
        %v1315 = vunpack.c.l.b16 %v1001
        %v1316 = vunpack.c.h.b16 %v1001
        %v1317 = vunpack.c.l.b16 %v1002
        %v1318 = vunpack.c.h.b16 %v1002
        %v1319 = vunpack.c.l.b16 %v1003
        %v1320 = vunpack.c.h.b16 %v1003
        %v1321 = vunpack.c.l.b16 %v1004
        %v1322 = vunpack.c.h.b16 %v1004
        %v1323 = vunpack.c.l.b16 %v1005
        %v1324 = vunpack.c.h.b16 %v1005
        %v1325 = vunpack.c.l.b16 %v1006
        %v1326 = vunpack.c.l.b16 %v1007
        %v1327 = vunpack.c.h.b16 %v1007
        %v1328 = vunpack.c.l.b16 %v1008
        %v1329 = vunpack.c.h.b16 %v1008
        %v1330 = vunpack.c.l.b16 %v1009
        %v1331 = vunpack.c.h.b16 %v1009
        %v1332 = vunpack.c.l.b16 %v1010
        %v1333 = vunpack.c.h.b16 %v1010
        %v1334 = vunpack.c.l.b16 %v1011
        %v1335 = vunpack.c.h.b16 %v1011
        %v1336 = vunpack.c.l.b16 %v1012
        %v1337 = vunpack.c.h.b16 %v1012
        %v1338 = vunpack.c.l.b16 %v1013
        %v1339 = vunpack.c.l.b16 %v1014
        %v1340 = vunpack.c.h.b16 %v1014
        %v1341 = vunpack.c.l.b16 %v1015
        %v1342 = vunpack.c.h.b16 %v1015
        %v1343 = vunpack.c.l.b16 %v1016
        %v1344 = vunpack.c.h.b16 %v1016
        %v1345 = vunpack.c.l.b16 %v1017
        %v1346 = vunpack.c.h.b16 %v1017
        %v1347 = vunpack.c.l.b16 %v1018
        %v1348 = vunpack.c.h.b16 %v1018
        %v1349 = vunpack.c.l.b16 %v1019
        %v1350 = vunpack.c.h.b16 %v1019
        %v1351 = vunpack.c.l.b16 %v1020
        %v1352 = vunpack.c.l.b16 %v1021
        %v1353 = vunpack.c.h.b16 %v1021
        %v1354 = vunpack.c.l.b16 %v1022
        %v1355 = vunpack.c.h.b16 %v1022
        %v1356 = vunpack.c.l.b16 %v1023
        %v1357 = vunpack.c.h.b16 %v1023
        %v1358 = vunpack.c.l.b16 %v1024
        %v1359 = vunpack.c.h.b16 %v1024
        %v1360 = vunpack.c.l.b16 %v1025
        %v1361 = vunpack.c.h.b16 %v1025
        %v1362 = vunpack.c.l.b16 %v1026
        %v1363 = vunpack.c.h.b16 %v1026
        %v1364 = vunpack.c.l.b16 %v1027
        %v1365 = vunpack.c.l.b16 %v1028
        %v1366 = vunpack.c.h.b16 %v1028
        %v1367 = vunpack.c.l.b16 %v1029
        %v1368 = vunpack.c.h.b16 %v1029
        %v1369 = vunpack.c.l.b16 %v1030
        %v1370 = vunpack.c.h.b16 %v1030
        %v1371 = vunpack.c.l.b16 %v1031
        %v1372 = vunpack.c.h.b16 %v1031
        %v1373 = vunpack.c.l.b16 %v1032
        %v1374 = vunpack.c.h.b16 %v1032
        %v1375 = vunpack.c.l.b16 %v1033
        %v1376 = vunpack.c.h.b16 %v1033
        %v1377 = vunpack.c.l.b16 %v1034
        %v1378 = vunpack.c.l.b16 %v1035
        %v1379 = vunpack.c.h.b16 %v1035
        %v1380 = vunpack.c.l.b16 %v1036
        %v1381 = vunpack.c.h.b16 %v1036
        %v1382 = vunpack.c.l.b16 %v1037
        %v1383 = vunpack.c.h.b16 %v1037
        %v1384 = vunpack.c.l.b16 %v1038
        %v1385 = vunpack.c.h.b16 %v1038
        %v1386 = vunpack.c.l.b16 %v1039
        %v1387 = vunpack.c.h.b16 %v1039
        %v1388 = vunpack.c.l.b16 %v1040
        %v1389 = vunpack.c.h.b16 %v1040
        %v1390 = vunpack.c.l.b16 %v1041
        %v1391 = vpack.c.b16 %v1183, %v1170
        %v1392 = vpack.c.b16 %v1184, %v1171
        %v1393 = vpack.c.b16 %v1185, %v1172
        %v1394 = vpack.c.b16 %v1186, %v1173
        %v1395 = vpack.c.b16 %v1187, %v1174
        %v1396 = vpack.c.b16 %v1188, %v1175
        %v1397 = vpack.c.b16 %v1189, %v1176
        %v1398 = vpack.c.b16 %v1190, %v1177
        %v1399 = vpack.c.b16 %v1191, %v1178
        %v1400 = vpack.c.b16 %v1192, %v1179
        %v1401 = vpack.c.b16 %v1193, %v1180
        %v1402 = vpack.c.b16 %v1194, %v1181
        %v1403 = vpack.c.b16 %v1195, %v1182
        %v1404 = vpack.c.b16 %v1209, %v1196
        %v1405 = vpack.c.b16 %v1210, %v1197
        %v1406 = vpack.c.b16 %v1211, %v1198
        %v1407 = vpack.c.b16 %v1212, %v1199
        %v1408 = vpack.c.b16 %v1213, %v1200
        %v1409 = vpack.c.b16 %v1214, %v1201
        %v1410 = vpack.c.b16 %v1215, %v1202
        %v1411 = vpack.c.b16 %v1216, %v1203
        %v1412 = vpack.c.b16 %v1217, %v1204
        %v1413 = vpack.c.b16 %v1218, %v1205
        %v1414 = vpack.c.b16 %v1219, %v1206
        %v1415 = vpack.c.b16 %v1220, %v1207
        %v1416 = vpack.c.b16 %v1221, %v1208
        %v1417 = vpack.c.b16 %v1235, %v1222
        %v1418 = vpack.c.b16 %v1236, %v1223
        %v1419 = vpack.c.b16 %v1237, %v1224
        %v1420 = vpack.c.b16 %v1238, %v1225
        %v1421 = vpack.c.b16 %v1239, %v1226
        %v1422 = vpack.c.b16 %v1240, %v1227
        %v1423 = vpack.c.b16 %v1241, %v1228
        %v1424 = vpack.c.b16 %v1242, %v1229
        %v1425 = vpack.c.b16 %v1243, %v1230
        %v1426 = vpack.c.b16 %v1244, %v1231
        %v1427 = vpack.c.b16 %v1245, %v1232
        %v1428 = vpack.c.b16 %v1246, %v1233
        %v1429 = vpack.c.b16 %v1247, %v1234
        %v1430 = vpack.c.b16 %v1261, %v1248
        %v1431 = vpack.c.b16 %v1262, %v1249
        %v1432 = vpack.c.b16 %v1263, %v1250
        %v1433 = vpack.c.b16 %v1264, %v1251
        %v1434 = vpack.c.b16 %v1265, %v1252
        %v1435 = vpack.c.b16 %v1266, %v1253
        %v1436 = vpack.c.b16 %v1267, %v1254
        %v1437 = vpack.c.b16 %v1268, %v1255
        %v1438 = vpack.c.b16 %v1269, %v1256
        %v1439 = vpack.c.b16 %v1270, %v1257
        %v1440 = vpack.c.b16 %v1271, %v1258
        %v1441 = vpack.c.b16 %v1272, %v1259
        %v1442 = vpack.c.b16 %v1273, %v1260
        %v1443 = vpack.c.b16 %v1287, %v1274
        %v1444 = vpack.c.b16 %v1288, %v1275
        %v1445 = vpack.c.b16 %v1289, %v1276
        %v1446 = vpack.c.b16 %v1290, %v1277
        %v1447 = vpack.c.b16 %v1291, %v1278
        %v1448 = vpack.c.b16 %v1292, %v1279
        %v1449 = vpack.c.b16 %v1293, %v1280
        %v1450 = vpack.c.b16 %v1294, %v1281
        %v1451 = vpack.c.b16 %v1295, %v1282
        %v1452 = vpack.c.b16 %v1296, %v1283
        %v1453 = vpack.c.b16 %v1297, %v1284
        %v1454 = vpack.c.b16 %v1298, %v1285
        %v1455 = vpack.c.b16 %v1299, %v1286
        %v1456 = vpack.c.b16 %v1313, %v1300
        %v1457 = vpack.c.b16 %v1314, %v1301
        %v1458 = vpack.c.b16 %v1315, %v1302
        %v1459 = vpack.c.b16 %v1316, %v1303
        %v1460 = vpack.c.b16 %v1317, %v1304
        %v1461 = vpack.c.b16 %v1318, %v1305
        %v1462 = vpack.c.b16 %v1319, %v1306
        %v1463 = vpack.c.b16 %v1320, %v1307
        %v1464 = vpack.c.b16 %v1321, %v1308
        %v1465 = vpack.c.b16 %v1322, %v1309
        %v1466 = vpack.c.b16 %v1323, %v1310
        %v1467 = vpack.c.b16 %v1324, %v1311
        %v1468 = vpack.c.b16 %v1325, %v1312
        %v1469 = vpack.c.b16 %v1339, %v1326
        %v1470 = vpack.c.b16 %v1340, %v1327
        %v1471 = vpack.c.b16 %v1341, %v1328
        %v1472 = vpack.c.b16 %v1342, %v1329
        %v1473 = vpack.c.b16 %v1343, %v1330
        %v1474 = vpack.c.b16 %v1344, %v1331
        %v1475 = vpack.c.b16 %v1345, %v1332
        %v1476 = vpack.c.b16 %v1346, %v1333
        %v1477 = vpack.c.b16 %v1347, %v1334
        %v1478 = vpack.c.b16 %v1348, %v1335
        %v1479 = vpack.c.b16 %v1349, %v1336
        %v1480 = vpack.c.b16 %v1350, %v1337
        %v1481 = vpack.c.b16 %v1351, %v1338
        %v1482 = vpack.c.b16 %v1365, %v1352
        %v1483 = vpack.c.b16 %v1366, %v1353
        %v1484 = vpack.c.b16 %v1367, %v1354
        %v1485 = vpack.c.b16 %v1368, %v1355
        %v1486 = vpack.c.b16 %v1369, %v1356
        %v1487 = vpack.c.b16 %v1370, %v1357
        %v1488 = vpack.c.b16 %v1371, %v1358
        %v1489 = vpack.c.b16 %v1372, %v1359
        %v1490 = vpack.c.b16 %v1373, %v1360
        %v1491 = vpack.c.b16 %v1374, %v1361
        %v1492 = vpack.c.b16 %v1375, %v1362
        %v1493 = vpack.c.b16 %v1376, %v1363
        %v1494 = vpack.c.b16 %v1377, %v1364
        %v1495 = vpack.c.b16 %v1378, %v1378
        %v1496 = vpack.c.b16 %v1379, %v1379
        %v1497 = vpack.c.b16 %v1380, %v1380
        %v1498 = vpack.c.b16 %v1381, %v1381
        %v1499 = vpack.c.b16 %v1382, %v1382
        %v1500 = vpack.c.b16 %v1383, %v1383
        %v1501 = vpack.c.b16 %v1384, %v1384
        %v1502 = vpack.c.b16 %v1385, %v1385
        %v1503 = vpack.c.b16 %v1386, %v1386
        %v1504 = vpack.c.b16 %v1387, %v1387
        %v1505 = vpack.c.b16 %v1388, %v1388
        %v1506 = vpack.c.b16 %v1389, %v1389
        %v1507 = vpack.c.b16 %v1390, %v1390
        %vm1612 = vcmask 56320
        %v1614 = vsel %vm1612, %v1049, 0
        %vm1616 = vcmask 1042432
        %vm1617 = vcmask 1043456
        %v1618 = vsel %vm1616, 4294967295, 65535
        %v1619 = vsel %vm1617, %v1618, 0
        %v1621 = vand.u32 %v1495, %v1619
        %v1624 = vand.u32 %v1496, %v1619
        %v1627 = vand.u32 %v1497, %v1619
        %v1630 = vand.u32 %v1498, %v1619
        %v1633 = vand.u32 %v1499, %v1619
        %v1636 = vand.u32 %v1500, %v1619
        %v1639 = vand.u32 %v1501, %v1619
        %v1642 = vand.u32 %v1502, %v1619
        %v1645 = vand.u32 %v1503, %v1619
        %v1648 = vand.u32 %v1504, %v1619
        %v1651 = vand.u32 %v1505, %v1619
        %v1654 = vand.u32 %v1506, %v1619
        %v1657 = vand.u32 %v1507, %v1619
        %1659 = vmatprep.subr.bf16.mxu0 %v1392
        %1660 = vmatpush1.bf16.msra.mxu0 %v1391
        %1661 = vmatprep.subr.bf16.mxu0 %v1405
        %1662 = vmatpush1.bf16.msra.mxu0 %v1404
        %1663 = vmatprep.subr.bf16.mxu0 %v1418
        %1664 = vmatpush1.bf16.msra.mxu0 %v1417
        %1665 = vmatprep.subr.bf16.mxu0 %v1431
        %1666 = vmatpush1.bf16.msra.mxu0 %v1430
        %1667 = vmatprep.subr.bf16.mxu0 %v1444
        %1668 = vmatpush1.bf16.msra.mxu0 %v1443
        %1669 = vmatprep.subr.bf16.mxu0 %v1457
        %1670 = vmatpush1.bf16.msra.mxu0 %v1456
        %1671 = vmatprep.subr.bf16.mxu0 %v1470
        %1672 = vmatpush1.bf16.msra.mxu0 %v1469
        %1673 = vmatprep.subr.bf16.mxu0 %v1483
        %1674 = vmatpush1.bf16.msra.mxu0 %v1482
        %1675 = vmatprep.subr.bf16.mxu0 %v1624
        %1676 = vmatpush1.bf16.msra.mxu0 %v1621
        %1677 = vmatprep.subr.bf16.mxu0 0
        %1678 = vmatpush1.bf16.msra.mxu0 0
        %1679 = vmatprep.subr.bf16.mxu0 0
        %1680 = vmatpush1.bf16.msra.mxu0 0
        %1681 = vmatprep.subr.bf16.mxu0 0
        %1682 = vmatpush1.bf16.msra.mxu0 0
        %1683 = vmatprep.subr.bf16.mxu0 0
        %1684 = vmatpush1.bf16.msra.mxu0 0
        %1685 = vmatprep.subr.bf16.mxu0 0
        %1686 = vmatpush1.bf16.msra.mxu0 0
        %1687 = vmatprep.subr.bf16.mxu0 0
        %1688 = vmatpush1.bf16.msra.mxu0 0
        %1689 = vmatprep.subr.bf16.mxu0 0
        %1690 = vmatpush1.bf16.msra.mxu0 0
        %1691 = vmatprep.mubr.bf16.mxu0 %v1614
        %1692 = vmatmul.mubr.bf16.gmra.mrb[0].mxu0 %v1048
        %v1693 = vpop.f32.mrb[0].mxu0
        %v1694 = vadd.f32 0.0, %v1693
        %v1695 = vpop.f32.mrb[0].mxu0
        %v1696 = vadd.f32 0.0, %v1695
        %v1697 = vpop.f32.mrb[0].mxu0
        %v1698 = vadd.f32 0.0, %v1697
        %v1699 = vpop.f32.mrb[0].mxu0
        %v1700 = vadd.f32 0.0, %v1699
        %1701 = vdwg.mxu0
        %1702 = vmatprep.subr.bf16.mxu0 %v1394
        %1703 = vmatpush1.bf16.msra.mxu0 %v1393
        %1704 = vmatprep.subr.bf16.mxu0 %v1407
        %1705 = vmatpush1.bf16.msra.mxu0 %v1406
        %1706 = vmatprep.subr.bf16.mxu0 %v1420
        %1707 = vmatpush1.bf16.msra.mxu0 %v1419
        %1708 = vmatprep.subr.bf16.mxu0 %v1433
        %1709 = vmatpush1.bf16.msra.mxu0 %v1432
        %1710 = vmatprep.subr.bf16.mxu0 %v1446
        %1711 = vmatpush1.bf16.msra.mxu0 %v1445
        %1712 = vmatprep.subr.bf16.mxu0 %v1459
        %1713 = vmatpush1.bf16.msra.mxu0 %v1458
        %1714 = vmatprep.subr.bf16.mxu0 %v1472
        %1715 = vmatpush1.bf16.msra.mxu0 %v1471
        %1716 = vmatprep.subr.bf16.mxu0 %v1485
        %1717 = vmatpush1.bf16.msra.mxu0 %v1484
        %1718 = vmatprep.subr.bf16.mxu0 %v1630
        %1719 = vmatpush1.bf16.msra.mxu0 %v1627
        %1720 = vmatprep.subr.bf16.mxu0 0
        %1721 = vmatpush1.bf16.msra.mxu0 0
        %1722 = vmatprep.subr.bf16.mxu0 0
        %1723 = vmatpush1.bf16.msra.mxu0 0
        %1724 = vmatprep.subr.bf16.mxu0 0
        %1725 = vmatpush1.bf16.msra.mxu0 0
        %1726 = vmatprep.subr.bf16.mxu0 0
        %1727 = vmatpush1.bf16.msra.mxu0 0
        %1728 = vmatprep.subr.bf16.mxu0 0
        %1729 = vmatpush1.bf16.msra.mxu0 0
        %1730 = vmatprep.subr.bf16.mxu0 0
        %1731 = vmatpush1.bf16.msra.mxu0 0
        %1732 = vmatprep.subr.bf16.mxu0 0
        %1733 = vmatpush1.bf16.msra.mxu0 0
        %1734 = vmatprep.mubr.bf16.mxu0 %v1614
        %1735 = vmatmul.mubr.bf16.gmra.mrb[0].mxu0 %v1048
        %v1736 = vpop.f32.mrb[0].mxu0
        %v1737 = vadd.f32 0.0, %v1736
        %v1738 = vpop.f32.mrb[0].mxu0
        %v1739 = vadd.f32 0.0, %v1738
        %v1740 = vpop.f32.mrb[0].mxu0
        %v1741 = vadd.f32 0.0, %v1740
        %v1742 = vpop.f32.mrb[0].mxu0
        %v1743 = vadd.f32 0.0, %v1742
        %1744 = vdwg.mxu0
        %1745 = vmatprep.subr.bf16.mxu0 %v1396
        %1746 = vmatpush1.bf16.msra.mxu0 %v1395
        %1747 = vmatprep.subr.bf16.mxu0 %v1409
        %1748 = vmatpush1.bf16.msra.mxu0 %v1408
        %1749 = vmatprep.subr.bf16.mxu0 %v1422
        %1750 = vmatpush1.bf16.msra.mxu0 %v1421
        %1751 = vmatprep.subr.bf16.mxu0 %v1435
        %1752 = vmatpush1.bf16.msra.mxu0 %v1434
        %1753 = vmatprep.subr.bf16.mxu0 %v1448
        %1754 = vmatpush1.bf16.msra.mxu0 %v1447
        %1755 = vmatprep.subr.bf16.mxu0 %v1461
        %1756 = vmatpush1.bf16.msra.mxu0 %v1460
        %1757 = vmatprep.subr.bf16.mxu0 %v1474
        %1758 = vmatpush1.bf16.msra.mxu0 %v1473
        %1759 = vmatprep.subr.bf16.mxu0 %v1487
        %1760 = vmatpush1.bf16.msra.mxu0 %v1486
        %1761 = vmatprep.subr.bf16.mxu0 %v1636
        %1762 = vmatpush1.bf16.msra.mxu0 %v1633
        %1763 = vmatprep.subr.bf16.mxu0 0
        %1764 = vmatpush1.bf16.msra.mxu0 0
        %1765 = vmatprep.subr.bf16.mxu0 0
        %1766 = vmatpush1.bf16.msra.mxu0 0
        %1767 = vmatprep.subr.bf16.mxu0 0
        %1768 = vmatpush1.bf16.msra.mxu0 0
        %1769 = vmatprep.subr.bf16.mxu0 0
        %1770 = vmatpush1.bf16.msra.mxu0 0
        %1771 = vmatprep.subr.bf16.mxu0 0
        %1772 = vmatpush1.bf16.msra.mxu0 0
        %1773 = vmatprep.subr.bf16.mxu0 0
        %1774 = vmatpush1.bf16.msra.mxu0 0
        %1775 = vmatprep.subr.bf16.mxu0 0
        %1776 = vmatpush1.bf16.msra.mxu0 0
        %1777 = vmatprep.mubr.bf16.mxu0 %v1614
        %1778 = vmatmul.mubr.bf16.gmra.mrb[0].mxu0 %v1048
        %v1779 = vpop.f32.mrb[0].mxu0
        %v1780 = vadd.f32 0.0, %v1779
        %v1781 = vpop.f32.mrb[0].mxu0
        %v1782 = vadd.f32 0.0, %v1781
        %v1783 = vpop.f32.mrb[0].mxu0
        %v1784 = vadd.f32 0.0, %v1783
        %v1785 = vpop.f32.mrb[0].mxu0
        %v1786 = vadd.f32 0.0, %v1785
        %1787 = vdwg.mxu0
        %1788 = vmatprep.subr.bf16.mxu0 %v1398
        %1789 = vmatpush1.bf16.msra.mxu0 %v1397
        %1790 = vmatprep.subr.bf16.mxu0 %v1411
        %1791 = vmatpush1.bf16.msra.mxu0 %v1410
        %1792 = vmatprep.subr.bf16.mxu0 %v1424
        %1793 = vmatpush1.bf16.msra.mxu0 %v1423
        %1794 = vmatprep.subr.bf16.mxu0 %v1437
        %1795 = vmatpush1.bf16.msra.mxu0 %v1436
        %1796 = vmatprep.subr.bf16.mxu0 %v1450
        %1797 = vmatpush1.bf16.msra.mxu0 %v1449
        %1798 = vmatprep.subr.bf16.mxu0 %v1463
        %1799 = vmatpush1.bf16.msra.mxu0 %v1462
        %1800 = vmatprep.subr.bf16.mxu0 %v1476
        %1801 = vmatpush1.bf16.msra.mxu0 %v1475
        %1802 = vmatprep.subr.bf16.mxu0 %v1489
        %1803 = vmatpush1.bf16.msra.mxu0 %v1488
        %1804 = vmatprep.subr.bf16.mxu0 %v1642
        %1805 = vmatpush1.bf16.msra.mxu0 %v1639
        %1806 = vmatprep.subr.bf16.mxu0 0
        %1807 = vmatpush1.bf16.msra.mxu0 0
        %1808 = vmatprep.subr.bf16.mxu0 0
        %1809 = vmatpush1.bf16.msra.mxu0 0
        %1810 = vmatprep.subr.bf16.mxu0 0
        %1811 = vmatpush1.bf16.msra.mxu0 0
        %1812 = vmatprep.subr.bf16.mxu0 0
        %1813 = vmatpush1.bf16.msra.mxu0 0
        %1814 = vmatprep.subr.bf16.mxu0 0
        %1815 = vmatpush1.bf16.msra.mxu0 0
        %1816 = vmatprep.subr.bf16.mxu0 0
        %1817 = vmatpush1.bf16.msra.mxu0 0
        %1818 = vmatprep.subr.bf16.mxu0 0
        %1819 = vmatpush1.bf16.msra.mxu0 0
        %1820 = vmatprep.mubr.bf16.mxu0 %v1614
        %1821 = vmatmul.mubr.bf16.gmra.mrb[0].mxu0 %v1048
        %v1822 = vpop.f32.mrb[0].mxu0
        %v1823 = vadd.f32 0.0, %v1822
        %v1824 = vpop.f32.mrb[0].mxu0
        %v1825 = vadd.f32 0.0, %v1824
        %v1826 = vpop.f32.mrb[0].mxu0
        %v1827 = vadd.f32 0.0, %v1826
        %v1828 = vpop.f32.mrb[0].mxu0
        %v1829 = vadd.f32 0.0, %v1828
        %1830 = vdwg.mxu0
        %1831 = vmatprep.subr.bf16.mxu0 %v1400
        %1832 = vmatpush1.bf16.msra.mxu0 %v1399
        %1833 = vmatprep.subr.bf16.mxu0 %v1413
        %1834 = vmatpush1.bf16.msra.mxu0 %v1412
        %1835 = vmatprep.subr.bf16.mxu0 %v1426
        %1836 = vmatpush1.bf16.msra.mxu0 %v1425
        %1837 = vmatprep.subr.bf16.mxu0 %v1439
        %1838 = vmatpush1.bf16.msra.mxu0 %v1438
        %1839 = vmatprep.subr.bf16.mxu0 %v1452
        %1840 = vmatpush1.bf16.msra.mxu0 %v1451
        %1841 = vmatprep.subr.bf16.mxu0 %v1465
        %1842 = vmatpush1.bf16.msra.mxu0 %v1464
        %1843 = vmatprep.subr.bf16.mxu0 %v1478
        %1844 = vmatpush1.bf16.msra.mxu0 %v1477
        %1845 = vmatprep.subr.bf16.mxu0 %v1491
        %1846 = vmatpush1.bf16.msra.mxu0 %v1490
        %1847 = vmatprep.subr.bf16.mxu0 %v1648
        %1848 = vmatpush1.bf16.msra.mxu0 %v1645
        %1849 = vmatprep.subr.bf16.mxu0 0
        %1850 = vmatpush1.bf16.msra.mxu0 0
        %1851 = vmatprep.subr.bf16.mxu0 0
        %1852 = vmatpush1.bf16.msra.mxu0 0
        %1853 = vmatprep.subr.bf16.mxu0 0
        %1854 = vmatpush1.bf16.msra.mxu0 0
        %1855 = vmatprep.subr.bf16.mxu0 0
        %1856 = vmatpush1.bf16.msra.mxu0 0
        %1857 = vmatprep.subr.bf16.mxu0 0
        %1858 = vmatpush1.bf16.msra.mxu0 0
        %1859 = vmatprep.subr.bf16.mxu0 0
        %1860 = vmatpush1.bf16.msra.mxu0 0
        %1861 = vmatprep.subr.bf16.mxu0 0
        %1862 = vmatpush1.bf16.msra.mxu0 0
        %1863 = vmatprep.mubr.bf16.mxu0 %v1614
        %1864 = vmatmul.mubr.bf16.gmra.mrb[0].mxu0 %v1048
        %v1865 = vpop.f32.mrb[0].mxu0
        %v1866 = vadd.f32 0.0, %v1865
        %v1867 = vpop.f32.mrb[0].mxu0
        %v1868 = vadd.f32 0.0, %v1867
        %v1869 = vpop.f32.mrb[0].mxu0
        %v1870 = vadd.f32 0.0, %v1869
        %v1871 = vpop.f32.mrb[0].mxu0
        %v1872 = vadd.f32 0.0, %v1871
        %1873 = vdwg.mxu0
        %1874 = vmatprep.subr.bf16.mxu0 %v1402
        %1875 = vmatpush1.bf16.msra.mxu0 %v1401
        %1876 = vmatprep.subr.bf16.mxu0 %v1415
        %1877 = vmatpush1.bf16.msra.mxu0 %v1414
        %1878 = vmatprep.subr.bf16.mxu0 %v1428
        %1879 = vmatpush1.bf16.msra.mxu0 %v1427
        %1880 = vmatprep.subr.bf16.mxu0 %v1441
        %1881 = vmatpush1.bf16.msra.mxu0 %v1440
        %1882 = vmatprep.subr.bf16.mxu0 %v1454
        %1883 = vmatpush1.bf16.msra.mxu0 %v1453
        %1884 = vmatprep.subr.bf16.mxu0 %v1467
        %1885 = vmatpush1.bf16.msra.mxu0 %v1466
        %1886 = vmatprep.subr.bf16.mxu0 %v1480
        %1887 = vmatpush1.bf16.msra.mxu0 %v1479
        %1888 = vmatprep.subr.bf16.mxu0 %v1493
        %1889 = vmatpush1.bf16.msra.mxu0 %v1492
        %1890 = vmatprep.subr.bf16.mxu0 %v1654
        %1891 = vmatpush1.bf16.msra.mxu0 %v1651
        %1892 = vmatprep.subr.bf16.mxu0 0
        %1893 = vmatpush1.bf16.msra.mxu0 0
        %1894 = vmatprep.subr.bf16.mxu0 0
        %1895 = vmatpush1.bf16.msra.mxu0 0
        %1896 = vmatprep.subr.bf16.mxu0 0
        %1897 = vmatpush1.bf16.msra.mxu0 0
        %1898 = vmatprep.subr.bf16.mxu0 0
        %1899 = vmatpush1.bf16.msra.mxu0 0
        %1900 = vmatprep.subr.bf16.mxu0 0
        %1901 = vmatpush1.bf16.msra.mxu0 0
        %1902 = vmatprep.subr.bf16.mxu0 0
        %1903 = vmatpush1.bf16.msra.mxu0 0
        %1904 = vmatprep.subr.bf16.mxu0 0
        %1905 = vmatpush1.bf16.msra.mxu0 0
        %1906 = vmatprep.mubr.bf16.mxu0 %v1614
        %1907 = vmatmul.mubr.bf16.gmra.mrb[0].mxu0 %v1048
        %v1908 = vpop.f32.mrb[0].mxu0
        %v1909 = vadd.f32 0.0, %v1908
        %v1910 = vpop.f32.mrb[0].mxu0
        %v1911 = vadd.f32 0.0, %v1910
        %v1912 = vpop.f32.mrb[0].mxu0
        %v1913 = vadd.f32 0.0, %v1912
        %v1914 = vpop.f32.mrb[0].mxu0
        %v1915 = vadd.f32 0.0, %v1914
        %1916 = vdwg.mxu0
        %1917 = vmatprep.subr.bf16.mxu0 0
        %1918 = vmatpush1.bf16.msra.mxu0 %v1403
        %1919 = vmatprep.subr.bf16.mxu0 0
        %1920 = vmatpush1.bf16.msra.mxu0 %v1416
        %1921 = vmatprep.subr.bf16.mxu0 0
        %1922 = vmatpush1.bf16.msra.mxu0 %v1429
        %1923 = vmatprep.subr.bf16.mxu0 0
        %1924 = vmatpush1.bf16.msra.mxu0 %v1442
        %1925 = vmatprep.subr.bf16.mxu0 0
        %1926 = vmatpush1.bf16.msra.mxu0 %v1455
        %1927 = vmatprep.subr.bf16.mxu0 0
        %1928 = vmatpush1.bf16.msra.mxu0 %v1468
        %1929 = vmatprep.subr.bf16.mxu0 0
        %1930 = vmatpush1.bf16.msra.mxu0 %v1481
        %1931 = vmatprep.subr.bf16.mxu0 0
        %1932 = vmatpush1.bf16.msra.mxu0 %v1494
        %1933 = vmatprep.subr.bf16.mxu0 0
        %1934 = vmatpush1.bf16.msra.mxu0 %v1657
        %1935 = vmatprep.subr.bf16.mxu0 0
        %1936 = vmatpush1.bf16.msra.mxu0 0
        %1937 = vmatprep.subr.bf16.mxu0 0
        %1938 = vmatpush1.bf16.msra.mxu0 0
        %1939 = vmatprep.subr.bf16.mxu0 0
        %1940 = vmatpush1.bf16.msra.mxu0 0
        %1941 = vmatprep.subr.bf16.mxu0 0
        %1942 = vmatpush1.bf16.msra.mxu0 0
        %1943 = vmatprep.subr.bf16.mxu0 0
        %1944 = vmatpush1.bf16.msra.mxu0 0
        %1945 = vmatprep.subr.bf16.mxu0 0
        %1946 = vmatpush1.bf16.msra.mxu0 0
        %1947 = vmatprep.subr.bf16.mxu0 0
        %1948 = vmatpush1.bf16.msra.mxu0 0
        %1949 = vmatprep.mubr.bf16.mxu0 %v1614
        %1950 = vmatmul.mubr.bf16.gmra.mrb[0].mxu0 %v1048
        %v1951 = vpop.f32.mrb[0].mxu0
        %v1952 = vadd.f32 0.0, %v1951
        %v1953 = vpop.f32.mrb[0].mxu0
        %v1954 = vpop.f32.mrb[0].mxu0
        %v1955 = vadd.f32 0.0, %v1954
        %v1956 = vpop.f32.mrb[0].mxu0
        %1957 = vdwg.mxu0
        %v1958 = vld [vmem:[%s874] sm:$0xf]
        %v1959 = vld [vmem:[%s874 + $0x4] sm:$0xf]
        %v1960 = vld [vmem:[%s874 + $0x8] sm:$0xf]
        %v1961 = vld [vmem:[%s874 + $0xc] sm:$0xf]
        %v1962 = vld [vmem:[%s874 + $0x10] sm:$0xf]
        %v1963 = vld [vmem:[%s874 + $0x14] sm:$0xf]
        %v1964 = vld [vmem:[%s874 + $0x18] sm:$0xf]
        %v1965 = vld [vmem:[%s874 + $0x1c] sm:$0xf]
        %v1966 = vld [vmem:[%s874 + $0x20] sm:$0xf]
        %v1967 = vld [vmem:[%s874 + $0x24] sm:$0xf]
        %v1968 = vld [vmem:[%s874 + $0x28] sm:$0xf]
        %v1969 = vld [vmem:[%s874 + $0x2c] sm:$0xf]
        %v1970 = vld [vmem:[%s874 + $0x30] sm:$0xf]
        %v1971 = vld [vmem:[%s874 + $0x34] sm:$0xf]
        %v1972 = vld [vmem:[%s874 + $0x38] sm:$0xf]
        %v1973 = vld [vmem:[%s874 + $0x3c] sm:$0xf]
        %v1974 = vld [vmem:[%s874 + $0x40] sm:$0xf]
        %v1992 = vunpack.c.l.b16 %v1958
        %v1993 = vunpack.c.l.b16 %v1959
        %v1994 = vunpack.c.l.b16 %v1960
        %v1995 = vunpack.c.l.b16 %v1961
        %v1996 = vunpack.c.l.b16 %v1962
        %v1997 = vunpack.c.l.b16 %v1963
        %v1998 = vunpack.c.l.b16 %v1964
        %v1999 = vunpack.c.l.b16 %v1965
        %v2000 = vunpack.c.l.b16 %v1966
        %v2001 = vunpack.c.l.b16 %v1967
        %v2002 = vunpack.c.l.b16 %v1968
        %v2003 = vunpack.c.l.b16 %v1969
        %v2004 = vunpack.c.l.b16 %v1970
        %v2005 = vunpack.c.l.b16 %v1971
        %v2006 = vunpack.c.l.b16 %v1972
        %v2007 = vunpack.c.l.b16 %v1973
        %v2008 = vunpack.c.l.b16 %v1974
        %v2009 = vpack.c.b16 %v1993, %v1992
        %v2010 = vpack.c.b16 %v1995, %v1994
        %v2011 = vpack.c.b16 %v1997, %v1996
        %v2012 = vpack.c.b16 %v1999, %v1998
        %v2013 = vpack.c.b16 %v2001, %v2000
        %v2014 = vpack.c.b16 %v2003, %v2002
        %v2015 = vpack.c.b16 %v2005, %v2004
        %v2016 = vpack.c.b16 %v2007, %v2006
        %v2017 = vpack.c.b16 %v2008, %v2008
        %v2027 = vand.u32 %v2017, %v1619
        %2029 = vmatprep.subr.bf16.mxu0 0
        %2030 = vmatpush1.bf16.msra.mxu0 %v2009
        %2031 = vmatprep.subr.bf16.mxu0 0
        %2032 = vmatpush1.bf16.msra.mxu0 %v2010
        %2033 = vmatprep.subr.bf16.mxu0 0
        %2034 = vmatpush1.bf16.msra.mxu0 %v2011
        %2035 = vmatprep.subr.bf16.mxu0 0
        %2036 = vmatpush1.bf16.msra.mxu0 %v2012
        %2037 = vmatprep.subr.bf16.mxu0 0
        %2038 = vmatpush1.bf16.msra.mxu0 %v2013
        %2039 = vmatprep.subr.bf16.mxu0 0
        %2040 = vmatpush1.bf16.msra.mxu0 %v2014
        %2041 = vmatprep.subr.bf16.mxu0 0
        %2042 = vmatpush1.bf16.msra.mxu0 %v2015
        %2043 = vmatprep.subr.bf16.mxu0 0
        %2044 = vmatpush1.bf16.msra.mxu0 %v2016
        %2045 = vmatprep.subr.bf16.mxu0 0
        %2046 = vmatpush1.bf16.msra.mxu0 %v2027
        %2047 = vmatprep.subr.bf16.mxu0 0
        %2048 = vmatpush1.bf16.msra.mxu0 0
        %2049 = vmatprep.subr.bf16.mxu0 0
        %2050 = vmatpush1.bf16.msra.mxu0 0
        %2051 = vmatprep.subr.bf16.mxu0 0
        %2052 = vmatpush1.bf16.msra.mxu0 0
        %2053 = vmatprep.subr.bf16.mxu0 0
        %2054 = vmatpush1.bf16.msra.mxu0 0
        %2055 = vmatprep.subr.bf16.mxu0 0
        %2056 = vmatpush1.bf16.msra.mxu0 0
        %2057 = vmatprep.subr.bf16.mxu0 0
        %2058 = vmatpush1.bf16.msra.mxu0 0
        %2059 = vmatprep.subr.bf16.mxu0 0
        %2060 = vmatpush1.bf16.msra.mxu0 0
        %2061 = vmatprep.mubr.bf16.mxu0 %v1614
        %2062 = vmatmul.mubr.bf16.gmra.mrb[0].mxu0 %v1048
        %v2063 = vpop.f32.mrb[0].mxu0
        %v2064 = vadd.f32 0.0, %v2063
        %v2065 = vpop.f32.mrb[0].mxu0
        %v2066 = vpop.f32.mrb[0].mxu0
        %v2067 = vadd.f32 0.0, %v2066
        %v2068 = vpop.f32.mrb[0].mxu0
        %2069 = vdwg.mxu0
        %v2070 = vld [vmem:[#allocation2] sm:$0x1]
        %v2085 = vrot.slane %v1694, 1
        %v2086 = vrot.slane %v1696, 1
        %v2087 = vrot.slane %v1737, 1
        %v2088 = vrot.slane %v1739, 1
        %v2089 = vrot.slane %v1780, 1
        %v2090 = vrot.slane %v1782, 1
        %v2091 = vrot.slane %v1823, 1
        %v2092 = vrot.slane %v1825, 1
        %v2093 = vrot.slane %v1866, 1
        %v2094 = vrot.slane %v1868, 1
        %v2095 = vrot.slane %v1909, 1
        %v2096 = vrot.slane %v1911, 1
        %v2097 = vrot.slane %v1952, 1
        %v2098 = vrot.slane %v2064, 1
        %2099 = vrot.lane.b32.xlu0 %v2085, 127
        %v2100 = vpop.permute.xlu0 %2099
        %2101 = vrot.lane.b32.xlu0 %v2086, 127
        %v2102 = vpop.permute.xlu0 %2101
        %2103 = vrot.lane.b32.xlu0 %v2087, 127
        %v2104 = vpop.permute.xlu0 %2103
        %2105 = vrot.lane.b32.xlu0 %v2088, 127
        %v2106 = vpop.permute.xlu0 %2105
        %2107 = vrot.lane.b32.xlu0 %v2089, 127
        %v2108 = vpop.permute.xlu0 %2107
        %2109 = vrot.lane.b32.xlu0 %v2090, 127
        %v2110 = vpop.permute.xlu0 %2109
        %2111 = vrot.lane.b32.xlu0 %v2091, 127
        %v2112 = vpop.permute.xlu0 %2111
        %2113 = vrot.lane.b32.xlu0 %v2092, 127
        %v2114 = vpop.permute.xlu0 %2113
        %2115 = vrot.lane.b32.xlu0 %v2093, 127
        %v2116 = vpop.permute.xlu0 %2115
        %2117 = vrot.lane.b32.xlu0 %v2094, 127
        %v2118 = vpop.permute.xlu0 %2117
        %2119 = vrot.lane.b32.xlu0 %v2095, 127
        %v2120 = vpop.permute.xlu0 %2119
        %2121 = vrot.lane.b32.xlu0 %v2096, 127
        %v2122 = vpop.permute.xlu0 %2121
        %2123 = vrot.lane.b32.xlu0 %v2097, 127
        %v2124 = vpop.permute.xlu0 %2123
        %2125 = vrot.lane.b32.xlu0 %v2098, 127
        %v2126 = vpop.permute.xlu0 %2125
        %vm2127 = vcmask 1039360
        %v2128 = vsel %vm2127, %v2100, %v2102
        %v2129 = vsel %vm2127, %v2102, %v2104
        %v2130 = vsel %vm2127, %v2104, %v2106
        %v2131 = vsel %vm2127, %v2106, %v2108
        %v2132 = vsel %vm2127, %v2108, %v2110
        %v2133 = vsel %vm2127, %v2110, %v2112
        %v2134 = vsel %vm2127, %v2112, %v2114
        %v2135 = vsel %vm2127, %v2114, %v2116
        %v2136 = vsel %vm2127, %v2116, %v2118
        %v2137 = vsel %vm2127, %v2118, %v2120
        %v2138 = vsel %vm2127, %v2120, %v2122
        %v2139 = vsel %vm2127, %v2122, %v2124
        %v2140 = vsel %vm2127, %v2124, %v2126
        %v2155 = vadd.f32 %v1694, %v2128
        %v2156 = vadd.f32 %v1696, %v2129
        %v2157 = vadd.f32 %v1737, %v2130
        %v2158 = vadd.f32 %v1739, %v2131
        %v2159 = vadd.f32 %v1780, %v2132
        %v2160 = vadd.f32 %v1782, %v2133
        %v2161 = vadd.f32 %v1823, %v2134
        %v2162 = vadd.f32 %v1825, %v2135
        %v2163 = vadd.f32 %v1866, %v2136
        %v2164 = vadd.f32 %v1868, %v2137
        %v2165 = vadd.f32 %v1909, %v2138
        %v2166 = vadd.f32 %v1911, %v2139
        %v2167 = vadd.f32 %v1952, %v2140
        %v2168 = vadd.f32 %v2064, %v2126
        %v2169 = vrot.slane %v1694, 2
        %v2170 = vrot.slane %v1696, 2
        %v2171 = vrot.slane %v1737, 2
        %v2172 = vrot.slane %v1739, 2
        %v2173 = vrot.slane %v1780, 2
        %v2174 = vrot.slane %v1782, 2
        %v2175 = vrot.slane %v1823, 2
        %v2176 = vrot.slane %v1825, 2
        %v2177 = vrot.slane %v1866, 2
        %v2178 = vrot.slane %v1868, 2
        %v2179 = vrot.slane %v1909, 2
        %v2180 = vrot.slane %v1911, 2
        %v2181 = vrot.slane %v1952, 2
        %v2182 = vrot.slane %v2064, 2
        %2183 = vrot.lane.b32.xlu0 %v2169, 126
        %v2184 = vpop.permute.xlu0 %2183
        %2185 = vrot.lane.b32.xlu0 %v2170, 126
        %v2186 = vpop.permute.xlu0 %2185
        %2187 = vrot.lane.b32.xlu0 %v2171, 126
        %v2188 = vpop.permute.xlu0 %2187
        %2189 = vrot.lane.b32.xlu0 %v2172, 126
        %v2190 = vpop.permute.xlu0 %2189
        %2191 = vrot.lane.b32.xlu0 %v2173, 126
        %v2192 = vpop.permute.xlu0 %2191
        %2193 = vrot.lane.b32.xlu0 %v2174, 126
        %v2194 = vpop.permute.xlu0 %2193
        %2195 = vrot.lane.b32.xlu0 %v2175, 126
        %v2196 = vpop.permute.xlu0 %2195
        %2197 = vrot.lane.b32.xlu0 %v2176, 126
        %v2198 = vpop.permute.xlu0 %2197
        %2199 = vrot.lane.b32.xlu0 %v2177, 126
        %v2200 = vpop.permute.xlu0 %2199
        %2201 = vrot.lane.b32.xlu0 %v2178, 126
        %v2202 = vpop.permute.xlu0 %2201
        %2203 = vrot.lane.b32.xlu0 %v2179, 126
        %v2204 = vpop.permute.xlu0 %2203
        %2205 = vrot.lane.b32.xlu0 %v2180, 126
        %v2206 = vpop.permute.xlu0 %2205
        %2207 = vrot.lane.b32.xlu0 %v2181, 126
        %v2208 = vpop.permute.xlu0 %2207
        %2209 = vrot.lane.b32.xlu0 %v2182, 126
        %v2210 = vpop.permute.xlu0 %2209
        %vm2211 = vcmask 1031168
        %v2212 = vsel %vm2211, %v2184, %v2186
        %v2213 = vsel %vm2211, %v2186, %v2188
        %v2214 = vsel %vm2211, %v2188, %v2190
        %v2215 = vsel %vm2211, %v2190, %v2192
        %v2216 = vsel %vm2211, %v2192, %v2194
        %v2217 = vsel %vm2211, %v2194, %v2196
        %v2218 = vsel %vm2211, %v2196, %v2198
        %v2219 = vsel %vm2211, %v2198, %v2200
        %v2220 = vsel %vm2211, %v2200, %v2202
        %v2221 = vsel %vm2211, %v2202, %v2204
        %v2222 = vsel %vm2211, %v2204, %v2206
        %v2223 = vsel %vm2211, %v2206, %v2208
        %v2224 = vsel %vm2211, %v2208, %v2210
        %v2239 = vadd.f32 %v2155, %v2212
        %v2240 = vadd.f32 %v2156, %v2213
        %v2241 = vadd.f32 %v2157, %v2214
        %v2242 = vadd.f32 %v2158, %v2215
        %v2243 = vadd.f32 %v2159, %v2216
        %v2244 = vadd.f32 %v2160, %v2217
        %v2245 = vadd.f32 %v2161, %v2218
        %v2246 = vadd.f32 %v2162, %v2219
        %v2247 = vadd.f32 %v2163, %v2220
        %v2248 = vadd.f32 %v2164, %v2221
        %v2249 = vadd.f32 %v2165, %v2222
        %v2250 = vadd.f32 %v2166, %v2223
        %v2251 = vadd.f32 %v2167, %v2224
        %v2252 = vadd.f32 %v2168, %v2210
        %v2253 = vrot.slane %v1694, 3
        %v2254 = vrot.slane %v1696, 3
        %v2255 = vrot.slane %v1737, 3
        %v2256 = vrot.slane %v1739, 3
        %v2257 = vrot.slane %v1780, 3
        %v2258 = vrot.slane %v1782, 3
        %v2259 = vrot.slane %v1823, 3
        %v2260 = vrot.slane %v1825, 3
        %v2261 = vrot.slane %v1866, 3
        %v2262 = vrot.slane %v1868, 3
        %v2263 = vrot.slane %v1909, 3
        %v2264 = vrot.slane %v1911, 3
        %v2265 = vrot.slane %v1952, 3
        %v2266 = vrot.slane %v2064, 3
        %2267 = vrot.lane.b32.xlu0 %v2253, 125
        %v2268 = vpop.permute.xlu0 %2267
        %2269 = vrot.lane.b32.xlu0 %v2254, 125
        %v2270 = vpop.permute.xlu0 %2269
        %2271 = vrot.lane.b32.xlu0 %v2255, 125
        %v2272 = vpop.permute.xlu0 %2271
        %2273 = vrot.lane.b32.xlu0 %v2256, 125
        %v2274 = vpop.permute.xlu0 %2273
        %2275 = vrot.lane.b32.xlu0 %v2257, 125
        %v2276 = vpop.permute.xlu0 %2275
        %2277 = vrot.lane.b32.xlu0 %v2258, 125
        %v2278 = vpop.permute.xlu0 %2277
        %2279 = vrot.lane.b32.xlu0 %v2259, 125
        %v2280 = vpop.permute.xlu0 %2279
        %2281 = vrot.lane.b32.xlu0 %v2260, 125
        %v2282 = vpop.permute.xlu0 %2281
        %2283 = vrot.lane.b32.xlu0 %v2261, 125
        %v2284 = vpop.permute.xlu0 %2283
        %2285 = vrot.lane.b32.xlu0 %v2262, 125
        %v2286 = vpop.permute.xlu0 %2285
        %2287 = vrot.lane.b32.xlu0 %v2263, 125
        %v2288 = vpop.permute.xlu0 %2287
        %2289 = vrot.lane.b32.xlu0 %v2264, 125
        %v2290 = vpop.permute.xlu0 %2289
        %2291 = vrot.lane.b32.xlu0 %v2265, 125
        %v2292 = vpop.permute.xlu0 %2291
        %2293 = vrot.lane.b32.xlu0 %v2266, 125
        %v2294 = vpop.permute.xlu0 %2293
        %vm2295 = vcmask 1022976
        %v2296 = vsel %vm2295, %v2268, %v2270
        %v2297 = vsel %vm2295, %v2270, %v2272
        %v2298 = vsel %vm2295, %v2272, %v2274
        %v2299 = vsel %vm2295, %v2274, %v2276
        %v2300 = vsel %vm2295, %v2276, %v2278
        %v2301 = vsel %vm2295, %v2278, %v2280
        %v2302 = vsel %vm2295, %v2280, %v2282
        %v2303 = vsel %vm2295, %v2282, %v2284
        %v2304 = vsel %vm2295, %v2284, %v2286
        %v2305 = vsel %vm2295, %v2286, %v2288
        %v2306 = vsel %vm2295, %v2288, %v2290
        %v2307 = vsel %vm2295, %v2290, %v2292
        %v2308 = vsel %vm2295, %v2292, %v2294
        %v2323 = vadd.f32 %v2239, %v2296
        %v2324 = vadd.f32 %v2240, %v2297
        %v2325 = vadd.f32 %v2241, %v2298
        %v2326 = vadd.f32 %v2242, %v2299
        %v2327 = vadd.f32 %v2243, %v2300
        %v2328 = vadd.f32 %v2244, %v2301
        %v2329 = vadd.f32 %v2245, %v2302
        %v2330 = vadd.f32 %v2246, %v2303
        %v2331 = vadd.f32 %v2247, %v2304
        %v2332 = vadd.f32 %v2248, %v2305
        %v2333 = vadd.f32 %v2249, %v2306
        %v2334 = vadd.f32 %v2250, %v2307
        %v2335 = vadd.f32 %v2251, %v2308
        %v2336 = vadd.f32 %v2252, %v2294
        %2338 = vset.pattern.permute.xlu0 0
        %2339 = vperm.xlu0 %2338, %v2070
        %v2340 = vpop.permute.xlu0 %2339
        %v2342 = vlaneseq
        %v2343 = vshrl.u32 %v2342, 7
        %v2344 = vsub.s32 0, %v2343
        %v2345 = vrot.slane %v2340, %v2344
        %v2346 = vadd.f32 %v2323, %v2345
        %v2347 = vadd.f32 %v2324, %v2345
        %v2348 = vadd.f32 %v2325, %v2345
        %v2349 = vadd.f32 %v2326, %v2345
        %v2350 = vadd.f32 %v2327, %v2345
        %v2351 = vadd.f32 %v2328, %v2345
        %v2352 = vadd.f32 %v2329, %v2345
        %v2353 = vadd.f32 %v2330, %v2345
        %v2354 = vadd.f32 %v2331, %v2345
        %v2355 = vadd.f32 %v2332, %v2345
        %v2356 = vadd.f32 %v2333, %v2345
        %v2357 = vadd.f32 %v2334, %v2345
        %v2358 = vadd.f32 %v2335, %v2345
        %v2359 = vadd.f32 %v2336, %v2345
        %v2360 = vmax.f32 %v2346, 0.0
        %v2361 = vmax.f32 %v2347, 0.0
        %v2362 = vmax.f32 %v2348, 0.0
        %v2363 = vmax.f32 %v2349, 0.0
        %v2364 = vmax.f32 %v2350, 0.0
        %v2365 = vmax.f32 %v2351, 0.0
        %v2366 = vmax.f32 %v2352, 0.0
        %v2367 = vmax.f32 %v2353, 0.0
        %v2368 = vmax.f32 %v2354, 0.0
        %v2369 = vmax.f32 %v2355, 0.0
        %v2370 = vmax.f32 %v2356, 0.0
        %v2371 = vmax.f32 %v2357, 0.0
        %v2372 = vmax.f32 %v2358, 0.0
        %v2373 = vmax.f32 %v2359, 0.0
        %v2388 = vrot.slane %v1698, 1
        %v2389 = vrot.slane %v1700, 1
        %v2390 = vrot.slane %v1741, 1
        %v2391 = vrot.slane %v1743, 1
        %v2392 = vrot.slane %v1784, 1
        %v2393 = vrot.slane %v1786, 1
        %v2394 = vrot.slane %v1827, 1
        %v2395 = vrot.slane %v1829, 1
        %v2396 = vrot.slane %v1870, 1
        %v2397 = vrot.slane %v1872, 1
        %v2398 = vrot.slane %v1913, 1
        %v2399 = vrot.slane %v1915, 1
        %v2400 = vrot.slane %v1955, 1
        %v2401 = vrot.slane %v2067, 1
        %2402 = vrot.lane.b32.xlu0 %v2388, 127
        %v2403 = vpop.permute.xlu0 %2402
        %2404 = vrot.lane.b32.xlu0 %v2389, 127
        %v2405 = vpop.permute.xlu0 %2404
        %2406 = vrot.lane.b32.xlu0 %v2390, 127
        %v2407 = vpop.permute.xlu0 %2406
        %2408 = vrot.lane.b32.xlu0 %v2391, 127
        %v2409 = vpop.permute.xlu0 %2408
        %2410 = vrot.lane.b32.xlu0 %v2392, 127
        %v2411 = vpop.permute.xlu0 %2410
        %2412 = vrot.lane.b32.xlu0 %v2393, 127
        %v2413 = vpop.permute.xlu0 %2412
        %2414 = vrot.lane.b32.xlu0 %v2394, 127
        %v2415 = vpop.permute.xlu0 %2414
        %2416 = vrot.lane.b32.xlu0 %v2395, 127
        %v2417 = vpop.permute.xlu0 %2416
        %2418 = vrot.lane.b32.xlu0 %v2396, 127
        %v2419 = vpop.permute.xlu0 %2418
        %2420 = vrot.lane.b32.xlu0 %v2397, 127
        %v2421 = vpop.permute.xlu0 %2420
        %2422 = vrot.lane.b32.xlu0 %v2398, 127
        %v2423 = vpop.permute.xlu0 %2422
        %2424 = vrot.lane.b32.xlu0 %v2399, 127
        %v2425 = vpop.permute.xlu0 %2424
        %2426 = vrot.lane.b32.xlu0 %v2400, 127
        %v2427 = vpop.permute.xlu0 %2426
        %2428 = vrot.lane.b32.xlu0 %v2401, 127
        %v2429 = vpop.permute.xlu0 %2428
        %v2430 = vsel %vm2127, %v2403, %v2405
        %v2431 = vsel %vm2127, %v2405, %v2407
        %v2432 = vsel %vm2127, %v2407, %v2409
        %v2433 = vsel %vm2127, %v2409, %v2411
        %v2434 = vsel %vm2127, %v2411, %v2413
        %v2435 = vsel %vm2127, %v2413, %v2415
        %v2436 = vsel %vm2127, %v2415, %v2417
        %v2437 = vsel %vm2127, %v2417, %v2419
        %v2438 = vsel %vm2127, %v2419, %v2421
        %v2439 = vsel %vm2127, %v2421, %v2423
        %v2440 = vsel %vm2127, %v2423, %v2425
        %v2441 = vsel %vm2127, %v2425, %v2427
        %v2442 = vsel %vm2127, %v2427, %v2429
        %v2457 = vadd.f32 %v1698, %v2430
        %v2458 = vadd.f32 %v1700, %v2431
        %v2459 = vadd.f32 %v1741, %v2432
        %v2460 = vadd.f32 %v1743, %v2433
        %v2461 = vadd.f32 %v1784, %v2434
        %v2462 = vadd.f32 %v1786, %v2435
        %v2463 = vadd.f32 %v1827, %v2436
        %v2464 = vadd.f32 %v1829, %v2437
        %v2465 = vadd.f32 %v1870, %v2438
        %v2466 = vadd.f32 %v1872, %v2439
        %v2467 = vadd.f32 %v1913, %v2440
        %v2468 = vadd.f32 %v1915, %v2441
        %v2469 = vadd.f32 %v1955, %v2442
        %v2470 = vadd.f32 %v2067, %v2429
        %v2471 = vrot.slane %v1698, 2
        %v2472 = vrot.slane %v1700, 2
        %v2473 = vrot.slane %v1741, 2
        %v2474 = vrot.slane %v1743, 2
        %v2475 = vrot.slane %v1784, 2
        %v2476 = vrot.slane %v1786, 2
        %v2477 = vrot.slane %v1827, 2
        %v2478 = vrot.slane %v1829, 2
        %v2479 = vrot.slane %v1870, 2
        %v2480 = vrot.slane %v1872, 2
        %v2481 = vrot.slane %v1913, 2
        %v2482 = vrot.slane %v1915, 2
        %v2483 = vrot.slane %v1955, 2
        %v2484 = vrot.slane %v2067, 2
        %2485 = vrot.lane.b32.xlu0 %v2471, 126
        %v2486 = vpop.permute.xlu0 %2485
        %2487 = vrot.lane.b32.xlu0 %v2472, 126
        %v2488 = vpop.permute.xlu0 %2487
        %2489 = vrot.lane.b32.xlu0 %v2473, 126
        %v2490 = vpop.permute.xlu0 %2489
        %2491 = vrot.lane.b32.xlu0 %v2474, 126
        %v2492 = vpop.permute.xlu0 %2491
        %2493 = vrot.lane.b32.xlu0 %v2475, 126
        %v2494 = vpop.permute.xlu0 %2493
        %2495 = vrot.lane.b32.xlu0 %v2476, 126
        %v2496 = vpop.permute.xlu0 %2495
        %2497 = vrot.lane.b32.xlu0 %v2477, 126
        %v2498 = vpop.permute.xlu0 %2497
        %2499 = vrot.lane.b32.xlu0 %v2478, 126
        %v2500 = vpop.permute.xlu0 %2499
        %2501 = vrot.lane.b32.xlu0 %v2479, 126
        %v2502 = vpop.permute.xlu0 %2501
        %2503 = vrot.lane.b32.xlu0 %v2480, 126
        %v2504 = vpop.permute.xlu0 %2503
        %2505 = vrot.lane.b32.xlu0 %v2481, 126
        %v2506 = vpop.permute.xlu0 %2505
        %2507 = vrot.lane.b32.xlu0 %v2482, 126
        %v2508 = vpop.permute.xlu0 %2507
        %2509 = vrot.lane.b32.xlu0 %v2483, 126
        %v2510 = vpop.permute.xlu0 %2509
        %2511 = vrot.lane.b32.xlu0 %v2484, 126
        %v2512 = vpop.permute.xlu0 %2511
        %v2513 = vsel %vm2211, %v2486, %v2488
        %v2514 = vsel %vm2211, %v2488, %v2490
        %v2515 = vsel %vm2211, %v2490, %v2492
        %v2516 = vsel %vm2211, %v2492, %v2494
        %v2517 = vsel %vm2211, %v2494, %v2496
        %v2518 = vsel %vm2211, %v2496, %v2498
        %v2519 = vsel %vm2211, %v2498, %v2500
        %v2520 = vsel %vm2211, %v2500, %v2502
        %v2521 = vsel %vm2211, %v2502, %v2504
        %v2522 = vsel %vm2211, %v2504, %v2506
        %v2523 = vsel %vm2211, %v2506, %v2508
        %v2524 = vsel %vm2211, %v2508, %v2510
        %v2525 = vsel %vm2211, %v2510, %v2512
        %v2540 = vadd.f32 %v2457, %v2513
        %v2541 = vadd.f32 %v2458, %v2514
        %v2542 = vadd.f32 %v2459, %v2515
        %v2543 = vadd.f32 %v2460, %v2516
        %v2544 = vadd.f32 %v2461, %v2517
        %v2545 = vadd.f32 %v2462, %v2518
        %v2546 = vadd.f32 %v2463, %v2519
        %v2547 = vadd.f32 %v2464, %v2520
        %v2548 = vadd.f32 %v2465, %v2521
        %v2549 = vadd.f32 %v2466, %v2522
        %v2550 = vadd.f32 %v2467, %v2523
        %v2551 = vadd.f32 %v2468, %v2524
        %v2552 = vadd.f32 %v2469, %v2525
        %v2553 = vadd.f32 %v2470, %v2512
        %v2554 = vrot.slane %v1698, 3
        %v2555 = vrot.slane %v1700, 3
        %v2556 = vrot.slane %v1741, 3
        %v2557 = vrot.slane %v1743, 3
        %v2558 = vrot.slane %v1784, 3
        %v2559 = vrot.slane %v1786, 3
        %v2560 = vrot.slane %v1827, 3
        %v2561 = vrot.slane %v1829, 3
        %v2562 = vrot.slane %v1870, 3
        %v2563 = vrot.slane %v1872, 3
        %v2564 = vrot.slane %v1913, 3
        %v2565 = vrot.slane %v1915, 3
        %v2566 = vrot.slane %v1955, 3
        %v2567 = vrot.slane %v2067, 3
        %2568 = vrot.lane.b32.xlu0 %v2554, 125
        %v2569 = vpop.permute.xlu0 %2568
        %2570 = vrot.lane.b32.xlu0 %v2555, 125
        %v2571 = vpop.permute.xlu0 %2570
        %2572 = vrot.lane.b32.xlu0 %v2556, 125
        %v2573 = vpop.permute.xlu0 %2572
        %2574 = vrot.lane.b32.xlu0 %v2557, 125
        %v2575 = vpop.permute.xlu0 %2574
        %2576 = vrot.lane.b32.xlu0 %v2558, 125
        %v2577 = vpop.permute.xlu0 %2576
        %2578 = vrot.lane.b32.xlu0 %v2559, 125
        %v2579 = vpop.permute.xlu0 %2578
        %2580 = vrot.lane.b32.xlu0 %v2560, 125
        %v2581 = vpop.permute.xlu0 %2580
        %2582 = vrot.lane.b32.xlu0 %v2561, 125
        %v2583 = vpop.permute.xlu0 %2582
        %2584 = vrot.lane.b32.xlu0 %v2562, 125
        %v2585 = vpop.permute.xlu0 %2584
        %2586 = vrot.lane.b32.xlu0 %v2563, 125
        %v2587 = vpop.permute.xlu0 %2586
        %2588 = vrot.lane.b32.xlu0 %v2564, 125
        %v2589 = vpop.permute.xlu0 %2588
        %2590 = vrot.lane.b32.xlu0 %v2565, 125
        %v2591 = vpop.permute.xlu0 %2590
        %2592 = vrot.lane.b32.xlu0 %v2566, 125
        %v2593 = vpop.permute.xlu0 %2592
        %2594 = vrot.lane.b32.xlu0 %v2567, 125
        %v2595 = vpop.permute.xlu0 %2594
        %v2596 = vsel %vm2295, %v2569, %v2571
        %v2597 = vsel %vm2295, %v2571, %v2573
        %v2598 = vsel %vm2295, %v2573, %v2575
        %v2599 = vsel %vm2295, %v2575, %v2577
        %v2600 = vsel %vm2295, %v2577, %v2579
        %v2601 = vsel %vm2295, %v2579, %v2581
        %v2602 = vsel %vm2295, %v2581, %v2583
        %v2603 = vsel %vm2295, %v2583, %v2585
        %v2604 = vsel %vm2295, %v2585, %v2587
        %v2605 = vsel %vm2295, %v2587, %v2589
        %v2606 = vsel %vm2295, %v2589, %v2591
        %v2607 = vsel %vm2295, %v2591, %v2593
        %v2608 = vsel %vm2295, %v2593, %v2595
        %v2623 = vadd.f32 %v2540, %v2596
        %v2624 = vadd.f32 %v2541, %v2597
        %v2625 = vadd.f32 %v2542, %v2598
        %v2626 = vadd.f32 %v2543, %v2599
        %v2627 = vadd.f32 %v2544, %v2600
        %v2628 = vadd.f32 %v2545, %v2601
        %v2629 = vadd.f32 %v2546, %v2602
        %v2630 = vadd.f32 %v2547, %v2603
        %v2631 = vadd.f32 %v2548, %v2604
        %v2632 = vadd.f32 %v2549, %v2605
        %v2633 = vadd.f32 %v2550, %v2606
        %v2634 = vadd.f32 %v2551, %v2607
        %v2635 = vadd.f32 %v2552, %v2608
        %v2636 = vadd.f32 %v2553, %v2595
        %v2637 = vadd.f32 %v2623, %v2345
        %v2638 = vadd.f32 %v2624, %v2345
        %v2639 = vadd.f32 %v2625, %v2345
        %v2640 = vadd.f32 %v2626, %v2345
        %v2641 = vadd.f32 %v2627, %v2345
        %v2642 = vadd.f32 %v2628, %v2345
        %v2643 = vadd.f32 %v2629, %v2345
        %v2644 = vadd.f32 %v2630, %v2345
        %v2645 = vadd.f32 %v2631, %v2345
        %v2646 = vadd.f32 %v2632, %v2345
        %v2647 = vadd.f32 %v2633, %v2345
        %v2648 = vadd.f32 %v2634, %v2345
        %v2649 = vadd.f32 %v2635, %v2345
        %v2650 = vadd.f32 %v2636, %v2345
        %v2651 = vmax.f32 %v2637, 0.0
        %v2652 = vmax.f32 %v2638, 0.0
        %v2653 = vmax.f32 %v2639, 0.0
        %v2654 = vmax.f32 %v2640, 0.0
        %v2655 = vmax.f32 %v2641, 0.0
        %v2656 = vmax.f32 %v2642, 0.0
        %v2657 = vmax.f32 %v2643, 0.0
        %v2658 = vmax.f32 %v2644, 0.0
        %v2659 = vmax.f32 %v2645, 0.0
        %v2660 = vmax.f32 %v2646, 0.0
        %v2661 = vmax.f32 %v2647, 0.0
        %v2662 = vmax.f32 %v2648, 0.0
        %v2663 = vmax.f32 %v2649, 0.0
        %v2664 = vmax.f32 %v2650, 0.0
        %v2679 = vrot.slane %v2360, 4
        %v2680 = vrot.slane %v2361, 4
        %v2681 = vrot.slane %v2362, 4
        %v2682 = vrot.slane %v2363, 4
        %v2683 = vrot.slane %v2364, 4
        %v2684 = vrot.slane %v2365, 4
        %v2685 = vrot.slane %v2366, 4
        %v2686 = vrot.slane %v2367, 4
        %v2687 = vrot.slane %v2368, 4
        %v2688 = vrot.slane %v2369, 4
        %v2689 = vrot.slane %v2370, 4
        %v2690 = vrot.slane %v2371, 4
        %v2691 = vrot.slane %v2372, 4
        %v2692 = vrot.slane %v2373, 4
        %v2707 = vmax.f32 %v2360, %v2679
        %v2708 = vmax.f32 %v2361, %v2680
        %v2709 = vmax.f32 %v2362, %v2681
        %v2710 = vmax.f32 %v2363, %v2682
        %v2711 = vmax.f32 %v2364, %v2683
        %v2712 = vmax.f32 %v2365, %v2684
        %v2713 = vmax.f32 %v2366, %v2685
        %v2714 = vmax.f32 %v2367, %v2686
        %v2715 = vmax.f32 %v2368, %v2687
        %v2716 = vmax.f32 %v2369, %v2688
        %v2717 = vmax.f32 %v2370, %v2689
        %v2718 = vmax.f32 %v2371, %v2690
        %v2719 = vmax.f32 %v2372, %v2691
        %v2720 = vmax.f32 %v2373, %v2692
        %v2721 = vmax.f32 %v2707, %v2651
        %v2722 = vmax.f32 %v2708, %v2652
        %v2723 = vmax.f32 %v2709, %v2653
        %v2724 = vmax.f32 %v2710, %v2654
        %v2725 = vmax.f32 %v2711, %v2655
        %v2726 = vmax.f32 %v2712, %v2656
        %v2727 = vmax.f32 %v2713, %v2657
        %v2728 = vmax.f32 %v2714, %v2658
        %v2729 = vmax.f32 %v2715, %v2659
        %v2730 = vmax.f32 %v2716, %v2660
        %v2731 = vmax.f32 %v2717, %v2661
        %v2732 = vmax.f32 %v2718, %v2662
        %v2733 = vmax.f32 %v2719, %v2663
        %v2734 = vmax.f32 %v2720, %v2664
        %2749 = vrot.lane.b32.xlu0 %v2721, 127
        %v2750 = vpop.permute.xlu0 %2749
        %2751 = vrot.lane.b32.xlu0 %v2722, 127
        %v2752 = vpop.permute.xlu0 %2751
        %2753 = vrot.lane.b32.xlu0 %v2723, 127
        %v2754 = vpop.permute.xlu0 %2753
        %2755 = vrot.lane.b32.xlu0 %v2724, 127
        %v2756 = vpop.permute.xlu0 %2755
        %2757 = vrot.lane.b32.xlu0 %v2725, 127
        %v2758 = vpop.permute.xlu0 %2757
        %2759 = vrot.lane.b32.xlu0 %v2726, 127
        %v2760 = vpop.permute.xlu0 %2759
        %2761 = vrot.lane.b32.xlu0 %v2727, 127
        %v2762 = vpop.permute.xlu0 %2761
        %2763 = vrot.lane.b32.xlu0 %v2728, 127
        %v2764 = vpop.permute.xlu0 %2763
        %2765 = vrot.lane.b32.xlu0 %v2729, 127
        %v2766 = vpop.permute.xlu0 %2765
        %2767 = vrot.lane.b32.xlu0 %v2730, 127
        %v2768 = vpop.permute.xlu0 %2767
        %2769 = vrot.lane.b32.xlu0 %v2731, 127
        %v2770 = vpop.permute.xlu0 %2769
        %2771 = vrot.lane.b32.xlu0 %v2732, 127
        %v2772 = vpop.permute.xlu0 %2771
        %2773 = vrot.lane.b32.xlu0 %v2733, 127
        %v2774 = vpop.permute.xlu0 %2773
        %2775 = vrot.lane.b32.xlu0 %v2734, 127
        %v2776 = vpop.permute.xlu0 %2775
        %v2777 = vsel %vm2127, %v2750, %v2752
        %v2778 = vsel %vm2127, %v2752, %v2754
        %v2779 = vsel %vm2127, %v2754, %v2756
        %v2780 = vsel %vm2127, %v2756, %v2758
        %v2781 = vsel %vm2127, %v2758, %v2760
        %v2782 = vsel %vm2127, %v2760, %v2762
        %v2783 = vsel %vm2127, %v2762, %v2764
        %v2784 = vsel %vm2127, %v2764, %v2766
        %v2785 = vsel %vm2127, %v2766, %v2768
        %v2786 = vsel %vm2127, %v2768, %v2770
        %v2787 = vsel %vm2127, %v2770, %v2772
        %v2788 = vsel %vm2127, %v2772, %v2774
        %v2789 = vsel %vm2127, %v2774, %v2776
        %v2803 = vmax.f32 %v2721, %v2777
        %v2804 = vmax.f32 %v2722, %v2778
        %v2805 = vmax.f32 %v2723, %v2779
        %v2806 = vmax.f32 %v2724, %v2780
        %v2807 = vmax.f32 %v2725, %v2781
        %v2808 = vmax.f32 %v2726, %v2782
        %v2809 = vmax.f32 %v2727, %v2783
        %v2810 = vmax.f32 %v2728, %v2784
        %v2811 = vmax.f32 %v2729, %v2785
        %v2812 = vmax.f32 %v2730, %v2786
        %v2813 = vmax.f32 %v2731, %v2787
        %v2814 = vmax.f32 %v2732, %v2788
        %v2815 = vmax.f32 %v2733, %v2789
        %2816 = vrot.lane.b32.xlu0 %v2360, 127
        %v2817 = vpop.permute.xlu0 %2816
        %2818 = vrot.lane.b32.xlu0 %v2361, 127
        %v2819 = vpop.permute.xlu0 %2818
        %2820 = vrot.lane.b32.xlu0 %v2362, 127
        %v2821 = vpop.permute.xlu0 %2820
        %2822 = vrot.lane.b32.xlu0 %v2363, 127
        %v2823 = vpop.permute.xlu0 %2822
        %2824 = vrot.lane.b32.xlu0 %v2364, 127
        %v2825 = vpop.permute.xlu0 %2824
        %2826 = vrot.lane.b32.xlu0 %v2365, 127
        %v2827 = vpop.permute.xlu0 %2826
        %2828 = vrot.lane.b32.xlu0 %v2366, 127
        %v2829 = vpop.permute.xlu0 %2828
        %2830 = vrot.lane.b32.xlu0 %v2367, 127
        %v2831 = vpop.permute.xlu0 %2830
        %2832 = vrot.lane.b32.xlu0 %v2368, 127
        %v2833 = vpop.permute.xlu0 %2832
        %2834 = vrot.lane.b32.xlu0 %v2369, 127
        %v2835 = vpop.permute.xlu0 %2834
        %2836 = vrot.lane.b32.xlu0 %v2370, 127
        %v2837 = vpop.permute.xlu0 %2836
        %2838 = vrot.lane.b32.xlu0 %v2371, 127
        %v2839 = vpop.permute.xlu0 %2838
        %2840 = vrot.lane.b32.xlu0 %v2372, 127
        %v2841 = vpop.permute.xlu0 %2840
        %2842 = vrot.lane.b32.xlu0 %v2373, 127
        %v2843 = vpop.permute.xlu0 %2842
        %v2844 = vsel %vm2127, %v2817, %v2819
        %v2845 = vsel %vm2127, %v2819, %v2821
        %v2846 = vsel %vm2127, %v2821, %v2823
        %v2847 = vsel %vm2127, %v2823, %v2825
        %v2848 = vsel %vm2127, %v2825, %v2827
        %v2849 = vsel %vm2127, %v2827, %v2829
        %v2850 = vsel %vm2127, %v2829, %v2831
        %v2851 = vsel %vm2127, %v2831, %v2833
        %v2852 = vsel %vm2127, %v2833, %v2835
        %v2853 = vsel %vm2127, %v2835, %v2837
        %v2854 = vsel %vm2127, %v2837, %v2839
        %v2855 = vsel %vm2127, %v2839, %v2841
        %v2856 = vsel %vm2127, %v2841, %v2843
        %v2871 = vmax.f32 %v2721, %v2844
        %v2872 = vmax.f32 %v2722, %v2845
        %v2873 = vmax.f32 %v2723, %v2846
        %v2874 = vmax.f32 %v2724, %v2847
        %v2875 = vmax.f32 %v2725, %v2848
        %v2876 = vmax.f32 %v2726, %v2849
        %v2877 = vmax.f32 %v2727, %v2850
        %v2878 = vmax.f32 %v2728, %v2851
        %v2879 = vmax.f32 %v2729, %v2852
        %v2880 = vmax.f32 %v2730, %v2853
        %v2881 = vmax.f32 %v2731, %v2854
        %v2882 = vmax.f32 %v2732, %v2855
        %v2883 = vmax.f32 %v2733, %v2856
        %v2884 = vmax.f32 %v2734, %v2843
        %2899 = vrot.lane.b32.xlu0 %v2871, 126
        %v2900 = vpop.permute.xlu0 %2899
        %2901 = vrot.lane.b32.xlu0 %v2872, 126
        %v2902 = vpop.permute.xlu0 %2901
        %2903 = vrot.lane.b32.xlu0 %v2873, 126
        %v2904 = vpop.permute.xlu0 %2903
        %2905 = vrot.lane.b32.xlu0 %v2874, 126
        %v2906 = vpop.permute.xlu0 %2905
        %2907 = vrot.lane.b32.xlu0 %v2875, 126
        %v2908 = vpop.permute.xlu0 %2907
        %2909 = vrot.lane.b32.xlu0 %v2876, 126
        %v2910 = vpop.permute.xlu0 %2909
        %2911 = vrot.lane.b32.xlu0 %v2877, 126
        %v2912 = vpop.permute.xlu0 %2911
        %2913 = vrot.lane.b32.xlu0 %v2878, 126
        %v2914 = vpop.permute.xlu0 %2913
        %2915 = vrot.lane.b32.xlu0 %v2879, 126
        %v2916 = vpop.permute.xlu0 %2915
        %2917 = vrot.lane.b32.xlu0 %v2880, 126
        %v2918 = vpop.permute.xlu0 %2917
        %2919 = vrot.lane.b32.xlu0 %v2881, 126
        %v2920 = vpop.permute.xlu0 %2919
        %2921 = vrot.lane.b32.xlu0 %v2882, 126
        %v2922 = vpop.permute.xlu0 %2921
        %2923 = vrot.lane.b32.xlu0 %v2883, 126
        %v2924 = vpop.permute.xlu0 %2923
        %2925 = vrot.lane.b32.xlu0 %v2884, 126
        %v2926 = vpop.permute.xlu0 %2925
        %v2927 = vsel %vm2211, %v2900, %v2902
        %v2928 = vsel %vm2211, %v2902, %v2904
        %v2929 = vsel %vm2211, %v2904, %v2906
        %v2930 = vsel %vm2211, %v2906, %v2908
        %v2931 = vsel %vm2211, %v2908, %v2910
        %v2932 = vsel %vm2211, %v2910, %v2912
        %v2933 = vsel %vm2211, %v2912, %v2914
        %v2934 = vsel %vm2211, %v2914, %v2916
        %v2935 = vsel %vm2211, %v2916, %v2918
        %v2936 = vsel %vm2211, %v2918, %v2920
        %v2937 = vsel %vm2211, %v2920, %v2922
        %v2938 = vsel %vm2211, %v2922, %v2924
        %v2939 = vsel %vm2211, %v2924, %v2926
        %v2953 = vmax.f32 %v2803, %v2927
        %v2954 = vmax.f32 %v2804, %v2928
        %v2955 = vmax.f32 %v2805, %v2929
        %v2956 = vmax.f32 %v2806, %v2930
        %v2957 = vmax.f32 %v2807, %v2931
        %v2958 = vmax.f32 %v2808, %v2932
        %v2959 = vmax.f32 %v2809, %v2933
        %v2960 = vmax.f32 %v2810, %v2934
        %v2961 = vmax.f32 %v2811, %v2935
        %v2962 = vmax.f32 %v2812, %v2936
        %v2963 = vmax.f32 %v2813, %v2937
        %v2964 = vmax.f32 %v2814, %v2938
        %v2965 = vmax.f32 %v2815, %v2939
        %v2979 = vcombine.low %v2953, %v2954
        %v2980 = vcombine.low %v2955, %v2956
        %v2981 = vcombine.low %v2957, %v2958
        %v2982 = vcombine.low %v2959, %v2960
        %v2984 = vunpack.c.l.s4 1966171168
        %v2985 = vunpack.c.0.s8 %v2984
        %v2986 = vlaneseq
        %v2987 = vshrl.u32 %v2986, 7
        %v2988 = vsub.s32 %v2985, %v2987
        %v2989 = vrot.slane %v2979, %v2988
        %v2991 = vunpack.c.l.s4 1966171168
        %v2992 = vunpack.c.0.s8 %v2991
        %v2993 = vlaneseq
        %v2994 = vshrl.u32 %v2993, 7
        %v2995 = vsub.s32 %v2992, %v2994
        %v2996 = vrot.slane %v2980, %v2995
        %v2998 = vunpack.c.l.s4 1966171168
        %v2999 = vunpack.c.0.s8 %v2998
        %v3000 = vlaneseq
        %v3001 = vshrl.u32 %v3000, 7
        %v3002 = vsub.s32 %v2999, %v3001
        %v3003 = vrot.slane %v2981, %v3002
        %v3005 = vunpack.c.l.s4 1966171168
        %v3006 = vunpack.c.0.s8 %v3005
        %v3007 = vlaneseq
        %v3008 = vshrl.u32 %v3007, 7
        %v3009 = vsub.s32 %v3006, %v3008
        %v3010 = vrot.slane %v2982, %v3009
        %v3011 = vcombine.low %v2989, %v2996
        %v3012 = vcombine.low %v3003, %v3010
        %v3014 = vunpack.c.l.s4 1966171168
        %v3015 = vunpack.c.0.s8 %v3014
        %v3016 = vlaneseq
        %v3017 = vshrl.u32 %v3016, 7
        %v3018 = vsub.s32 %v3015, %v3017
        %v3019 = vrot.slane %v3011, %v3018
        %v3021 = vunpack.c.l.s4 1966171168
        %v3022 = vunpack.c.0.s8 %v3021
        %v3023 = vlaneseq
        %v3024 = vshrl.u32 %v3023, 7
        %v3025 = vsub.s32 %v3022, %v3024
        %v3026 = vrot.slane %v3012, %v3025
        %v3027 = vcombine.low %v3019, %v3026
        %v3028 = vcombine.low %v2961, %v2962
        %v3029 = vcombine.low %v2963, %v2964
        %v3031 = vunpack.c.l.s4 1966171168
        %v3032 = vunpack.c.0.s8 %v3031
        %v3033 = vlaneseq
        %v3034 = vshrl.u32 %v3033, 7
        %v3035 = vsub.s32 %v3032, %v3034
        %v3036 = vrot.slane %v3028, %v3035
        %v3038 = vunpack.c.l.s4 1966171168
        %v3039 = vunpack.c.0.s8 %v3038
        %v3040 = vlaneseq
        %v3041 = vshrl.u32 %v3040, 7
        %v3042 = vsub.s32 %v3039, %v3041
        %v3043 = vrot.slane %v3029, %v3042
        %v3045 = vunpack.c.l.s4 1966171168
        %v3046 = vunpack.c.0.s8 %v3045
        %v3047 = vlaneseq
        %v3048 = vshrl.u32 %v3047, 7
        %v3049 = vsub.s32 %v3046, %v3048
        %v3050 = vrot.slane %v2965, %v3049
        %v3051 = vcombine.low %v3036, %v3043
        %v3053 = vunpack.c.l.s4 1966171168
        %v3054 = vunpack.c.0.s8 %v3053
        %v3055 = vlaneseq
        %v3056 = vshrl.u32 %v3055, 7
        %v3057 = vsub.s32 %v3054, %v3056
        %v3058 = vrot.slane %v3051, %v3057
        %v3060 = vunpack.c.l.s4 1966171168
        %v3061 = vunpack.c.0.s8 %v3060
        %v3062 = vlaneseq
        %v3063 = vshrl.u32 %v3062, 7
        %v3064 = vsub.s32 %v3061, %v3063
        %v3065 = vrot.slane %v3050, %v3064
        %v3066 = vcombine.low %v3058, %v3065
        %3069 = vst [vmem:[%s918] sm:$0xff] %v3027
        %v3070 = vlaneseq
        %vm3071 = vcmp.ge.s32.totalorder %v3070, 0
        %vm3072 = vcmp.lt.s32.totalorder %v3070, 640
        %vm3073 = vmand %vm3071, %vm3072
        %3074 = vst.msk [vmem:[%s918 + $0x8] sm:$0x1f] %vm3073, %v3066
        %s3075 = smul.u32 13, %s22
        %p3076 = scmp.lt.s32.totalorder %s21, 1
        %s3077 = scalar_select %p3076, %s21, 1
        %p3078 = scmp.lt.s32.totalorder %s3075, 51
        %s3079 = scalar_select %p3078, %s3075, 51
        %s3080 = smul.addr %s3077, 52
        %s3081 = sadd.s32 %s3079, %s3080
        %s3082 = scalar_lea.vmem %s4, %s3081
        // Predicated region
        $region144: #{_lambda_.2} parent=134 // pred_check
          %p3083 = pneg %p151
        $region145: #{_lambda_.2} parent=134 // pred_check_branch
          %3085 = sbr.rel (%p3083) target = $region147
        $region146: #{_lambda_.2} parent=134 // pred_region
          %s3086 = smul.u32 13, %s22
        $region147: #{_lambda_.2} parent=134 // pred_fallthru
          _
      $region135: #{_lambda_.2} parent=5 // pred_fallthru
        _
      %p3087 = scmp.le.s32.totalorder 2, %s12
      // Predicated region
      $region148: #{_lambda_.2} parent=5 // pred_check
        %p3088 = pneg %p3087
      $region149: #{_lambda_.2} parent=5 // pred_check_branch
        %3090 = sbr.rel (%p3088) target = $region151
      $region150: #{_lambda_.2} parent=5 // pred_region
        %s3091 = ssub.s32 %s12, 2
        // Predicated region
        $region152: #{_lambda_.2} parent=150 // pred_check
          %p3092 = pneg %p157
        $region153: #{_lambda_.2} parent=150 // pred_check_branch
          %3094 = sbr.rel (%p3092) target = $region155
        $region154: #{_lambda_.2} parent=150 // pred_region
          %s3095 = smul.u32 13, %s24
          %p3096 = scmp.lt.s32.totalorder %s23, 1
          %s3097 = scalar_select %p3096, %s23, 1
          %p3098 = scmp.lt.s32.totalorder %s3095, 51
          %s3099 = scalar_select %p3098, %s3095, 51
          %s3100 = smul.addr %s3097, 52
          %s3101 = sadd.s32 %s3099, %s3100
          %s3102 = scalar_lea.vmem %s4, %s3101
        $region155: #{_lambda_.2} parent=150 // pred_fallthru
          _
      $region151: #{_lambda_.2} parent=5 // pred_fallthru
        _
    $region6: #{_lambda_.2} parent=1 // loop_footer
      %s16 = sadd.s32 1, %s12
    $region7: #{_lambda_.2} parent=1 // loop_footer_branch
      %11 = sbr.rel target = $region3
    $region8: #{_lambda_.2} parent=1 // loop_exit
      _

// kernel: tile.6
$region0: #{tile.6}
  #allocation0 [shape = 's32[1]{0}', space=sflag, size = 0x4, scoped, tag = 'scoped memory for tile.6']
  %s0 = inlined_call_operand.vmem [shape: f32[8], index: 0, kind: input, shape index: {}]
  %s1 = inlined_call_operand.vmem [shape: f32[10,8], index: 1, kind: output, shape index: {}]
  // Predicated region
  $region2: #{tile.6} parent=0 // pred_check
    _
  $region3: #{tile.6} parent=0 // pred_check_branch
    %3 = sbr.rel (0) target = $region5
  $region4: #{tile.6} parent=0 // pred_region
    _
  $region5: #{tile.6} parent=0 // pred_fallthru
    _
  %v4 = vld [vmem:[%s0] ss:$0 sm:$0xff]
  %5 = vst [vmem:[%s1] sm:$0xff] %v4
  %s6 = scalar_lea.vmem %s1, 8
  %7 = vst [vmem:[%s6] sm:$0xff] %v4

// kernel: tile.0
$region0: #{tile.0}
  %s0 = inlined_call_operand.vmem [shape: f32[10,8], index: 0, kind: input, shape index: {}]
  %s1 = inlined_call_operand.vmem [shape: f32[80,1], index: 1, kind: output, shape index: {}]
  %v2 = vld [vmem:[%s0] sm:$0xff]
  %vm3 = vcmask 7168
  %4 = vst.msk [vmem:[%s1] ss:$8 sm:$0xf] %vm3, %v2
  %5 = vst.msk [vmem:[%s1] ss:$8 sm:$0xf0] %vm3, %v2
  %s6 = scalar_lea.vmem %s0, 8
  %v7 = vld [vmem:[%s6] sm:$0x3]
  %vm8 = vcmask 7168
  %s9 = scalar_lea.vmem %s1, 64
  %10 = vst.msk [vmem:[%s9] ss:$8 sm:$0x3] %vm8, %v7
  %v11 = vld [vmem:[%s0] sm:$0xff]
  %12 = vrot.lane.b32.xlu0 %v11, 127
  %v13 = vpop.permute.xlu0 %12
  %vm14 = vcmask 7168
  %s15 = scalar_lea.vmem %s1, 1
  %16 = vst.msk [vmem:[%s15] ss:$8 sm:$0xf] %vm14, %v13
  %s17 = scalar_lea.vmem %s1, 1
  %18 = vst.msk [vmem:[%s17] ss:$8 sm:$0xf0] %vm14, %v13
  %s19 = scalar_lea.vmem %s0, 8
  %v20 = vld [vmem:[%s19] sm:$0x3]
  %21 = vrot.lane.b32.xlu0 %v20, 127
  %v22 = vpop.permute.xlu0 %21
  %vm23 = vcmask 7168
  %s24 = scalar_lea.vmem %s1, 65
  %25 = vst.msk [vmem:[%s24] ss:$8 sm:$0x3] %vm23, %v22
  %v26 = vld [vmem:[%s0] sm:$0xff]
  %27 = vrot.lane.b32.xlu0 %v26, 126
  %v28 = vpop.permute.xlu0 %27
  %vm29 = vcmask 7168
  %s30 = scalar_lea.vmem %s1, 2
  %31 = vst.msk [vmem:[%s30] ss:$8 sm:$0xf] %vm29, %v28
  %s32 = scalar_lea.vmem %s1, 2
  %33 = vst.msk [vmem:[%s32] ss:$8 sm:$0xf0] %vm29, %v28
  %s34 = scalar_lea.vmem %s0, 8
  %v35 = vld [vmem:[%s34] sm:$0x3]
  %36 = vrot.lane.b32.xlu0 %v35, 126
  %v37 = vpop.permute.xlu0 %36
  %vm38 = vcmask 7168
  %s39 = scalar_lea.vmem %s1, 66
  %40 = vst.msk [vmem:[%s39] ss:$8 sm:$0x3] %vm38, %v37
  %v41 = vld [vmem:[%s0] sm:$0xff]
  %42 = vrot.lane.b32.xlu0 %v41, 125
  %v43 = vpop.permute.xlu0 %42
  %vm44 = vcmask 7168
  %s45 = scalar_lea.vmem %s1, 3
  %46 = vst.msk [vmem:[%s45] ss:$8 sm:$0xf] %vm44, %v43
  %s47 = scalar_lea.vmem %s1, 3
  %48 = vst.msk [vmem:[%s47] ss:$8 sm:$0xf0] %vm44, %v43
  %s49 = scalar_lea.vmem %s0, 8
  %v50 = vld [vmem:[%s49] sm:$0x3]
  %51 = vrot.lane.b32.xlu0 %v50, 125
  %v52 = vpop.permute.xlu0 %51
  %vm53 = vcmask 7168
  %s54 = scalar_lea.vmem %s1, 67
  %55 = vst.msk [vmem:[%s54] ss:$8 sm:$0x3] %vm53, %v52
  %v56 = vld [vmem:[%s0] sm:$0xff]
  %57 = vrot.lane.b32.xlu0 %v56, 124
  %v58 = vpop.permute.xlu0 %57
  %vm59 = vcmask 7168
  %s60 = scalar_lea.vmem %s1, 4
  %61 = vst.msk [vmem:[%s60] ss:$8 sm:$0xf] %vm59, %v58
  %s62 = scalar_lea.vmem %s1, 4
  %63 = vst.msk [vmem:[%s62] ss:$8 sm:$0xf0] %vm59, %v58
  %s64 = scalar_lea.vmem %s0, 8
  %v65 = vld [vmem:[%s64] sm:$0x3]
  %66 = vrot.lane.b32.xlu0 %v65, 124
  %v67 = vpop.permute.xlu0 %66
  %vm68 = vcmask 7168
  %s69 = scalar_lea.vmem %s1, 68
  %70 = vst.msk [vmem:[%s69] ss:$8 sm:$0x3] %vm68, %v67
  %v71 = vld [vmem:[%s0] sm:$0xff]
  %72 = vrot.lane.b32.xlu0 %v71, 123
  %v73 = vpop.permute.xlu0 %72
  %vm74 = vcmask 7168
  %s75 = scalar_lea.vmem %s1, 5
  %76 = vst.msk [vmem:[%s75] ss:$8 sm:$0xf] %vm74, %v73
  %s77 = scalar_lea.vmem %s1, 5
  %78 = vst.msk [vmem:[%s77] ss:$8 sm:$0xf0] %vm74, %v73
  %s79 = scalar_lea.vmem %s0, 8
  %v80 = vld [vmem:[%s79] sm:$0x3]
  %81 = vrot.lane.b32.xlu0 %v80, 123
  %v82 = vpop.permute.xlu0 %81
  %vm83 = vcmask 7168
  %s84 = scalar_lea.vmem %s1, 69
  %85 = vst.msk [vmem:[%s84] ss:$8 sm:$0x3] %vm83, %v82
  %v86 = vld [vmem:[%s0] sm:$0xff]
  %87 = vrot.lane.b32.xlu0 %v86, 122
  %v88 = vpop.permute.xlu0 %87
  %vm89 = vcmask 7168
  %s90 = scalar_lea.vmem %s1, 6
  %91 = vst.msk [vmem:[%s90] ss:$8 sm:$0xf] %vm89, %v88
  %s92 = scalar_lea.vmem %s1, 6
  %93 = vst.msk [vmem:[%s92] ss:$8 sm:$0xf0] %vm89, %v88
  %s94 = scalar_lea.vmem %s0, 8
  %v95 = vld [vmem:[%s94] sm:$0x3]
  %96 = vrot.lane.b32.xlu0 %v95, 122
  %v97 = vpop.permute.xlu0 %96
  %vm98 = vcmask 7168
  %s99 = scalar_lea.vmem %s1, 70
  %100 = vst.msk [vmem:[%s99] ss:$8 sm:$0x3] %vm98, %v97
  %v101 = vld [vmem:[%s0] sm:$0xff]
  %102 = vrot.lane.b32.xlu0 %v101, 121
  %v103 = vpop.permute.xlu0 %102
  %vm104 = vcmask 7168
  %s105 = scalar_lea.vmem %s1, 7
  %106 = vst.msk [vmem:[%s105] ss:$8 sm:$0xf] %vm104, %v103
  %s107 = scalar_lea.vmem %s1, 7
  %108 = vst.msk [vmem:[%s107] ss:$8 sm:$0xf0] %vm104, %v103
  %s109 = scalar_lea.vmem %s0, 8
  %v110 = vld [vmem:[%s109] sm:$0x3]
  %111 = vrot.lane.b32.xlu0 %v110, 121
  %v112 = vpop.permute.xlu0 %111
  %vm113 = vcmask 7168
  %s114 = scalar_lea.vmem %s1, 71
  %115 = vst.msk [vmem:[%s114] ss:$8 sm:$0x3] %vm113, %v112

// kernel: _lambda_.3
$region0: #{_lambda_.3}
  #allocation0 [shape = 'u32[]', space=smem, size = 0x4, offset = 0x4, fixed_abs, tag = 'smem constant byte address 0x4 - core index']
  #allocation1 [shape = 'u32[144,128]{1,0:T(1,128)}', space=vmem, size = 0x12000, scoped, tag = 'internal scratch']
  #allocation2 [shape = 'f32[1,1]{1,0:T(1,128)S(1)}', space=vmem, size = 0x200, scoped, tag = 'scoped memory for _lambda_.3']
  %s0 = inlined_call_operand.vmem [shape: f32[2,95,131], index: 0, kind: input, shape index: {}]
  %s1 = inlined_call_operand.vmem [shape: f32[80,95], index: 1, kind: input, shape index: {}]
  %s2 = inlined_call_operand.vmem [shape: f32[80,1], index: 2, kind: input, shape index: {}]
  %s3 = inlined_call_operand.vmem [shape: f32[4,400], index: 3, kind: input, shape index: {}]
  %s4 = inlined_call_operand.vmem [shape: f32[4,1], index: 4, kind: input, shape index: {}]
  %s5 = inlined_call_operand.vmem [shape: f32[64,22], index: 5, kind: input, shape index: {}]
  %s6 = inlined_call_operand.vmem [shape: f32[2,40], index: 6, kind: input, shape index: {}]
  %s7 = inlined_call_operand.vmem [shape: f32[2,1], index: 7, kind: input, shape index: {}]
  %s8 = inlined_call_operand.vmem [shape: f32[1,13], index: 8, kind: input, shape index: {}]
  %s9 = inlined_call_operand.<no memory space> [shape: f32[1,1], index: 9, kind: input, shape index: {}]
  %s10 = inlined_call_operand.vmem [shape: f32[2,2,1], index: 10, kind: output, shape index: {}]
  %s11 = sld [smem:[#allocation0]]
  $region73: #{_lambda_.3} parent=0
    _
  %s13 = ssub.s32 1, %s11
  %s14 = scalar_select 0, %s13, %s11
  %v15 = vstv %s9
  %16 = vst [vmem:[#allocation2] sm:$0x1] %v15
  loop: start=0, step=1, limit=4
  $region2: #{_lambda_.3} parent=0 // loop_pre_header
    _
  $region3: #{_lambda_.3} parent=0 // loop_header
    %s18 = sphi 0, %s22
    %p19 = scmp.ge.s32.totalorder %s18, 4
    %s28 = sphi 0, %s30
    %s31 = sphi 0, %s28
    %s32 = sphi 0, %s31
    %s48 = sphi 0, %s32
    %s52 = sphi 0, %s52
    %s54 = sphi 0, %s52
    %s55 = sphi 0, %s54
    %s69 = sphi 0, %s55
    %s73 = sphi 0, %s73
    %s75 = sphi 0, %s73
    %s76 = sphi 0, %s75
    %s90 = sphi 0, %s76
    %s94 = sphi 0, %s94
    %s96 = sphi 0, %s94
    %s97 = sphi 0, %s96
    %s111 = sphi 0, %s97
    %s115 = sphi 0, %s115
    %s117 = sphi 0, %s115
    %s118 = sphi 0, %s117
    %s132 = sphi 0, %s118
    %s136 = sphi 0, %s136
    %s138 = sphi 0, %s136
    %s139 = sphi 0, %s138
    %s153 = sphi 0, %s139
    %s157 = sphi 0, %s157
    %s159 = sphi 0, %s157
    %s160 = sphi 0, %s159
    %s174 = sphi 0, %s160
    %s178 = sphi 0, %s178
    %s180 = sphi 0, %s178
    %s181 = sphi 0, %s180
    %s195 = sphi 0, %s181
    %s199 = sphi 0, %s199
    %s201 = sphi 0, %s199
    %s202 = sphi 0, %s201
    %s216 = sphi 0, %s202
    %s220 = sphi 0, %s220
    %s222 = sphi 0, %s220
    %s223 = sphi 0, %s222
    %s237 = sphi 0, %s223
    %s243 = sphi 0, %s245
    %s246 = sphi 0, %s243
    %s247 = sphi 0, %s246
    %s263 = sphi 0, %s247
  $region4: #{_lambda_.3} parent=0 // loop_header_branch
    %21 = sbr.rel (%p19) target = $region8
  $region5: #{_lambda_.3} parent=0 // loop_body
    %s23 = ssub.s32 %s18, 1
    %s24 = ssub.s32 %s18, 2
    %s25 = sadd.s32 %s18, 1
    %s26 = ssub.s32 %s18, %s25
    %p27 = scmp.eq.s32.totalorder %s26, 0
    %s29 = sadd.s32 %s28, 1
    %s30 = scalar_select %p27, %s28, %s29
    %p33 = pneg %p27
    %p34 = scmp.eq.s32.totalorder %s18, 1
    %p35 = por %p33, %p34
    %p36 = scmp.ne.s32.totalorder %s28, %s31
    %p37 = scmp.eq.s32.totalorder %s18, 0
    %p38 = por %p36, %p37
    %p39 = scmp.ne.s32.totalorder %s28, %s31
    %p40 = scmp.eq.s32.totalorder %s23, 1
    %p41 = por %p39, %p40
    %p42 = scmp.ne.s32.totalorder %s31, %s32
    %p43 = scmp.eq.s32.totalorder %s23, 0
    %p44 = por %p42, %p43
    %p45 = scmp.ne.s32.totalorder %s31, %s32
    %p46 = scmp.eq.s32.totalorder %s24, 1
    %p47 = por %p45, %p46
    %p49 = scmp.ne.s32.totalorder %s32, %s48
    %p50 = scmp.eq.s32.totalorder %s24, 0
    %p51 = por %p49, %p50
    %s53 = sadd.s32 %s52, 1
    %p56 = scmp.eq.s32.totalorder %s18, 1
    %p57 = scmp.ne.s32.totalorder %s52, %s54
    %p58 = scmp.eq.s32.totalorder %s18, 0
    %p59 = por %p57, %p58
    %p60 = scmp.ne.s32.totalorder %s52, %s54
    %p61 = scmp.eq.s32.totalorder %s23, 1
    %p62 = por %p60, %p61
    %p63 = scmp.ne.s32.totalorder %s54, %s55
    %p64 = scmp.eq.s32.totalorder %s23, 0
    %p65 = por %p63, %p64
    %p66 = scmp.ne.s32.totalorder %s54, %s55
    %p67 = scmp.eq.s32.totalorder %s24, 1
    %p68 = por %p66, %p67
    %p70 = scmp.ne.s32.totalorder %s55, %s69
    %p71 = scmp.eq.s32.totalorder %s24, 0
    %p72 = por %p70, %p71
    %s74 = sadd.s32 %s73, 1
    %p77 = scmp.eq.s32.totalorder %s18, 1
    %p78 = scmp.ne.s32.totalorder %s73, %s75
    %p79 = scmp.eq.s32.totalorder %s18, 0
    %p80 = por %p78, %p79
    %p81 = scmp.ne.s32.totalorder %s73, %s75
    %p82 = scmp.eq.s32.totalorder %s23, 1
    %p83 = por %p81, %p82
    %p84 = scmp.ne.s32.totalorder %s75, %s76
    %p85 = scmp.eq.s32.totalorder %s23, 0
    %p86 = por %p84, %p85
    %p87 = scmp.ne.s32.totalorder %s75, %s76
    %p88 = scmp.eq.s32.totalorder %s24, 1
    %p89 = por %p87, %p88
    %p91 = scmp.ne.s32.totalorder %s76, %s90
    %p92 = scmp.eq.s32.totalorder %s24, 0
    %p93 = por %p91, %p92
    %s95 = sadd.s32 %s94, 1
    %p98 = scmp.eq.s32.totalorder %s18, 1
    %p99 = scmp.ne.s32.totalorder %s94, %s96
    %p100 = scmp.eq.s32.totalorder %s18, 0
    %p101 = por %p99, %p100
    %p102 = scmp.ne.s32.totalorder %s94, %s96
    %p103 = scmp.eq.s32.totalorder %s23, 1
    %p104 = por %p102, %p103
    %p105 = scmp.ne.s32.totalorder %s96, %s97
    %p106 = scmp.eq.s32.totalorder %s23, 0
    %p107 = por %p105, %p106
    %p108 = scmp.ne.s32.totalorder %s96, %s97
    %p109 = scmp.eq.s32.totalorder %s24, 1
    %p110 = por %p108, %p109
    %p112 = scmp.ne.s32.totalorder %s97, %s111
    %p113 = scmp.eq.s32.totalorder %s24, 0
    %p114 = por %p112, %p113
    %s116 = sadd.s32 %s115, 1
    %p119 = scmp.eq.s32.totalorder %s18, 1
    %p120 = scmp.ne.s32.totalorder %s115, %s117
    %p121 = scmp.eq.s32.totalorder %s18, 0
    %p122 = por %p120, %p121
    %p123 = scmp.ne.s32.totalorder %s115, %s117
    %p124 = scmp.eq.s32.totalorder %s23, 1
    %p125 = por %p123, %p124
    %p126 = scmp.ne.s32.totalorder %s117, %s118
    %p127 = scmp.eq.s32.totalorder %s23, 0
    %p128 = por %p126, %p127
    %p129 = scmp.ne.s32.totalorder %s117, %s118
    %p130 = scmp.eq.s32.totalorder %s24, 1
    %p131 = por %p129, %p130
    %p133 = scmp.ne.s32.totalorder %s118, %s132
    %p134 = scmp.eq.s32.totalorder %s24, 0
    %p135 = por %p133, %p134
    %s137 = sadd.s32 %s136, 1
    %p140 = scmp.eq.s32.totalorder %s18, 1
    %p141 = scmp.ne.s32.totalorder %s136, %s138
    %p142 = scmp.eq.s32.totalorder %s18, 0
    %p143 = por %p141, %p142
    %p144 = scmp.ne.s32.totalorder %s136, %s138
    %p145 = scmp.eq.s32.totalorder %s23, 1
    %p146 = por %p144, %p145
    %p147 = scmp.ne.s32.totalorder %s138, %s139
    %p148 = scmp.eq.s32.totalorder %s23, 0
    %p149 = por %p147, %p148
    %p150 = scmp.ne.s32.totalorder %s138, %s139
    %p151 = scmp.eq.s32.totalorder %s24, 1
    %p152 = por %p150, %p151
    %p154 = scmp.ne.s32.totalorder %s139, %s153
    %p155 = scmp.eq.s32.totalorder %s24, 0
    %p156 = por %p154, %p155
    %s158 = sadd.s32 %s157, 1
    %p161 = scmp.eq.s32.totalorder %s18, 1
    %p162 = scmp.ne.s32.totalorder %s157, %s159
    %p163 = scmp.eq.s32.totalorder %s18, 0
    %p164 = por %p162, %p163
    %p165 = scmp.ne.s32.totalorder %s157, %s159
    %p166 = scmp.eq.s32.totalorder %s23, 1
    %p167 = por %p165, %p166
    %p168 = scmp.ne.s32.totalorder %s159, %s160
    %p169 = scmp.eq.s32.totalorder %s23, 0
    %p170 = por %p168, %p169
    %p171 = scmp.ne.s32.totalorder %s159, %s160
    %p172 = scmp.eq.s32.totalorder %s24, 1
    %p173 = por %p171, %p172
    %p175 = scmp.ne.s32.totalorder %s160, %s174
    %p176 = scmp.eq.s32.totalorder %s24, 0
    %p177 = por %p175, %p176
    %s179 = sadd.s32 %s178, 1
    %p182 = scmp.eq.s32.totalorder %s18, 1
    %p183 = scmp.ne.s32.totalorder %s178, %s180
    %p184 = scmp.eq.s32.totalorder %s18, 0
    %p185 = por %p183, %p184
    %p186 = scmp.ne.s32.totalorder %s178, %s180
    %p187 = scmp.eq.s32.totalorder %s23, 1
    %p188 = por %p186, %p187
    %p189 = scmp.ne.s32.totalorder %s180, %s181
    %p190 = scmp.eq.s32.totalorder %s23, 0
    %p191 = por %p189, %p190
    %p192 = scmp.ne.s32.totalorder %s180, %s181
    %p193 = scmp.eq.s32.totalorder %s24, 1
    %p194 = por %p192, %p193
    %p196 = scmp.ne.s32.totalorder %s181, %s195
    %p197 = scmp.eq.s32.totalorder %s24, 0
    %p198 = por %p196, %p197
    %s200 = sadd.s32 %s199, 1
    %p203 = scmp.eq.s32.totalorder %s18, 1
    %p204 = scmp.ne.s32.totalorder %s199, %s201
    %p205 = scmp.eq.s32.totalorder %s18, 0
    %p206 = por %p204, %p205
    %p207 = scmp.ne.s32.totalorder %s199, %s201
    %p208 = scmp.eq.s32.totalorder %s23, 1
    %p209 = por %p207, %p208
    %p210 = scmp.ne.s32.totalorder %s201, %s202
    %p211 = scmp.eq.s32.totalorder %s23, 0
    %p212 = por %p210, %p211
    %p213 = scmp.ne.s32.totalorder %s201, %s202
    %p214 = scmp.eq.s32.totalorder %s24, 1
    %p215 = por %p213, %p214
    %p217 = scmp.ne.s32.totalorder %s202, %s216
    %p218 = scmp.eq.s32.totalorder %s24, 0
    %p219 = por %p217, %p218
    %s221 = sadd.s32 %s220, 1
    %p224 = scmp.eq.s32.totalorder %s18, 1
    %p225 = scmp.ne.s32.totalorder %s220, %s222
    %p226 = scmp.eq.s32.totalorder %s18, 0
    %p227 = por %p225, %p226
    %p228 = scmp.ne.s32.totalorder %s220, %s222
    %p229 = scmp.eq.s32.totalorder %s23, 1
    %p230 = por %p228, %p229
    %p231 = scmp.ne.s32.totalorder %s222, %s223
    %p232 = scmp.eq.s32.totalorder %s23, 0
    %p233 = por %p231, %p232
    %p234 = scmp.ne.s32.totalorder %s222, %s223
    %p235 = scmp.eq.s32.totalorder %s24, 1
    %p236 = por %p234, %p235
    %p238 = scmp.ne.s32.totalorder %s223, %s237
    %p239 = scmp.eq.s32.totalorder %s24, 0
    %p240 = por %p238, %p239
    %s241 = ssub.s32 %s18, %s25
    %p242 = scmp.eq.s32.totalorder %s241, 0
    %s244 = sadd.s32 %s243, 1
    %s245 = scalar_select %p242, %s243, %s244
    %p248 = pneg %p242
    %p249 = scmp.eq.s32.totalorder %s18, 1
    %p250 = por %p248, %p249
    %p251 = scmp.ne.s32.totalorder %s243, %s246
    %p252 = scmp.eq.s32.totalorder %s18, 0
    %p253 = por %p251, %p252
    %p254 = scmp.ne.s32.totalorder %s243, %s246
    %p255 = scmp.eq.s32.totalorder %s23, 1
    %p256 = por %p254, %p255
    %p257 = scmp.ne.s32.totalorder %s246, %s247
    %p258 = scmp.eq.s32.totalorder %s23, 0
    %p259 = por %p257, %p258
    %p260 = scmp.ne.s32.totalorder %s246, %s247
    %p261 = scmp.eq.s32.totalorder %s24, 1
    %p262 = por %p260, %p261
    %p264 = scmp.ne.s32.totalorder %s247, %s263
    %p265 = scmp.eq.s32.totalorder %s24, 0
    %p266 = por %p264, %p265
    %p267 = scmp.le.s32.totalorder 1, %s18
    %p268 = scmp.lt.s32.totalorder %s18, 3
    %p269 = pnand %p267, %p268
    %p270 = pneg %p269
    // Predicated region
    $region9: #{_lambda_.3} parent=5 // pred_check
      _
    $region10: #{_lambda_.3} parent=5 // pred_check_branch
      %272 = sbr.rel (%p269) target = $region12
    $region11: #{_lambda_.3} parent=5 // pred_region
      %s273 = ssub.s32 %s18, 1
      // Predicated region
      $region13: #{_lambda_.3} parent=11 // pred_check
        %p274 = pneg %p65
      $region14: #{_lambda_.3} parent=11 // pred_check_branch
        %276 = sbr.rel (%p274) target = $region16
      $region15: #{_lambda_.3} parent=11 // pred_region
        _
      $region16: #{_lambda_.3} parent=11 // pred_fallthru
        _
      // Predicated region
      $region17: #{_lambda_.3} parent=11 // pred_check
        %p277 = pneg %p86
      $region18: #{_lambda_.3} parent=11 // pred_check_branch
        %279 = sbr.rel (%p277) target = $region20
      $region19: #{_lambda_.3} parent=11 // pred_region
        _
      $region20: #{_lambda_.3} parent=11 // pred_fallthru
        _
      // Predicated region
      $region21: #{_lambda_.3} parent=11 // pred_check
        %p280 = pneg %p107
      $region22: #{_lambda_.3} parent=11 // pred_check_branch
        %282 = sbr.rel (%p280) target = $region24
      $region23: #{_lambda_.3} parent=11 // pred_region
        _
      $region24: #{_lambda_.3} parent=11 // pred_fallthru
        _
      // Predicated region
      $region25: #{_lambda_.3} parent=11 // pred_check
        %p283 = pneg %p128
      $region26: #{_lambda_.3} parent=11 // pred_check_branch
        %285 = sbr.rel (%p283) target = $region28
      $region27: #{_lambda_.3} parent=11 // pred_region
        _
      $region28: #{_lambda_.3} parent=11 // pred_fallthru
        _
      // Predicated region
      $region29: #{_lambda_.3} parent=11 // pred_check
        %p286 = pneg %p149
      $region30: #{_lambda_.3} parent=11 // pred_check_branch
        %288 = sbr.rel (%p286) target = $region32
      $region31: #{_lambda_.3} parent=11 // pred_region
        _
      $region32: #{_lambda_.3} parent=11 // pred_fallthru
        _
      // Predicated region
      $region33: #{_lambda_.3} parent=11 // pred_check
        %p289 = pneg %p170
      $region34: #{_lambda_.3} parent=11 // pred_check_branch
        %291 = sbr.rel (%p289) target = $region36
      $region35: #{_lambda_.3} parent=11 // pred_region
        _
      $region36: #{_lambda_.3} parent=11 // pred_fallthru
        _
      // Predicated region
      $region37: #{_lambda_.3} parent=11 // pred_check
        %p292 = pneg %p191
      $region38: #{_lambda_.3} parent=11 // pred_check_branch
        %294 = sbr.rel (%p292) target = $region40
      $region39: #{_lambda_.3} parent=11 // pred_region
        _
      $region40: #{_lambda_.3} parent=11 // pred_fallthru
        _
      // Predicated region
      $region41: #{_lambda_.3} parent=11 // pred_check
        %p295 = pneg %p212
      $region42: #{_lambda_.3} parent=11 // pred_check_branch
        %297 = sbr.rel (%p295) target = $region44
      $region43: #{_lambda_.3} parent=11 // pred_region
        _
      $region44: #{_lambda_.3} parent=11 // pred_fallthru
        _
      // Predicated region
      $region45: #{_lambda_.3} parent=11 // pred_check
        %p298 = pneg %p233
      $region46: #{_lambda_.3} parent=11 // pred_check_branch
        %300 = sbr.rel (%p298) target = $region48
      $region47: #{_lambda_.3} parent=11 // pred_region
        _
      $region48: #{_lambda_.3} parent=11 // pred_fallthru
        _
    $region12: #{_lambda_.3} parent=5 // pred_fallthru
      _
    %p301 = scmp.lt.s32.totalorder %s18, 2
    // Predicated region
    $region49: #{_lambda_.3} parent=5 // pred_check
      %p302 = pneg %p301
    $region50: #{_lambda_.3} parent=5 // pred_check_branch
      %304 = sbr.rel (%p302) target = $region52
    $region51: #{_lambda_.3} parent=5 // pred_region
      // Predicated region
      $region53: #{_lambda_.3} parent=51 // pred_check
        %p305 = pneg %p38
      $region54: #{_lambda_.3} parent=51 // pred_check_branch
        %307 = sbr.rel (%p305) target = $region56
      $region55: #{_lambda_.3} parent=51 // pred_region
        %p308 = scmp.lt.s32.totalorder %s18, 1
        %s309 = scalar_select %p308, %s18, 1
        %s310 = smul.addr %s309, 24
        %s311 = smul.addr %s310, 8
        %s312 = scalar_lea.vmem %s0, %s311
      $region56: #{_lambda_.3} parent=51 // pred_fallthru
        _
    $region52: #{_lambda_.3} parent=5 // pred_fallthru
      _
    %p313 = scmp.le.s32.totalorder 1, %s18
    %p314 = scmp.lt.s32.totalorder %s18, 3
    %p315 = pnand %p313, %p314
    %p316 = pneg %p315
    // Predicated region
    $region57: #{_lambda_.3} parent=5 // pred_check
      _
    $region58: #{_lambda_.3} parent=5 // pred_check_branch
      %318 = sbr.rel (%p315) target = $region60
    $region59: #{_lambda_.3} parent=5 // pred_region
      %s319 = ssub.s32 %s18, 1
      %p320 = scmp.lt.s32.totalorder %s23, 1
      %s321 = scalar_select %p320, %s23, 1
      %s322 = smul.addr %s321, 24
      %s323 = smul.addr %s322, 8
      %s324 = scalar_lea.vmem %s0, %s323
      %p325 = pneg %p44
      %p326 = pneg %p41
      %p327 = pneg %p65
      %p328 = pneg %p62
      %p329 = pneg %p86
      %p330 = pneg %p83
      %p331 = pneg %p107
      %p332 = pneg %p104
      %p333 = pneg %p128
      %p334 = pneg %p125
      %p335 = pneg %p149
      %p336 = pneg %p146
      %p337 = pneg %p170
      %p338 = pneg %p167
      %p339 = pneg %p191
      %p340 = pneg %p188
      %p341 = pneg %p212
      %p342 = pneg %p209
      %p343 = pneg %p233
      %p344 = pneg %p230
      %p345 = pneg %p259
      %p346 = pneg %p256
      %p347 = scmp.lt.s32.totalorder %s23, 1
      %s348 = scalar_select %p347, %s23, 1
      %s349 = smul.addr %s348, 2
      %s350 = scalar_lea.vmem %s10, %s349
      %p351 = scmp.lt.s32.totalorder %s23, 1
      %s352 = scalar_select %p351, %s23, 1
      %s353 = smul.addr %s352, 24
      %s354 = smul.addr %s353, 8
      %s355 = scalar_lea.vmem %s0, %s354
      %p356 = scmp.lt.s32.totalorder %s23, 1
      %s357 = scalar_select %p356, %s23, 1
      %s358 = smul.addr %s357, 2
      %s359 = scalar_lea.vmem %s10, %s358
      %v360 = vld [vmem:[%s355] sm:$0xff]
      %v361 = vld [vmem:[%s355 + $0x8] sm:$0xff]
      %v362 = vld [vmem:[%s355 + $0x10] sm:$0xff]
      %v363 = vld [vmem:[%s355 + $0x18] sm:$0xff]
      %v364 = vld [vmem:[%s355 + $0x20] sm:$0xff]
      %v365 = vld [vmem:[%s355 + $0x28] sm:$0xff]
      %v366 = vld [vmem:[%s355 + $0x30] sm:$0xff]
      %v367 = vld [vmem:[%s355 + $0x38] sm:$0xff]
      %v368 = vld [vmem:[%s355 + $0x40] sm:$0xff]
      %v369 = vld [vmem:[%s355 + $0x48] sm:$0xff]
      %v370 = vld [vmem:[%s355 + $0x50] sm:$0xff]
      %v371 = vld [vmem:[%s355 + $0x58] sm:$0xff]
      %v372 = vld [vmem:[%s355 + $0x60] sm:$0xff]
      %v373 = vld [vmem:[%s355 + $0x68] sm:$0xff]
      %v374 = vld [vmem:[%s355 + $0x70] sm:$0xff]
      %v375 = vld [vmem:[%s355 + $0x78] sm:$0xff]
      %v376 = vld [vmem:[%s355 + $0x80] sm:$0xff]
      %v377 = vld [vmem:[%s355 + $0x88] sm:$0xff]
      %v378 = vld [vmem:[%s355 + $0x90] sm:$0xff]
      %v379 = vld [vmem:[%s355 + $0x98] sm:$0xff]
      %v380 = vld [vmem:[%s355 + $0xa0] sm:$0xff]
      %v381 = vld [vmem:[%s355 + $0xa8] sm:$0xff]
      %v382 = vld [vmem:[%s355 + $0xb0] sm:$0x7f]
      %v383 = vld [vmem:[%s355 + $0xb8] sm:$0x7f]
      %v384 = vld [vmem:[%s1] sm:$0xff]
      %v385 = vld [vmem:[%s1 + $0x8] sm:$0xff]
      %v386 = vld [vmem:[%s1 + $0x10] sm:$0xff]
      %v387 = vld [vmem:[%s1 + $0x18] sm:$0xff]
      %v388 = vld [vmem:[%s1 + $0x20] sm:$0xff]
      %v389 = vld [vmem:[%s1 + $0x28] sm:$0xff]
      %v390 = vld [vmem:[%s1 + $0x30] sm:$0xff]
      %v391 = vld [vmem:[%s1 + $0x38] sm:$0xff]
      %v392 = vld [vmem:[%s1 + $0x40] sm:$0xff]
      %v393 = vld [vmem:[%s1 + $0x48] sm:$0xff]
      %v394 = vld [vmem:[%s2] sm:$0xff]
      %v395 = vld [vmem:[%s2 + $0x8] sm:$0xff]
      %v396 = vld [vmem:[%s2 + $0x10] sm:$0xff]
      %v397 = vld [vmem:[%s2 + $0x18] sm:$0xff]
      %v398 = vld [vmem:[%s2 + $0x20] sm:$0xff]
      %v399 = vld [vmem:[%s2 + $0x28] sm:$0xff]
      %v400 = vld [vmem:[%s2 + $0x30] sm:$0xff]
      %v401 = vld [vmem:[%s2 + $0x38] sm:$0xff]
      %v402 = vld [vmem:[%s2 + $0x40] sm:$0xff]
      %v403 = vld [vmem:[%s2 + $0x48] sm:$0xff]
      %405 = vset.pattern.permute.xlu0 0
      %406 = vperm.xlu0 %405, %v394
      %v407 = vpop.permute.xlu0 %406
      %410 = vset.pattern.permute.xlu0 0
      %411 = vperm.xlu0 %410, %v395
      %v412 = vpop.permute.xlu0 %411
      %415 = vset.pattern.permute.xlu0 0
      %416 = vperm.xlu0 %415, %v396
      %v417 = vpop.permute.xlu0 %416
      %420 = vset.pattern.permute.xlu0 0
      %421 = vperm.xlu0 %420, %v397
      %v422 = vpop.permute.xlu0 %421
      %425 = vset.pattern.permute.xlu0 0
      %426 = vperm.xlu0 %425, %v398
      %v427 = vpop.permute.xlu0 %426
      %430 = vset.pattern.permute.xlu0 0
      %431 = vperm.xlu0 %430, %v399
      %v432 = vpop.permute.xlu0 %431
      %435 = vset.pattern.permute.xlu0 0
      %436 = vperm.xlu0 %435, %v400
      %v437 = vpop.permute.xlu0 %436
      %440 = vset.pattern.permute.xlu0 0
      %441 = vperm.xlu0 %440, %v401
      %v442 = vpop.permute.xlu0 %441
      %445 = vset.pattern.permute.xlu0 0
      %446 = vperm.xlu0 %445, %v402
      %v447 = vpop.permute.xlu0 %446
      %450 = vset.pattern.permute.xlu0 0
      %451 = vperm.xlu0 %450, %v403
      %v452 = vpop.permute.xlu0 %451
      %vm454 = vcmask 777216
      %v456 = vsel %vm454, %v384, 0
      %v459 = vsel %vm454, %v385, 0
      %v462 = vsel %vm454, %v386, 0
      %v465 = vsel %vm454, %v387, 0
      %v468 = vsel %vm454, %v388, 0
      %v471 = vsel %vm454, %v389, 0
      %v474 = vsel %vm454, %v390, 0
      %v477 = vsel %vm454, %v391, 0
      %v480 = vsel %vm454, %v392, 0
      %v483 = vsel %vm454, %v393, 0
      %vm485 = vcmask 1046528
      %v487 = vsel %vm485, %v382, 0
      %v490 = vsel %vm485, %v383, 0
      %492 = vmatprep.subr.mxu0 %v361
      %493 = vmatpush1.msra.mxu0 %v360
      %494 = vmatprep.subr.mxu0 %v363
      %495 = vmatpush1.msra.mxu0 %v362
      %496 = vmatprep.subr.mxu0 %v365
      %497 = vmatpush1.msra.mxu0 %v364
      %498 = vmatprep.subr.mxu0 %v367
      %499 = vmatpush1.msra.mxu0 %v366
      %500 = vmatprep.subr.mxu0 %v369
      %501 = vmatpush1.msra.mxu0 %v368
      %502 = vmatprep.subr.mxu0 %v371
      %503 = vmatpush1.msra.mxu0 %v370
      %504 = vmatprep.subr.mxu0 %v373
      %505 = vmatpush1.msra.mxu0 %v372
      %506 = vmatprep.subr.mxu0 %v375
      %507 = vmatpush1.msra.mxu0 %v374
      %508 = vmatprep.subr.mxu0 %v377
      %509 = vmatpush1.msra.mxu0 %v376
      %510 = vmatprep.subr.mxu0 %v379
      %511 = vmatpush1.msra.mxu0 %v378
      %512 = vmatprep.subr.mxu0 %v381
      %513 = vmatpush1.msra.mxu0 %v380
      %514 = vmatprep.subr.mxu0 %v490
      %515 = vmatpush1.msra.mxu0 %v487
      %516 = vmatprep.subr.mxu0 0.0
      %517 = vmatpush1.msra.mxu0 0.0
      %518 = vmatprep.subr.mxu0 0.0
      %519 = vmatpush1.msra.mxu0 0.0
      %520 = vmatprep.subr.mxu0 0.0
      %521 = vmatpush1.msra.mxu0 0.0
      %522 = vmatprep.subr.mxu0 0.0
      %523 = vmatpush1.msra.mxu0 0.0
      %524 = vmatprep.subr.mxu0 0.0
      %525 = vmatpush1.msra.mxu0 0.0
      %526 = vmatprep.subr.mxu0 0.0
      %527 = vmatpush1.msra.mxu0 0.0
      %528 = vmatprep.subr.mxu0 0.0
      %529 = vmatpush1.msra.mxu0 0.0
      %530 = vmatprep.subr.mxu0 0.0
      %531 = vmatpush1.msra.mxu0 0.0
      %532 = vmatprep.subr.mxu0 0.0
      %533 = vmatpush1.msra.mxu0 0.0
      %534 = vmatprep.subr.mxu0 0.0
      %535 = vmatpush1.msra.mxu0 0.0
      %536 = vmatprep.subr.mxu0 0.0
      %537 = vmatpush1.msra.mxu0 0.0
      %538 = vmatprep.subr.mxu0 0.0
      %539 = vmatpush1.msra.mxu0 0.0
      %540 = vmatprep.subr.mxu0 0.0
      %541 = vmatpush1.msra.mxu0 0.0
      %542 = vmatprep.subr.mxu0 0.0
      %543 = vmatpush1.msra.mxu0 0.0
      %544 = vmatprep.subr.mxu0 0.0
      %545 = vmatpush1.msra.mxu0 0.0
      %546 = vmatprep.subr.mxu0 0.0
      %547 = vmatpush1.msra.mxu0 0.0
      %548 = vmatprep.subr.mxu0 0.0
      %549 = vmatpush1.msra.mxu0 0.0
      %550 = vmatprep.subr.mxu0 0.0
      %551 = vmatpush1.msra.mxu0 0.0
      %552 = vmatprep.subr.mxu0 0.0
      %553 = vmatpush1.msra.mxu0 0.0
      %554 = vmatprep.subr.mxu0 0.0
      %555 = vmatpush1.msra.mxu0 0.0
      %556 = vmatprep.mubr.f32.mxu0 0.0
      %557 = vmatmul.mubr.f32.gmra.mrb[0].mxu0 %v456
      %v558 = vpop.f32.mrb[0].mxu0
      %v559 = vadd.f32 %v407, %v558
      %v560 = vpop.f32.mrb[0].mxu0
      %v561 = vadd.f32 %v407, %v560
      %562 = vmatprep.mubr.f32.mxu0 0.0
      %563 = vmatmul.mubr.f32.gmra.mrb[0].mxu0 %v459
      %v564 = vpop.f32.mrb[0].mxu0
      %v565 = vadd.f32 %v412, %v564
      %v566 = vpop.f32.mrb[0].mxu0
      %v567 = vadd.f32 %v412, %v566
      %568 = vmatprep.mubr.f32.mxu0 0.0
      %569 = vmatmul.mubr.f32.gmra.mrb[0].mxu0 %v462
      %v570 = vpop.f32.mrb[0].mxu0
      %v571 = vadd.f32 %v417, %v570
      %v572 = vpop.f32.mrb[0].mxu0
      %v573 = vadd.f32 %v417, %v572
      %574 = vmatprep.mubr.f32.mxu0 0.0
      %575 = vmatmul.mubr.f32.gmra.mrb[0].mxu0 %v465
      %v576 = vpop.f32.mrb[0].mxu0
      %v577 = vadd.f32 %v422, %v576
      %v578 = vpop.f32.mrb[0].mxu0
      %v579 = vadd.f32 %v422, %v578
      %580 = vmatprep.mubr.f32.mxu0 0.0
      %581 = vmatmul.mubr.f32.gmra.mrb[0].mxu0 %v468
      %v582 = vpop.f32.mrb[0].mxu0
      %v583 = vadd.f32 %v427, %v582
      %v584 = vpop.f32.mrb[0].mxu0
      %v585 = vadd.f32 %v427, %v584
      %586 = vmatprep.mubr.f32.mxu0 0.0
      %587 = vmatmul.mubr.f32.gmra.mrb[0].mxu0 %v471
      %v588 = vpop.f32.mrb[0].mxu0
      %v589 = vadd.f32 %v432, %v588
      %v590 = vpop.f32.mrb[0].mxu0
      %v591 = vadd.f32 %v432, %v590
      %592 = vmatprep.mubr.f32.mxu0 0.0
      %593 = vmatmul.mubr.f32.gmra.mrb[0].mxu0 %v474
      %v594 = vpop.f32.mrb[0].mxu0
      %v595 = vadd.f32 %v437, %v594
      %v596 = vpop.f32.mrb[0].mxu0
      %v597 = vadd.f32 %v437, %v596
      %598 = vmatprep.mubr.f32.mxu0 0.0
      %599 = vmatmul.mubr.f32.gmra.mrb[0].mxu0 %v477
      %v600 = vpop.f32.mrb[0].mxu0
      %v601 = vadd.f32 %v442, %v600
      %v602 = vpop.f32.mrb[0].mxu0
      %v603 = vadd.f32 %v442, %v602
      %604 = vmatprep.mubr.f32.mxu0 0.0
      %605 = vmatmul.mubr.f32.gmra.mrb[0].mxu0 %v480
      %v606 = vpop.f32.mrb[0].mxu0
      %v607 = vadd.f32 %v447, %v606
      %v608 = vpop.f32.mrb[0].mxu0
      %v609 = vadd.f32 %v447, %v608
      %610 = vmatprep.mubr.f32.mxu0 0.0
      %611 = vmatmul.mubr.f32.gmra.mrb[0].mxu0 %v483
      %v612 = vpop.f32.mrb[0].mxu0
      %v613 = vadd.f32 %v452, %v612
      %v614 = vpop.f32.mrb[0].mxu0
      %v615 = vadd.f32 %v452, %v614
      %616 = vdwg.mxu0
      %v617 = vmax.f32 %v559, 0.0
      %v618 = vmax.f32 %v561, 0.0
      %v619 = vmax.f32 %v565, 0.0
      %v620 = vmax.f32 %v567, 0.0
      %v621 = vmax.f32 %v571, 0.0
      %v622 = vmax.f32 %v573, 0.0
      %v623 = vmax.f32 %v577, 0.0
      %v624 = vmax.f32 %v579, 0.0
      %v625 = vmax.f32 %v583, 0.0
      %v626 = vmax.f32 %v585, 0.0
      %v627 = vmax.f32 %v589, 0.0
      %v628 = vmax.f32 %v591, 0.0
      %v629 = vmax.f32 %v595, 0.0
      %v630 = vmax.f32 %v597, 0.0
      %v631 = vmax.f32 %v601, 0.0
      %v632 = vmax.f32 %v603, 0.0
      %v633 = vmax.f32 %v607, 0.0
      %v634 = vmax.f32 %v609, 0.0
      %v635 = vmax.f32 %v613, 0.0
      %v636 = vmax.f32 %v615, 0.0
      %v637 = vmax.f32 %v617, %v619
      %v638 = vmax.f32 %v618, %v620
      %v639 = vmax.f32 %v637, %v621
      %v640 = vmax.f32 %v638, %v622
      %v641 = vmax.f32 %v639, %v623
      %v642 = vmax.f32 %v640, %v624
      %v643 = vmax.f32 %v641, %v625
      %v644 = vmax.f32 %v642, %v626
      %v645 = vmax.f32 %v643, %v627
      %v646 = vmax.f32 %v644, %v628
      %v647 = vmax.f32 %v645, %v629
      %v648 = vmax.f32 %v646, %v630
      %v649 = vmax.f32 %v647, %v631
      %v650 = vmax.f32 %v648, %v632
      %v651 = vmax.f32 %v649, %v633
      %v652 = vmax.f32 %v650, %v634
      %v653 = vmax.f32 %v651, %v635
      %v654 = vmax.f32 %v652, %v636
      %656 = vrot.lane.b32.xlu0 %v653, 127
      %v657 = vpop.permute.xlu0 %656
      %v659 = vmax.f32 %v653, %v657
      %660 = vrot.lane.b32.xlu0 %v653, 126
      %v661 = vpop.permute.xlu0 %660
      %v663 = vmax.f32 %v659, %v661
      %664 = vrot.lane.b32.xlu0 %v653, 125
      %v665 = vpop.permute.xlu0 %664
      %v667 = vmax.f32 %v663, %v665
      %668 = vrot.lane.b32.xlu0 %v653, 124
      %v669 = vpop.permute.xlu0 %668
      %v671 = vmax.f32 %v667, %v669
      %672 = vrot.lane.b32.xlu0 %v653, 123
      %v673 = vpop.permute.xlu0 %672
      %v675 = vmax.f32 %v671, %v673
      %676 = vrot.lane.b32.xlu0 %v653, 122
      %v677 = vpop.permute.xlu0 %676
      %v679 = vmax.f32 %v675, %v677
      %681 = vrot.lane.b32.xlu0 %v653, 121
      %v682 = vpop.permute.xlu0 %681
      %683 = vrot.lane.b32.xlu0 %v654, 121
      %v684 = vpop.permute.xlu0 %683
      %vm685 = vcmask 990208
      %v686 = vsel %vm685, %v682, %v684
      %v688 = vmax.f32 %v679, %v686
      %689 = vrot.lane.b32.xlu0 %v653, 120
      %v690 = vpop.permute.xlu0 %689
      %691 = vrot.lane.b32.xlu0 %v654, 120
      %v692 = vpop.permute.xlu0 %691
      %vm693 = vcmask 982016
      %v694 = vsel %vm693, %v690, %v692
      %v696 = vmax.f32 %v688, %v694
      %697 = vrot.lane.b32.xlu0 %v653, 119
      %v698 = vpop.permute.xlu0 %697
      %699 = vrot.lane.b32.xlu0 %v654, 119
      %v700 = vpop.permute.xlu0 %699
      %vm701 = vcmask 973824
      %v702 = vsel %vm701, %v698, %v700
      %v704 = vmax.f32 %v696, %v702
      %706 = vrot.lane.b32.xlu0 %v704, 127
      %v707 = vpop.permute.xlu0 %706
      %709 = vrot.lane.b32.xlu0 %v704, 126
      %v710 = vpop.permute.xlu0 %709
      %712 = vrot.lane.b32.xlu0 %v704, 125
      %v713 = vpop.permute.xlu0 %712
      %715 = vrot.lane.b32.xlu0 %v704, 124
      %v716 = vpop.permute.xlu0 %715
      %718 = vrot.lane.b32.xlu0 %v704, 123
      %v719 = vpop.permute.xlu0 %718
      %721 = vrot.lane.b32.xlu0 %v704, 122
      %v722 = vpop.permute.xlu0 %721
      %724 = vrot.lane.b32.xlu0 %v704, 121
      %v725 = vpop.permute.xlu0 %724
      %727 = vrot.lane.b32.xlu0 %v704, 120
      %v728 = vpop.permute.xlu0 %727
      %730 = vrot.lane.b32.xlu0 %v704, 119
      %v731 = vpop.permute.xlu0 %730
      %733 = vrot.lane.b32.xlu0 %v704, 118
      %v734 = vpop.permute.xlu0 %733
      %736 = vrot.lane.b32.xlu0 %v704, 117
      %v737 = vpop.permute.xlu0 %736
      %739 = vrot.lane.b32.xlu0 %v704, 116
      %v740 = vpop.permute.xlu0 %739
      %742 = vrot.lane.b32.xlu0 %v704, 115
      %v743 = vpop.permute.xlu0 %742
      %745 = vrot.lane.b32.xlu0 %v704, 114
      %v746 = vpop.permute.xlu0 %745
      %748 = vrot.lane.b32.xlu0 %v704, 113
      %v749 = vpop.permute.xlu0 %748
      %751 = vrot.lane.b32.xlu0 %v704, 112
      %v752 = vpop.permute.xlu0 %751
      %753 = vrot.lane.b32.xlu0 %v707, 112
      %v754 = vpop.permute.xlu0 %753
      %755 = vrot.lane.b32.xlu0 %v710, 112
      %v756 = vpop.permute.xlu0 %755
      %757 = vrot.lane.b32.xlu0 %v713, 112
      %v758 = vpop.permute.xlu0 %757
      %759 = vrot.lane.b32.xlu0 %v716, 112
      %v760 = vpop.permute.xlu0 %759
      %761 = vrot.lane.b32.xlu0 %v719, 112
      %v762 = vpop.permute.xlu0 %761
      %763 = vrot.lane.b32.xlu0 %v722, 112
      %v764 = vpop.permute.xlu0 %763
      %765 = vrot.lane.b32.xlu0 %v725, 112
      %v766 = vpop.permute.xlu0 %765
      %767 = vrot.lane.b32.xlu0 %v728, 112
      %v768 = vpop.permute.xlu0 %767
      %769 = vrot.lane.b32.xlu0 %v731, 112
      %v770 = vpop.permute.xlu0 %769
      %771 = vrot.lane.b32.xlu0 %v734, 112
      %v772 = vpop.permute.xlu0 %771
      %773 = vrot.lane.b32.xlu0 %v737, 112
      %v774 = vpop.permute.xlu0 %773
      %775 = vrot.lane.b32.xlu0 %v740, 112
      %v776 = vpop.permute.xlu0 %775
      %777 = vrot.lane.b32.xlu0 %v743, 112
      %v778 = vpop.permute.xlu0 %777
      %779 = vrot.lane.b32.xlu0 %v746, 112
      %v780 = vpop.permute.xlu0 %779
      %781 = vrot.lane.b32.xlu0 %v749, 112
      %v782 = vpop.permute.xlu0 %781
      %799 = vrot.lane.b32.xlu0 %v704, 96
      %v800 = vpop.permute.xlu0 %799
      %801 = vrot.lane.b32.xlu0 %v707, 96
      %v802 = vpop.permute.xlu0 %801
      %803 = vrot.lane.b32.xlu0 %v710, 96
      %v804 = vpop.permute.xlu0 %803
      %805 = vrot.lane.b32.xlu0 %v713, 96
      %v806 = vpop.permute.xlu0 %805
      %807 = vrot.lane.b32.xlu0 %v716, 96
      %v808 = vpop.permute.xlu0 %807
      %809 = vrot.lane.b32.xlu0 %v719, 96
      %v810 = vpop.permute.xlu0 %809
      %811 = vrot.lane.b32.xlu0 %v722, 96
      %v812 = vpop.permute.xlu0 %811
      %813 = vrot.lane.b32.xlu0 %v725, 96
      %v814 = vpop.permute.xlu0 %813
      %815 = vrot.lane.b32.xlu0 %v728, 96
      %v816 = vpop.permute.xlu0 %815
      %817 = vrot.lane.b32.xlu0 %v731, 96
      %v818 = vpop.permute.xlu0 %817
      %819 = vrot.lane.b32.xlu0 %v734, 96
      %v820 = vpop.permute.xlu0 %819
      %821 = vrot.lane.b32.xlu0 %v737, 96
      %v822 = vpop.permute.xlu0 %821
      %823 = vrot.lane.b32.xlu0 %v740, 96
      %v824 = vpop.permute.xlu0 %823
      %825 = vrot.lane.b32.xlu0 %v743, 96
      %v826 = vpop.permute.xlu0 %825
      %827 = vrot.lane.b32.xlu0 %v746, 96
      %v828 = vpop.permute.xlu0 %827
      %829 = vrot.lane.b32.xlu0 %v749, 96
      %v830 = vpop.permute.xlu0 %829
      %847 = vrot.lane.b32.xlu0 %v704, 80
      %v848 = vpop.permute.xlu0 %847
      %849 = vrot.lane.b32.xlu0 %v707, 80
      %v850 = vpop.permute.xlu0 %849
      %v853 = vld [vmem:[%s3] sm:$0xff]
      %v854 = vld [vmem:[%s3 + $0x8] sm:$0xff]
      %v855 = vld [vmem:[%s4] sm:$0xf]
      %857 = vset.pattern.permute.xlu0 0
      %858 = vperm.xlu0 %857, %v855
      %v859 = vpop.permute.xlu0 %858
      %v863 = vcombine.high %v853, %v853
      %v864 = vcombine.high %v854, %v854
      %vm866 = vcmask 130048
      %v867 = vsel %vm866, %v864, 0
      %869 = vmatprep.subr.mxu0 0.0
      %870 = vmatpush1.msra.mxu0 %v704
      %871 = vmatprep.subr.mxu0 0.0
      %872 = vmatpush1.msra.mxu0 %v707
      %873 = vmatprep.subr.mxu0 0.0
      %874 = vmatpush1.msra.mxu0 %v710
      %875 = vmatprep.subr.mxu0 0.0
      %876 = vmatpush1.msra.mxu0 %v713
      %877 = vmatprep.subr.mxu0 0.0
      %878 = vmatpush1.msra.mxu0 %v716
      %879 = vmatprep.subr.mxu0 0.0
      %880 = vmatpush1.msra.mxu0 %v719
      %881 = vmatprep.subr.mxu0 0.0
      %882 = vmatpush1.msra.mxu0 %v722
      %883 = vmatprep.subr.mxu0 0.0
      %884 = vmatpush1.msra.mxu0 %v725
      %885 = vmatprep.subr.mxu0 0.0
      %886 = vmatpush1.msra.mxu0 %v728
      %887 = vmatprep.subr.mxu0 0.0
      %888 = vmatpush1.msra.mxu0 %v731
      %889 = vmatprep.subr.mxu0 0.0
      %890 = vmatpush1.msra.mxu0 %v734
      %891 = vmatprep.subr.mxu0 0.0
      %892 = vmatpush1.msra.mxu0 %v737
      %893 = vmatprep.subr.mxu0 0.0
      %894 = vmatpush1.msra.mxu0 %v740
      %895 = vmatprep.subr.mxu0 0.0
      %896 = vmatpush1.msra.mxu0 %v743
      %897 = vmatprep.subr.mxu0 0.0
      %898 = vmatpush1.msra.mxu0 %v746
      %899 = vmatprep.subr.mxu0 0.0
      %900 = vmatpush1.msra.mxu0 %v749
      %901 = vmatprep.subr.mxu0 0.0
      %902 = vmatpush1.msra.mxu0 %v752
      %903 = vmatprep.subr.mxu0 0.0
      %904 = vmatpush1.msra.mxu0 %v754
      %905 = vmatprep.subr.mxu0 0.0
      %906 = vmatpush1.msra.mxu0 %v756
      %907 = vmatprep.subr.mxu0 0.0
      %908 = vmatpush1.msra.mxu0 %v758
      %909 = vmatprep.subr.mxu0 0.0
      %910 = vmatpush1.msra.mxu0 %v760
      %911 = vmatprep.subr.mxu0 0.0
      %912 = vmatpush1.msra.mxu0 %v762
      %913 = vmatprep.subr.mxu0 0.0
      %914 = vmatpush1.msra.mxu0 %v764
      %915 = vmatprep.subr.mxu0 0.0
      %916 = vmatpush1.msra.mxu0 %v766
      %917 = vmatprep.subr.mxu0 0.0
      %918 = vmatpush1.msra.mxu0 %v768
      %919 = vmatprep.subr.mxu0 0.0
      %920 = vmatpush1.msra.mxu0 %v770
      %921 = vmatprep.subr.mxu0 0.0
      %922 = vmatpush1.msra.mxu0 %v772
      %923 = vmatprep.subr.mxu0 0.0
      %924 = vmatpush1.msra.mxu0 %v774
      %925 = vmatprep.subr.mxu0 0.0
      %926 = vmatpush1.msra.mxu0 %v776
      %927 = vmatprep.subr.mxu0 0.0
      %928 = vmatpush1.msra.mxu0 %v778
      %929 = vmatprep.subr.mxu0 0.0
      %930 = vmatpush1.msra.mxu0 %v780
      %931 = vmatprep.subr.mxu0 0.0
      %932 = vmatpush1.msra.mxu0 %v782
      %933 = vmatprep.mubr.f32.mxu0 %v863
      %934 = vmatmul.mubr.f32.gmra.mrb[0].mxu0 %v853
      %v935 = vpop.f32.mrb[0].mxu0
      %v936 = vadd.f32 %v859, %v935
      %v937 = vpop.f32.mrb[0].mxu0
      %938 = vdwg.mxu0
      %939 = vmatprep.subr.mxu0 0.0
      %940 = vmatpush1.msra.mxu0 %v800
      %941 = vmatprep.subr.mxu0 0.0
      %942 = vmatpush1.msra.mxu0 %v802
      %943 = vmatprep.subr.mxu0 0.0
      %944 = vmatpush1.msra.mxu0 %v804
      %945 = vmatprep.subr.mxu0 0.0
      %946 = vmatpush1.msra.mxu0 %v806
      %947 = vmatprep.subr.mxu0 0.0
      %948 = vmatpush1.msra.mxu0 %v808
      %949 = vmatprep.subr.mxu0 0.0
      %950 = vmatpush1.msra.mxu0 %v810
      %951 = vmatprep.subr.mxu0 0.0
      %952 = vmatpush1.msra.mxu0 %v812
      %953 = vmatprep.subr.mxu0 0.0
      %954 = vmatpush1.msra.mxu0 %v814
      %955 = vmatprep.subr.mxu0 0.0
      %956 = vmatpush1.msra.mxu0 %v816
      %957 = vmatprep.subr.mxu0 0.0
      %958 = vmatpush1.msra.mxu0 %v818
      %959 = vmatprep.subr.mxu0 0.0
      %960 = vmatpush1.msra.mxu0 %v820
      %961 = vmatprep.subr.mxu0 0.0
      %962 = vmatpush1.msra.mxu0 %v822
      %963 = vmatprep.subr.mxu0 0.0
      %964 = vmatpush1.msra.mxu0 %v824
      %965 = vmatprep.subr.mxu0 0.0
      %966 = vmatpush1.msra.mxu0 %v826
      %967 = vmatprep.subr.mxu0 0.0
      %968 = vmatpush1.msra.mxu0 %v828
      %969 = vmatprep.subr.mxu0 0.0
      %970 = vmatpush1.msra.mxu0 %v830
      %971 = vmatprep.subr.mxu0 0.0
      %972 = vmatpush1.msra.mxu0 %v848
      %973 = vmatprep.subr.mxu0 0.0
      %974 = vmatpush1.msra.mxu0 %v850
      %975 = vmatprep.subr.mxu0 0.0
      %976 = vmatpush1.msra.mxu0 0.0
      %977 = vmatprep.subr.mxu0 0.0
      %978 = vmatpush1.msra.mxu0 0.0
      %979 = vmatprep.subr.mxu0 0.0
      %980 = vmatpush1.msra.mxu0 0.0
      %981 = vmatprep.subr.mxu0 0.0
      %982 = vmatpush1.msra.mxu0 0.0
      %983 = vmatprep.subr.mxu0 0.0
      %984 = vmatpush1.msra.mxu0 0.0
      %985 = vmatprep.subr.mxu0 0.0
      %986 = vmatpush1.msra.mxu0 0.0
      %987 = vmatprep.subr.mxu0 0.0
      %988 = vmatpush1.msra.mxu0 0.0
      %989 = vmatprep.subr.mxu0 0.0
      %990 = vmatpush1.msra.mxu0 0.0
      %991 = vmatprep.subr.mxu0 0.0
      %992 = vmatpush1.msra.mxu0 0.0
      %993 = vmatprep.subr.mxu0 0.0
      %994 = vmatpush1.msra.mxu0 0.0
      %995 = vmatprep.subr.mxu0 0.0
      %996 = vmatpush1.msra.mxu0 0.0
      %997 = vmatprep.subr.mxu0 0.0
      %998 = vmatpush1.msra.mxu0 0.0
      %999 = vmatprep.subr.mxu0 0.0
      %1000 = vmatpush1.msra.mxu0 0.0
      %1001 = vmatprep.subr.mxu0 0.0
      %1002 = vmatpush1.msra.mxu0 0.0
      %1003 = vmatprep.mubr.f32.mxu0 %v867
      %1004 = vmatmul.mubr.f32.gmra.mrb[0].mxu0 %v854
      %v1005 = vpop.f32.mrb[0].mxu0
      %v1006 = vadd.f32 %v936, %v1005
      %v1007 = vpop.f32.mrb[0].mxu0
      %1008 = vdwg.mxu0
      %v1009 = vmax.f32 %v1006, 0.0
      %1011 = vrot.lane.b32.xlu0 %v1009, 127
      %v1012 = vpop.permute.xlu0 %1011
      %v1014 = vmax.f32 %v1009, %v1012
      %1015 = vrot.lane.b32.xlu0 %v1009, 126
      %v1016 = vpop.permute.xlu0 %1015
      %v1018 = vmax.f32 %v1014, %v1016
      %1019 = vrot.lane.b32.xlu0 %v1009, 125
      %v1020 = vpop.permute.xlu0 %1019
      %v1022 = vmax.f32 %v1018, %v1020
      %1023 = vrot.lane.b32.xlu0 %v1009, 124
      %v1024 = vpop.permute.xlu0 %1023
      %v1026 = vmax.f32 %v1022, %v1024
      %1027 = vrot.lane.b32.xlu0 %v1009, 123
      %v1028 = vpop.permute.xlu0 %1027
      %v1030 = vmax.f32 %v1026, %v1028
      %1031 = vrot.lane.b32.xlu0 %v1009, 122
      %v1032 = vpop.permute.xlu0 %1031
      %v1034 = vmax.f32 %v1030, %v1032
      %1035 = vrot.lane.b32.xlu0 %v1009, 121
      %v1036 = vpop.permute.xlu0 %1035
      %v1038 = vmax.f32 %v1034, %v1036
      %1039 = vrot.lane.b32.xlu0 %v1009, 120
      %v1040 = vpop.permute.xlu0 %1039
      %v1042 = vmax.f32 %v1038, %v1040
      %1043 = vrot.lane.b32.xlu0 %v1009, 119
      %v1044 = vpop.permute.xlu0 %1043
      %v1046 = vmax.f32 %v1042, %v1044
      %v1047 = vld [vmem:[%s5] sm:$0xff]
      %v1048 = vld [vmem:[%s5 + $0x8] sm:$0xff]
      %v1049 = vld [vmem:[%s5 + $0x10] sm:$0xff]
      %v1050 = vld [vmem:[%s5 + $0x18] sm:$0xff]
      %v1051 = vld [vmem:[%s5 + $0x20] sm:$0xff]
      %v1052 = vld [vmem:[%s5 + $0x28] sm:$0xff]
      %v1053 = vld [vmem:[%s5 + $0x30] sm:$0xff]
      %v1054 = vld [vmem:[%s5 + $0x38] sm:$0xff]
      %vm1055 = vcmask 523264
      %v1057 = vsel %vm1055, %v1046, 0
      %1059 = vmatprep.subr.mxu0 0.0
      %1060 = vmatpush1.msra.mxu0 %v1047
      %1061 = vmatprep.subr.mxu0 0.0
      %1062 = vmatpush1.msra.mxu0 %v1048
      %1063 = vmatprep.subr.mxu0 0.0
      %1064 = vmatpush1.msra.mxu0 %v1049
      %1065 = vmatprep.subr.mxu0 0.0
      %1066 = vmatpush1.msra.mxu0 %v1050
      %1067 = vmatprep.subr.mxu0 0.0
      %1068 = vmatpush1.msra.mxu0 %v1051
      %1069 = vmatprep.subr.mxu0 0.0
      %1070 = vmatpush1.msra.mxu0 %v1052
      %1071 = vmatprep.subr.mxu0 0.0
      %1072 = vmatpush1.msra.mxu0 %v1053
      %1073 = vmatprep.subr.mxu0 0.0
      %1074 = vmatpush1.msra.mxu0 %v1054
      %1075 = vmatprep.subr.mxu0 0.0
      %1076 = vmatpush1.msra.mxu0 0.0
      %1077 = vmatprep.subr.mxu0 0.0
      %1078 = vmatpush1.msra.mxu0 0.0
      %1079 = vmatprep.subr.mxu0 0.0
      %1080 = vmatpush1.msra.mxu0 0.0
      %1081 = vmatprep.subr.mxu0 0.0
      %1082 = vmatpush1.msra.mxu0 0.0
      %1083 = vmatprep.subr.mxu0 0.0
      %1084 = vmatpush1.msra.mxu0 0.0
      %1085 = vmatprep.subr.mxu0 0.0
      %1086 = vmatpush1.msra.mxu0 0.0
      %1087 = vmatprep.subr.mxu0 0.0
      %1088 = vmatpush1.msra.mxu0 0.0
      %1089 = vmatprep.subr.mxu0 0.0
      %1090 = vmatpush1.msra.mxu0 0.0
      %1091 = vmatprep.subr.mxu0 0.0
      %1092 = vmatpush1.msra.mxu0 0.0
      %1093 = vmatprep.subr.mxu0 0.0
      %1094 = vmatpush1.msra.mxu0 0.0
      %1095 = vmatprep.subr.mxu0 0.0
      %1096 = vmatpush1.msra.mxu0 0.0
      %1097 = vmatprep.subr.mxu0 0.0
      %1098 = vmatpush1.msra.mxu0 0.0
      %1099 = vmatprep.subr.mxu0 0.0
      %1100 = vmatpush1.msra.mxu0 0.0
      %1101 = vmatprep.subr.mxu0 0.0
      %1102 = vmatpush1.msra.mxu0 0.0
      %1103 = vmatprep.subr.mxu0 0.0
      %1104 = vmatpush1.msra.mxu0 0.0
      %1105 = vmatprep.subr.mxu0 0.0
      %1106 = vmatpush1.msra.mxu0 0.0
      %1107 = vmatprep.subr.mxu0 0.0
      %1108 = vmatpush1.msra.mxu0 0.0
      %1109 = vmatprep.subr.mxu0 0.0
      %1110 = vmatpush1.msra.mxu0 0.0
      %1111 = vmatprep.subr.mxu0 0.0
      %1112 = vmatpush1.msra.mxu0 0.0
      %1113 = vmatprep.subr.mxu0 0.0
      %1114 = vmatpush1.msra.mxu0 0.0
      %1115 = vmatprep.subr.mxu0 0.0
      %1116 = vmatpush1.msra.mxu0 0.0
      %1117 = vmatprep.subr.mxu0 0.0
      %1118 = vmatpush1.msra.mxu0 0.0
      %1119 = vmatprep.subr.mxu0 0.0
      %1120 = vmatpush1.msra.mxu0 0.0
      %1121 = vmatprep.subr.mxu0 0.0
      %1122 = vmatpush1.msra.mxu0 0.0
      %1123 = vmatprep.mubr.f32.mxu0 0.0
      %1124 = vmatmul.mubr.f32.gmra.mrb[0].mxu0 %v1057
      %v1125 = vpop.f32.mrb[0].mxu0
      %v1126 = vadd.f32 0.0, %v1125
      %v1127 = vpop.f32.mrb[0].mxu0
      %1128 = vdwg.mxu0
      %v1130 = vrot.slane %v1126, 4
      %1131 = vrot.lane.b32.xlu0 %v1130, 127
      %v1132 = vpop.permute.xlu0 %1131
      %1134 = vrot.lane.b32.xlu0 %v1126, 126
      %v1135 = vpop.permute.xlu0 %1134
      %1137 = vrot.lane.b32.xlu0 %v1130, 125
      %v1138 = vpop.permute.xlu0 %1137
      %1140 = vrot.lane.b32.xlu0 %v1126, 124
      %v1141 = vpop.permute.xlu0 %1140
      %1143 = vrot.lane.b32.xlu0 %v1130, 123
      %v1144 = vpop.permute.xlu0 %1143
      %1146 = vrot.lane.b32.xlu0 %v1126, 122
      %v1147 = vpop.permute.xlu0 %1146
      %1149 = vrot.lane.b32.xlu0 %v1130, 121
      %v1150 = vpop.permute.xlu0 %1149
      %1152 = vrot.lane.b32.xlu0 %v1126, 120
      %v1153 = vpop.permute.xlu0 %1152
      %1155 = vrot.lane.b32.xlu0 %v1130, 119
      %v1156 = vpop.permute.xlu0 %1155
      %vm1158 = vcmask 1043456
      %v1159 = vsel %vm1158, %v1126, %v1132
      %v1160 = vsel %vm1158, %v1135, %v1138
      %v1161 = vsel %vm1158, %v1141, %v1144
      %v1162 = vsel %vm1158, %v1147, %v1150
      %v1163 = vsel %vm1158, %v1153, %v1156
      %v1164 = vld [vmem:[%s6] sm:$0x3]
      %v1165 = vld [vmem:[%s7] sm:$0x3]
      %1167 = vset.pattern.permute.xlu0 0
      %1168 = vperm.xlu0 %1167, %v1165
      %v1169 = vpop.permute.xlu0 %1168
      %vm1171 = vcmask 326656
      %v1173 = vsel %vm1171, %v1164, 0
      %1175 = vmatprep.subr.mxu0 0.0
      %1176 = vmatpush1.msra.mxu0 %v1159
      %1177 = vmatprep.subr.mxu0 0.0
      %1178 = vmatpush1.msra.mxu0 %v1160
      %1179 = vmatprep.subr.mxu0 0.0
      %1180 = vmatpush1.msra.mxu0 %v1161
      %1181 = vmatprep.subr.mxu0 0.0
      %1182 = vmatpush1.msra.mxu0 %v1162
      %1183 = vmatprep.subr.mxu0 0.0
      %1184 = vmatpush1.msra.mxu0 %v1163
      %1185 = vmatprep.subr.mxu0 0.0
      %1186 = vmatpush1.msra.mxu0 0.0
      %1187 = vmatprep.subr.mxu0 0.0
      %1188 = vmatpush1.msra.mxu0 0.0
      %1189 = vmatprep.subr.mxu0 0.0
      %1190 = vmatpush1.msra.mxu0 0.0
      %1191 = vmatprep.subr.mxu0 0.0
      %1192 = vmatpush1.msra.mxu0 0.0
      %1193 = vmatprep.subr.mxu0 0.0
      %1194 = vmatpush1.msra.mxu0 0.0
      %1195 = vmatprep.subr.mxu0 0.0
      %1196 = vmatpush1.msra.mxu0 0.0
      %1197 = vmatprep.subr.mxu0 0.0
      %1198 = vmatpush1.msra.mxu0 0.0
      %1199 = vmatprep.subr.mxu0 0.0
      %1200 = vmatpush1.msra.mxu0 0.0
      %1201 = vmatprep.subr.mxu0 0.0
      %1202 = vmatpush1.msra.mxu0 0.0
      %1203 = vmatprep.subr.mxu0 0.0
      %1204 = vmatpush1.msra.mxu0 0.0
      %1205 = vmatprep.subr.mxu0 0.0
      %1206 = vmatpush1.msra.mxu0 0.0
      %1207 = vmatprep.subr.mxu0 0.0
      %1208 = vmatpush1.msra.mxu0 0.0
      %1209 = vmatprep.subr.mxu0 0.0
      %1210 = vmatpush1.msra.mxu0 0.0
      %1211 = vmatprep.subr.mxu0 0.0
      %1212 = vmatpush1.msra.mxu0 0.0
      %1213 = vmatprep.subr.mxu0 0.0
      %1214 = vmatpush1.msra.mxu0 0.0
      %1215 = vmatprep.subr.mxu0 0.0
      %1216 = vmatpush1.msra.mxu0 0.0
      %1217 = vmatprep.subr.mxu0 0.0
      %1218 = vmatpush1.msra.mxu0 0.0
      %1219 = vmatprep.subr.mxu0 0.0
      %1220 = vmatpush1.msra.mxu0 0.0
      %1221 = vmatprep.subr.mxu0 0.0
      %1222 = vmatpush1.msra.mxu0 0.0
      %1223 = vmatprep.subr.mxu0 0.0
      %1224 = vmatpush1.msra.mxu0 0.0
      %1225 = vmatprep.subr.mxu0 0.0
      %1226 = vmatpush1.msra.mxu0 0.0
      %1227 = vmatprep.subr.mxu0 0.0
      %1228 = vmatpush1.msra.mxu0 0.0
      %1229 = vmatprep.subr.mxu0 0.0
      %1230 = vmatpush1.msra.mxu0 0.0
      %1231 = vmatprep.subr.mxu0 0.0
      %1232 = vmatpush1.msra.mxu0 0.0
      %1233 = vmatprep.subr.mxu0 0.0
      %1234 = vmatpush1.msra.mxu0 0.0
      %1235 = vmatprep.subr.mxu0 0.0
      %1236 = vmatpush1.msra.mxu0 0.0
      %1237 = vmatprep.subr.mxu0 0.0
      %1238 = vmatpush1.msra.mxu0 0.0
      %1239 = vmatprep.mubr.f32.mxu0 0.0
      %1240 = vmatmul.mubr.f32.gmra.mrb[0].mxu0 %v1173
      %v1241 = vpop.f32.mrb[0].mxu0
      %v1242 = vadd.f32 %v1169, %v1241
      %v1243 = vpop.f32.mrb[0].mxu0
      %1244 = vdwg.mxu0
      %v1245 = vld [vmem:[%s8] sm:$0x1]
      %v1247 = vlaneseq
      %v1248 = vshrl.u32 %v1247, 7
      %v1249 = vsub.s32 0, %v1248
      %v1250 = vrot.slane %v1245, %v1249
      %v1252 = vmul.f32 %v1242, %v1250
      %vm1253 = vcmask 99328
      %v1254 = vsel %vm1253, %v1252, 0.0
      %1255 = vadd.xlane.f32.xlu0 %v1254
      %v1256 = vpop.xlane.xlu0 %1255
      %v1257 = vld [vmem:[#allocation2] sm:$0x1]
      %v1259 = vlaneseq
      %v1260 = vshrl.u32 %v1259, 7
      %v1261 = vsub.s32 0, %v1260
      %v1262 = vrot.slane %v1257, %v1261
      %v1264 = vadd.f32 %v1256, %v1262
      %v1265 = vxor.u32 %v1264, 2147483648
      %v1266 = vmul.f32 %v1265, 1.442695
      %v1267 = vpow.pop %v1266
      %v1268 = vadd.f32 %v1267, 1.0
      %v1269 = vrcp.pop %v1268
      %v1270 = vmul.f32 1.0, %v1269
      %vm1271 = vcmask 1024
      %1272 = vst.msk [vmem:[%s359] sm:$0x3] %vm1271, %v1270
      %p1273 = scmp.lt.s32.totalorder %s23, 1
      %s1274 = scalar_select %p1273, %s23, 1
      %s1275 = smul.addr %s1274, 2
      %s1276 = scalar_lea.vmem %s10, %s1275
      // Predicated region
      $region61: #{_lambda_.3} parent=59 // pred_check
        %p1277 = pneg %p256
      $region62: #{_lambda_.3} parent=59 // pred_check_branch
        %1279 = sbr.rel (%p1277) target = $region64
      $region63: #{_lambda_.3} parent=59 // pred_region
        _
      $region64: #{_lambda_.3} parent=59 // pred_fallthru
        _
    $region60: #{_lambda_.3} parent=5 // pred_fallthru
      _
    %p1280 = scmp.le.s32.totalorder 2, %s18
    // Predicated region
    $region65: #{_lambda_.3} parent=5 // pred_check
      %p1281 = pneg %p1280
    $region66: #{_lambda_.3} parent=5 // pred_check_branch
      %1283 = sbr.rel (%p1281) target = $region68
    $region67: #{_lambda_.3} parent=5 // pred_region
      %s1284 = ssub.s32 %s18, 2
      // Predicated region
      $region69: #{_lambda_.3} parent=67 // pred_check
        %p1285 = pneg %p262
      $region70: #{_lambda_.3} parent=67 // pred_check_branch
        %1287 = sbr.rel (%p1285) target = $region72
      $region71: #{_lambda_.3} parent=67 // pred_region
        %p1288 = scmp.lt.s32.totalorder %s24, 1
        %s1289 = scalar_select %p1288, %s24, 1
        %s1290 = smul.addr %s1289, 2
        %s1291 = scalar_lea.vmem %s10, %s1290
      $region72: #{_lambda_.3} parent=67 // pred_fallthru
        _
    $region68: #{_lambda_.3} parent=5 // pred_fallthru
      _
  $region6: #{_lambda_.3} parent=0 // loop_footer
    %s22 = sadd.s32 1, %s18
  $region7: #{_lambda_.3} parent=0 // loop_footer_branch
    %17 = sbr.rel target = $region3
  $region8: #{_lambda_.3} parent=0 // loop_exit
    _

</llo_original>
